<compile_context>
chip_gen: v7x
topology: tpu7x:2x2x1
jax: 0.10.0
libtpu: 0.0.40
codegen_flags: <defaults>
</compile_context>

<pallas_src>
import functools

import jax
import jax.numpy as jnp
from jax import lax
from jax.experimental import pallas as pl
from jax.experimental.pallas import tpu as pltpu


# -----------------------------------------------------------------------------
# Kernel A: fused ap_fc / op_fc / dense linear + ReLU, tiled over M = B*S
# -----------------------------------------------------------------------------

def _fused_linear_relu_kernel(x_ref, w_ref, b_ref, o_ref):
    h = jnp.dot(x_ref[...], w_ref[...], preferred_element_type=jnp.float32) + b_ref[...]
    o_ref[...] = jnp.maximum(h, 0.0)


def _pick_tile(m):
    for t in (512, 256, 128, 64, 32, 16, 8):
        if m % t == 0:
            return t
    return m


def fused_linear_relu(x2d, w, b):
    M, Din = x2d.shape
    Dout = w.shape[1]
    TM = _pick_tile(M)
    return pl.pallas_call(
        _fused_linear_relu_kernel,
        out_shape=jax.ShapeDtypeStruct((M, Dout), jnp.float32),
        grid=(pl.cdiv(M, TM),),
        in_specs=[
            pl.BlockSpec((TM, Din), lambda i: (i, 0)),
            pl.BlockSpec((Din, Dout), lambda i: (0, 0)),
            pl.BlockSpec((1, Dout), lambda i: (0, 0)),
        ],
        out_specs=pl.BlockSpec((TM, Dout), lambda i: (i, 0)),
        compiler_params=pltpu.CompilerParams(dimension_semantics=("parallel",)),
    )(x2d, w, b)


# -----------------------------------------------------------------------------
# Kernel B: biaffine edge scores (class-major, lane-dense) + masked-softmax
#           channel-sum, grid over batch.  No lane-changing reshapes in-kernel.
#   raw_ref[b, c, m, l]  = biaffine[b, m, l, c]
#   smsum_ref[b, m, l]   = sum_c softmax_c(biaffine[b, m, l, :])   (unmasked)
# -----------------------------------------------------------------------------

def _biaffine_kernel(x1_ref, x2_ref, w_ref, raw_ref, smsum_ref, *, S, C, dp):
    x1 = x1_ref[0]                                                 # (S, dp)  ap side (l)
    x2 = x2_ref[0]                                                 # (S, dp)  op side (m)
    scores = []
    for c in range(C):
        t_c = jnp.dot(x1, w_ref[c], preferred_element_type=jnp.float32)     # (S, dp)
        # s_c[m, l] = sum_j x2[m, j] * t_c[l, j]
        s_c = lax.dot_general(x2, t_c, (((1,), (1,)), ((), ())),
                              preferred_element_type=jnp.float32)            # (S, S)
        raw_ref[0, c] = s_c
        scores.append(s_c)
    # softmax over the C class-major slabs, then sum the channels (full-tile ops)
    mx = scores[0]
    for c in range(1, C):
        mx = jnp.maximum(mx, scores[c])
    es = [jnp.exp(s - mx) for s in scores]
    denom = es[0]
    for c in range(1, C):
        denom = denom + es[c]
    inv = 1.0 / denom
    ssum = es[0] * inv
    for c in range(1, C):
        ssum = ssum + es[c] * inv
    smsum_ref[0] = ssum


def biaffine_scores(x1p, x2p, w_cls, C):
    B, S, dp = x1p.shape
    kern = functools.partial(_biaffine_kernel, S=S, C=C, dp=dp)
    return pl.pallas_call(
        kern,
        out_shape=(jax.ShapeDtypeStruct((B, C, S, S), jnp.float32),
                   jax.ShapeDtypeStruct((B, S, S), jnp.float32)),
        grid=(B,),
        in_specs=[
            pl.BlockSpec((1, S, dp), lambda b: (b, 0, 0)),
            pl.BlockSpec((1, S, dp), lambda b: (b, 0, 0)),
            pl.BlockSpec((C, dp, dp), lambda b: (0, 0, 0)),
        ],
        out_specs=(pl.BlockSpec((1, C, S, S), lambda b: (b, 0, 0, 0)),
                   pl.BlockSpec((1, S, S), lambda b: (b, 0, 0))),
        compiler_params=pltpu.CompilerParams(dimension_semantics=("parallel",)),
    )(x1p, x2p, w_cls)


# -----------------------------------------------------------------------------
# Kernel D: GraphConvLayer — GCN aggregation on the hoisted A_sum (avg pooling,
#           in-kernel self-loop) + LayerNorm + ReLU + RefiningStrategy, fused.
#           Refined edge is emitted as lane-dense channel-major (de, S, S) slabs.
# -----------------------------------------------------------------------------

def _gcn_refine_kernel(a_ref, wp_ref, diag_ref, x_ref, m_ref,
                       w_ref, b_ref, g_ref, bt_ref,
                       we_ref, wij_i_ref, wij_jT_ref, hb_ref,
                       node_ref, edge_ref,
                       *, S, Ee, D, de, inv_E, eps):
    asum = a_ref[0]                                                # (S, S) masked channel-sum
    X = x_ref[0]                                                   # (S, D)
    mask = m_ref[0]                                                # (S, 1) = masks[b, i]

    # --- GCN aggregation: Ax = mean_e (A_e + self_loop_e) @ X -----------------
    #     = (1/E) * A_sum @ X  +  masks[i] * X[i]
    ax = jnp.dot(asum, X, preferred_element_type=jnp.float32) * inv_E + mask * X

    # --- W -> LayerNorm (unbiased std, matching torch.std) -> ReLU ------------
    h = jnp.dot(ax, w_ref[...], preferred_element_type=jnp.float32) + b_ref[...]
    mean = jnp.mean(h, axis=-1, keepdims=True)
    dc = h - mean
    var = jnp.sum(dc * dc, axis=-1, keepdims=True) * (1.0 / (D - 1))
    std = jnp.sqrt(var)
    node = jnp.maximum(g_ref[...] * dc / (std + eps) + bt_ref[...], 0.0)
    node_ref[0] = node                                             # (S, D)

    # --- RefiningStrategy ------------------------------------------------------
    # edge_out[d, i, j] = sum_e We[e, d] * wp[e, i, j]                (edge term)
    #                   + t_j[j, d] + t_i[i, d] + hb[d]
    # where t_j = [diag | node] @ Wij_j  and  t_i = [diag | node] @ Wij_i
    cat_in = jnp.concatenate([diag_ref[0], node], axis=-1)          # (S, Ee + D)
    t_i = jnp.dot(cat_in, wij_i_ref[...], preferred_element_type=jnp.float32)   # (S, de)
    # t_jT[d, j] = sum_k Wij_jT[d, k] * cat_in[j, k]   (NT matmul, no transpose)
    t_jT = lax.dot_general(wij_jT_ref[...], cat_in, (((1,), (1,)), ((), ())),
                           preferred_element_type=jnp.float32)      # (de, S)

    for d in range(de):
        acc = we_ref[0, d] * wp_ref[0, 0]
        for e in range(1, Ee):
            acc = acc + we_ref[e, d] * wp_ref[0, e]
        edge_ref[0, d] = acc + t_jT[d:d + 1, :] + t_i[:, d:d + 1] + hb_ref[0, d]


def gcn_refine(a_sum, wp_cm, diag, x, mask_col, layer_p, *, E, de, eps=1e-6):
    B, S, D = x.shape
    Ee = wp_cm.shape[1]
    kern = functools.partial(_gcn_refine_kernel, S=S, Ee=Ee, D=D, de=de,
                             inv_E=1.0 / E, eps=eps)
    return pl.pallas_call(
        kern,
        out_shape=(jax.ShapeDtypeStruct((B, S, D), jnp.float32),
                   jax.ShapeDtypeStruct((B, de, S, S), jnp.float32)),
        grid=(B,),
        in_specs=[
            pl.BlockSpec((1, S, S), lambda b: (b, 0, 0)),            # A_sum
            pl.BlockSpec((1, Ee, S, S), lambda b: (b, 0, 0, 0)),     # weight_prob slabs
            pl.BlockSpec((1, S, Ee), lambda b: (b, 0, 0)),           # diag of weight_prob
            pl.BlockSpec((1, S, D), lambda b: (b, 0, 0)),            # gcn inputs
            pl.BlockSpec((1, S, 1), lambda b: (b, 0, 0)),            # mask
            pl.BlockSpec((D, D), lambda b: (0, 0)),                  # W
            pl.BlockSpec((1, D), lambda b: (0, 0)),                  # b
            pl.BlockSpec((1, D), lambda b: (0, 0)),                  # ln gamma
            pl.BlockSpec((1, D), lambda b: (0, 0)),                  # ln beta
            pl.BlockSpec(memory_space=pltpu.MemorySpace.SMEM),       # We      (Ee, de)
            pl.BlockSpec((Ee + D, de), lambda b: (0, 0)),            # Wij_i
            pl.BlockSpec((de, Ee + D), lambda b: (0, 0)),            # Wij_j^T
            pl.BlockSpec(memory_space=pltpu.MemorySpace.SMEM),       # hb      (1, de)
        ],
        out_specs=(pl.BlockSpec((1, S, D), lambda b: (b, 0, 0)),
                   pl.BlockSpec((1, de, S, S), lambda b: (b, 0, 0, 0))),
        compiler_params=pltpu.CompilerParams(dimension_semantics=("parallel",)),
    )(a_sum, wp_cm, diag, x, mask_col,
      layer_p["w"], layer_p["b"], layer_p["ln_g"], layer_p["ln_b"],
      layer_p["we"], layer_p["wij_i"], layer_p["wij_jT"], layer_p["hb"])


# -----------------------------------------------------------------------------
# Parameter construction (deterministic, synthetic), pre-fused for the kernels
# -----------------------------------------------------------------------------

def make_params(key, *, vocab, bert_dim, gcn_dim, class_num,
                post_size, deprel_size, postag_size, synpost_size, num_layers):
    keys = iter(jax.random.split(key, 64))

    def lin(din, dout, scale=0.1):
        w = scale * jax.random.normal(next(keys), (din, dout), jnp.float32)
        b = 0.01 * jax.random.normal(next(keys), (1, dout), jnp.float32)
        return w, b

    def emb(size, dim):
        t = 0.1 * jax.random.normal(next(keys), (size, dim), jnp.float32)
        return t.at[0].set(0.0)  # padding_idx=0

    params = {}
    params["tok_emb"] = 0.1 * jax.random.normal(next(keys), (vocab, bert_dim), jnp.float32)
    params["post_emb"] = emb(post_size, class_num)
    params["deprel_emb"] = emb(deprel_size, class_num)
    params["postag_emb"] = emb(postag_size, class_num)
    params["synpost_emb"] = emb(synpost_size, class_num)

    # ap_fc / op_fc / dense fused into one (bert_dim, 3*gcn_dim) weight.
    ap_w, ap_b = lin(bert_dim, gcn_dim)
    op_w, op_b = lin(bert_dim, gcn_dim)
    de_w, de_b = lin(bert_dim, gcn_dim)
    params["w3"] = jnp.concatenate([ap_w, op_w, de_w], axis=1)
    params["b3"] = jnp.concatenate([ap_b, op_b, de_b], axis=1)

    # Biaffine: per-class (d1, d1) matrices, zero-padded to dp (sublane multiple).
    d1 = gcn_dim + 1
    dp = ((d1 + 7) // 8) * 8
    w_cls = 0.1 * jax.random.normal(next(keys), (class_num, d1, d1), jnp.float32)
    params["biaffine_w"] = jnp.pad(w_cls, ((0, 0), (0, dp - d1), (0, dp - d1)))

    E5 = 5 * class_num
    de = class_num
    gcn = []
    for _ in range(num_layers):
        w, b = lin(gcn_dim, gcn_dim)
        # RefiningStrategy weight rows ordered as the torch cat:
        #   [edge(i,j) | diag_j | diag_i | node_j | node_i]
        hw_w = 0.1 * jax.random.normal(
            next(keys), (3 * E5 + 2 * gcn_dim, de), jnp.float32)
        hw_b = 0.01 * jax.random.normal(next(keys), (1, de), jnp.float32)
        we = hw_w[0:E5]
        w_diag_j = hw_w[E5:2 * E5]
        w_diag_i = hw_w[2 * E5:3 * E5]
        w_node_j = hw_w[3 * E5:3 * E5 + gcn_dim]
        w_node_i = hw_w[3 * E5 + gcn_dim:]
        wij_i = jnp.concatenate([w_diag_i, w_node_i], axis=0)      # (E5+D, de)  (index i)
        wij_j = jnp.concatenate([w_diag_j, w_node_j], axis=0)      # (E5+D, de)  (index j)
        gcn.append(dict(
            w=w, b=b,
            ln_g=jnp.ones((1, gcn_dim), jnp.float32),
            ln_b=jnp.zeros((1, gcn_dim), jnp.float32),
            we=we, wij_i=wij_i, wij_jT=wij_j.T, hb=hw_b,
        ))
    params["gcn"] = gcn
    return params


# -----------------------------------------------------------------------------
# EMCGCN forward
# -----------------------------------------------------------------------------

def emcgcn_forward(params, tokens, masks, wp_position, wp_deprel, wp_pos, wp_synpost,
                   *, class_num, num_layers):
    B, S = masks.shape
    C = class_num
    E5 = 5 * C
    masks_f = masks.astype(jnp.float32)
    mask_col = masks_f[:, :, None]                               # (B, S, 1)

    # TODO(synk): BERT encoder replaced by a deterministic token-embedding lookup.
    bert_feature = params["tok_emb"][tokens]                     # (B, S, bert_dim)
    # dropout_output: identity (eval mode)

    post_emb = params["post_emb"][wp_position]                   # (B, S, S, C)
    deprel_emb = params["deprel_emb"][wp_deprel]
    postag_emb = params["postag_emb"][wp_pos]
    synpost_emb = params["synpost_emb"][wp_synpost]
    emb_list = [post_emb, deprel_emb, postag_emb, synpost_emb]

    # fused ap_fc / op_fc / dense + relu, batch folded into matmul M, tiled over M
    D = params["w3"].shape[1] // 3
    h3 = fused_linear_relu(bert_feature.reshape(B * S, -1),
                           params["w3"], params["b3"]).reshape(B, S, 3 * D)
    ap_node = h3[..., :D]
    op_node = h3[..., D:2 * D]
    gcn_input = h3[..., 2 * D:]

    # biaffine (class-major lane-dense kernel); bias column zero-padded to dp
    dp = params["biaffine_w"].shape[-1]
    ones = jnp.ones((B, S, 1), jnp.float32)
    zpad = jnp.zeros((B, S, dp - D - 1), jnp.float32)
    x1p = jnp.concatenate([ap_node, ones, zpad], axis=-1)
    x2p = jnp.concatenate([op_node, ones, zpad], axis=-1)
    bi_raw_cm, bi_sm_sum = biaffine_scores(x1p, x2p, params["biaffine_w"], C)
    biaffine_edge = jnp.transpose(bi_raw_cm, (0, 2, 3, 1))       # (B, S, S, C) [m, l, c]

    # Layer-invariant adjacency channel-sum A_sum (the only thing the GCN needs
    # of weight_prob_softmax).  Softmax commutes with the embedding gather, so
    # the word-pair-embedding softmax reduces to per-table row sums in glue.
    emb_sm_rowsum = (
        jnp.sum(jax.nn.softmax(params["post_emb"], axis=-1), axis=-1)[wp_position]
        + jnp.sum(jax.nn.softmax(params["deprel_emb"], axis=-1), axis=-1)[wp_deprel]
        + jnp.sum(jax.nn.softmax(params["postag_emb"], axis=-1), axis=-1)[wp_pos]
        + jnp.sum(jax.nn.softmax(params["synpost_emb"], axis=-1), axis=-1)[wp_synpost]
    )                                                            # (B, S, S)
    a_sum = (bi_sm_sum + emb_sm_rowsum) * masks_f[:, None, :]    # mask over second index

    weight_prob_list = [biaffine_edge] + emb_list

    # channel-major weight_prob slabs for the GCN/refine kernel (lane-dense)
    wp_cm = jnp.concatenate(
        [bi_raw_cm] + [jnp.moveaxis(e, -1, 1) for e in emb_list], axis=1)   # (B, 5C, S, S)
    ar = jnp.arange(S)
    diag = jnp.concatenate(
        [biaffine_edge[:, ar, ar, :]] + [e[:, ar, ar, :] for e in emb_list],
        axis=-1)                                                 # (B, S, 5C)

    gcn_outputs = gcn_input
    for layer in range(num_layers):
        p = params["gcn"][layer]
        gcn_outputs, edge_cm = gcn_refine(
            a_sum, wp_cm, diag, gcn_outputs, mask_col, p, E=E5, de=C)
        edge = jnp.transpose(edge_cm, (0, 2, 3, 1))              # (B, S, S, de)
        weight_prob_list.append(edge)
        # (reference RefiningStrategy only supports num_layers=1; kept for structure)
        wp_cm = edge_cm
        diag = edge[:, ar, ar, :]

    return weight_prob_list


# -----------------------------------------------------------------------------
# Main
# -----------------------------------------------------------------------------

if __name__ == "__main__":
    B, S = 2, 8
    bert_dim = 64
    gcn_dim = 32
    class_num = 4
    vocab = 30
    post_size = deprel_size = postag_size = synpost_size = 8
    num_layers = 1   # >1 would shape-mismatch in the reference module (RefiningStrategy)

    key = jax.random.PRNGKey(0)
    kp, kt, k1, k2, k3, k4 = jax.random.split(key, 6)

    params = make_params(
        kp, vocab=vocab, bert_dim=bert_dim, gcn_dim=gcn_dim, class_num=class_num,
        post_size=post_size, deprel_size=deprel_size, postag_size=postag_size,
        synpost_size=synpost_size, num_layers=num_layers)

    tokens = jax.random.randint(kt, (B, S), 1, vocab, dtype=jnp.int32)
    masks = jnp.ones((B, S), jnp.float32).at[1, 6:].set(0.0)   # second example padded
    wp_position = jax.random.randint(k1, (B, S, S), 0, post_size, dtype=jnp.int32)
    wp_deprel = jax.random.randint(k2, (B, S, S), 0, deprel_size, dtype=jnp.int32)
    wp_pos = jax.random.randint(k3, (B, S, S), 0, postag_size, dtype=jnp.int32)
    wp_synpost = jax.random.randint(k4, (B, S, S), 0, synpost_size, dtype=jnp.int32)

    fwd = jax.jit(functools.partial(
        emcgcn_forward, class_num=class_num, num_layers=num_layers))

    outs = fwd(params, tokens, masks, wp_position, wp_deprel, wp_pos, wp_synpost)
    for o in outs:
        jax.block_until_ready(o)

    assert len(outs) == 5 + num_layers
    assert outs[0].shape == (B, S, S, class_num)      # biaffine edge
    assert outs[1].shape == (B, S, S, class_num)      # word-pair embeddings
    assert outs[-1].shape == (B, S, S, class_num)     # refined edge from GCN layer
    print("KERNEL_OK")
</pallas_src>

<mosaic_0001>
module attributes {stable_mosaic.version = 11 : i64} {
  func.func @_fused_linear_relu_kernel(%arg0: i32, %arg1: memref<16x64xf32, #tpu.memory_space<vmem>>, %arg2: memref<64x96xf32, #tpu.memory_space<vmem>>, %arg3: memref<1x96xf32, #tpu.memory_space<vmem>>, %arg4: memref<16x96xf32, #tpu.memory_space<vmem>>) attributes {dimension_semantics = [#tpu.dimension_semantics<parallel>], iteration_bounds = array<i64: 1>, scalar_prefetch = 0 : i64, scratch_operands = 0 : i64, tpu.core_type = #tpu.core_type<tc>, window_params = [{transform_indices = @transform_0, window_bounds = array<i64: 16, 64>}, {pipeline_mode = #tpu.pipeline_mode<synchronous>, transform_indices = @transform_1, window_bounds = array<i64: 64, 96>}, {pipeline_mode = #tpu.pipeline_mode<synchronous>, transform_indices = @transform_2, window_bounds = array<i64: 1, 96>}, {transform_indices = @transform_3, window_bounds = array<i64: 16, 96>}]} {
    %c0 = arith.constant 0 : index
    %c0_0 = arith.constant 0 : index
    %0 = vector.load %arg1[%c0, %c0_0] : memref<16x64xf32, #tpu.memory_space<vmem>>, vector<16x64xf32>
    %c0_1 = arith.constant 0 : index
    %c0_2 = arith.constant 0 : index
    %1 = vector.load %arg2[%c0_1, %c0_2] : memref<64x96xf32, #tpu.memory_space<vmem>>, vector<64x96xf32>
    %cst = arith.constant dense<0.000000e+00> : vector<16x96xf32>
    %2 = tpu.matmul %0, %1, %cst {dimension_numbers = #tpu.dot_dimension_numbers<[1], [0], [0], [1], [0, 0, 1, 1], [], []>} : vector<16x64xf32>, vector<64x96xf32>, vector<16x96xf32> -> vector<16x96xf32>
    %c0_3 = arith.constant 0 : index
    %c0_4 = arith.constant 0 : index
    %3 = vector.load %arg3[%c0_3, %c0_4] : memref<1x96xf32, #tpu.memory_space<vmem>>, vector<1x96xf32>
    %4 = vector.broadcast %3 : vector<1x96xf32> to vector<16x96xf32>
    %5 = arith.addf %2, %4 : vector<16x96xf32>
    %cst_5 = arith.constant 0.000000e+00 : f32
    %6 = vector.broadcast %cst_5 : f32 to vector<16x96xf32>
    %7 = arith.maximumf %5, %6 : vector<16x96xf32>
    %c0_6 = arith.constant 0 : index
    %c0_7 = arith.constant 0 : index
    %8 = vector.load %arg4[%c0_6, %c0_7] : memref<16x96xf32, #tpu.memory_space<vmem>>, vector<16x96xf32>
    tpu.vector_store %arg4[%c0_6, %c0_7], %7 {strides = array<i32>} : memref<16x96xf32, #tpu.memory_space<vmem>>, vector<16x96xf32>,
    return
  }
  func.func @transform_0(%arg0: i32) -> (i32, i32) {
    %c0_i32 = arith.constant 0 : i32
    %c0_i32_0 = arith.constant 0 : i32
    return %arg0, %c0_i32 : i32, i32
  }
  func.func @transform_1(%arg0: i32) -> (i32, i32) {
    %c0_i32 = arith.constant 0 : i32
    %c0_i32_0 = arith.constant 0 : i32
    %c0_i32_1 = arith.constant 0 : i32
    return %c0_i32, %c0_i32_0 : i32, i32
  }
  func.func @transform_2(%arg0: i32) -> (i32, i32) {
    %c0_i32 = arith.constant 0 : i32
    %c0_i32_0 = arith.constant 0 : i32
    %c0_i32_1 = arith.constant 0 : i32
    return %c0_i32, %c0_i32_0 : i32, i32
  }
  func.func @transform_3(%arg0: i32) -> (i32, i32) {
    %c0_i32 = arith.constant 0 : i32
    %c0_i32_0 = arith.constant 0 : i32
    return %arg0, %c0_i32 : i32, i32
  }
}

module attributes {stable_mosaic.version = 11 : i64} {
  func.func @_biaffine_kernel(%arg0: i32, %arg1: memref<1x8x40xf32, #tpu.memory_space<vmem>>, %arg2: memref<1x8x40xf32, #tpu.memory_space<vmem>>, %arg3: memref<4x40x40xf32, #tpu.memory_space<vmem>>, %arg4: memref<1x4x8x8xf32, #tpu.memory_space<vmem>>, %arg5: memref<1x8x8xf32, #tpu.memory_space<vmem>>) attributes {dimension_semantics = [#tpu.dimension_semantics<parallel>], iteration_bounds = array<i64: 2>, scalar_prefetch = 0 : i64, scratch_operands = 0 : i64, tpu.core_type = #tpu.core_type<tc>, window_params = [{transform_indices = @transform_0, window_bounds = array<i64: 1, 8, 40>}, {transform_indices = @transform_1, window_bounds = array<i64: 1, 8, 40>}, {pipeline_mode = #tpu.pipeline_mode<synchronous>, transform_indices = @transform_2, window_bounds = array<i64: 4, 40, 40>}, {transform_indices = @transform_3, window_bounds = array<i64: 1, 4, 8, 8>}, {transform_indices = @transform_4, window_bounds = array<i64: 1, 8, 8>}]} {
    %c0 = arith.constant 0 : index
    %c0_0 = arith.constant 0 : index
    %c0_1 = arith.constant 0 : index
    %0 = vector.load %arg1[%c0, %c0_0, %c0_1] : memref<1x8x40xf32, #tpu.memory_space<vmem>>, vector<1x8x40xf32>
    %1 = vector.shape_cast %0 : vector<1x8x40xf32> to vector<8x40xf32>
    %c0_2 = arith.constant 0 : index
    %c0_3 = arith.constant 0 : index
    %c0_4 = arith.constant 0 : index
    %2 = vector.load %arg2[%c0_2, %c0_3, %c0_4] : memref<1x8x40xf32, #tpu.memory_space<vmem>>, vector<1x8x40xf32>
    %3 = vector.shape_cast %2 : vector<1x8x40xf32> to vector<8x40xf32>
    %c0_5 = arith.constant 0 : index
    %c0_6 = arith.constant 0 : index
    %c0_7 = arith.constant 0 : index
    %4 = vector.load %arg3[%c0_5, %c0_6, %c0_7] : memref<4x40x40xf32, #tpu.memory_space<vmem>>, vector<1x40x40xf32>
    %5 = vector.shape_cast %4 : vector<1x40x40xf32> to vector<40x40xf32>
    %cst = arith.constant dense<0.000000e+00> : vector<8x40xf32>
    %6 = tpu.matmul %1, %5, %cst {dimension_numbers = #tpu.dot_dimension_numbers<[1], [0], [0], [1], [0, 0, 1, 1], [], []>} : vector<8x40xf32>, vector<40x40xf32>, vector<8x40xf32> -> vector<8x40xf32>
    %cst_8 = arith.constant dense<0.000000e+00> : vector<8x8xf32>
    %7 = tpu.matmul %3, %6, %cst_8 {dimension_numbers = #tpu.dot_dimension_numbers<[1], [1], [0], [0], [0, 0, 1, 0], [], []>} : vector<8x40xf32>, vector<8x40xf32>, vector<8x8xf32> -> vector<8x8xf32>
    %c0_9 = arith.constant 0 : index
    %c0_10 = arith.constant 0 : index
    %c0_11 = arith.constant 0 : index
    %c0_12 = arith.constant 0 : index
    %8 = vector.load %arg4[%c0_9, %c0_10, %c0_11, %c0_12] : memref<1x4x8x8xf32, #tpu.memory_space<vmem>>, vector<1x1x8x8xf32>
    %9 = vector.shape_cast %8 : vector<1x1x8x8xf32> to vector<8x8xf32>
    %10 = vector.shape_cast %7 : vector<8x8xf32> to vector<1x1x8x8xf32>
    tpu.vector_store %arg4[%c0_9, %c0_10, %c0_11, %c0_12], %10 {strides = array<i32>} : memref<1x4x8x8xf32, #tpu.memory_space<vmem>>, vector<1x1x8x8xf32>,
    %c1 = arith.constant 1 : index
    %c0_13 = arith.constant 0 : index
    %c0_14 = arith.constant 0 : index
    %11 = vector.load %arg3[%c1, %c0_13, %c0_14] : memref<4x40x40xf32, #tpu.memory_space<vmem>>, vector<1x40x40xf32>
    %12 = vector.shape_cast %11 : vector<1x40x40xf32> to vector<40x40xf32>
    %cst_15 = arith.constant dense<0.000000e+00> : vector<8x40xf32>
    %13 = tpu.matmul %1, %12, %cst_15 {dimension_numbers = #tpu.dot_dimension_numbers<[1], [0], [0], [1], [0, 0, 1, 1], [], []>} : vector<8x40xf32>, vector<40x40xf32>, vector<8x40xf32> -> vector<8x40xf32>
    %cst_16 = arith.constant dense<0.000000e+00> : vector<8x8xf32>
    %14 = tpu.matmul %3, %13, %cst_16 {dimension_numbers = #tpu.dot_dimension_numbers<[1], [1], [0], [0], [0, 0, 1, 0], [], []>} : vector<8x40xf32>, vector<8x40xf32>, vector<8x8xf32> -> vector<8x8xf32>
    %c0_17 = arith.constant 0 : index
    %c1_18 = arith.constant 1 : index
    %c0_19 = arith.constant 0 : index
    %c0_20 = arith.constant 0 : index
    %15 = vector.load %arg4[%c0_17, %c1_18, %c0_19, %c0_20] : memref<1x4x8x8xf32, #tpu.memory_space<vmem>>, vector<1x1x8x8xf32>
    %16 = vector.shape_cast %15 : vector<1x1x8x8xf32> to vector<8x8xf32>
    %17 = vector.shape_cast %14 : vector<8x8xf32> to vector<1x1x8x8xf32>
    tpu.vector_store %arg4[%c0_17, %c1_18, %c0_19, %c0_20], %17 {strides = array<i32>} : memref<1x4x8x8xf32, #tpu.memory_space<vmem>>, vector<1x1x8x8xf32>,
    %c2 = arith.constant 2 : index
    %c0_21 = arith.constant 0 : index
    %c0_22 = arith.constant 0 : index
    %18 = vector.load %arg3[%c2, %c0_21, %c0_22] : memref<4x40x40xf32, #tpu.memory_space<vmem>>, vector<1x40x40xf32>
    %19 = vector.shape_cast %18 : vector<1x40x40xf32> to vector<40x40xf32>
    %cst_23 = arith.constant dense<0.000000e+00> : vector<8x40xf32>
    %20 = tpu.matmul %1, %19, %cst_23 {dimension_numbers = #tpu.dot_dimension_numbers<[1], [0], [0], [1], [0, 0, 1, 1], [], []>} : vector<8x40xf32>, vector<40x40xf32>, vector<8x40xf32> -> vector<8x40xf32>
    %cst_24 = arith.constant dense<0.000000e+00> : vector<8x8xf32>
    %21 = tpu.matmul %3, %20, %cst_24 {dimension_numbers = #tpu.dot_dimension_numbers<[1], [1], [0], [0], [0, 0, 1, 0], [], []>} : vector<8x40xf32>, vector<8x40xf32>, vector<8x8xf32> -> vector<8x8xf32>
    %c0_25 = arith.constant 0 : index
    %c2_26 = arith.constant 2 : index
    %c0_27 = arith.constant 0 : index
    %c0_28 = arith.constant 0 : index
    %22 = vector.load %arg4[%c0_25, %c2_26, %c0_27, %c0_28] : memref<1x4x8x8xf32, #tpu.memory_space<vmem>>, vector<1x1x8x8xf32>
    %23 = vector.shape_cast %22 : vector<1x1x8x8xf32> to vector<8x8xf32>
    %24 = vector.shape_cast %21 : vector<8x8xf32> to vector<1x1x8x8xf32>
    tpu.vector_store %arg4[%c0_25, %c2_26, %c0_27, %c0_28], %24 {strides = array<i32>} : memref<1x4x8x8xf32, #tpu.memory_space<vmem>>, vector<1x1x8x8xf32>,
    %c3 = arith.constant 3 : index
    %c0_29 = arith.constant 0 : index
    %c0_30 = arith.constant 0 : index
    %25 = vector.load %arg3[%c3, %c0_29, %c0_30] : memref<4x40x40xf32, #tpu.memory_space<vmem>>, vector<1x40x40xf32>
    %26 = vector.shape_cast %25 : vector<1x40x40xf32> to vector<40x40xf32>
    %cst_31 = arith.constant dense<0.000000e+00> : vector<8x40xf32>
    %27 = tpu.matmul %1, %26, %cst_31 {dimension_numbers = #tpu.dot_dimension_numbers<[1], [0], [0], [1], [0, 0, 1, 1], [], []>} : vector<8x40xf32>, vector<40x40xf32>, vector<8x40xf32> -> vector<8x40xf32>
    %cst_32 = arith.constant dense<0.000000e+00> : vector<8x8xf32>
    %28 = tpu.matmul %3, %27, %cst_32 {dimension_numbers = #tpu.dot_dimension_numbers<[1], [1], [0], [0], [0, 0, 1, 0], [], []>} : vector<8x40xf32>, vector<8x40xf32>, vector<8x8xf32> -> vector<8x8xf32>
    %c0_33 = arith.constant 0 : index
    %c3_34 = arith.constant 3 : index
    %c0_35 = arith.constant 0 : index
    %c0_36 = arith.constant 0 : index
    %29 = vector.load %arg4[%c0_33, %c3_34, %c0_35, %c0_36] : memref<1x4x8x8xf32, #tpu.memory_space<vmem>>, vector<1x1x8x8xf32>
    %30 = vector.shape_cast %29 : vector<1x1x8x8xf32> to vector<8x8xf32>
    %31 = vector.shape_cast %28 : vector<8x8xf32> to vector<1x1x8x8xf32>
    tpu.vector_store %arg4[%c0_33, %c3_34, %c0_35, %c0_36], %31 {strides = array<i32>} : memref<1x4x8x8xf32, #tpu.memory_space<vmem>>, vector<1x1x8x8xf32>,
    %32 = arith.maximumf %7, %14 : vector<8x8xf32>
    %33 = arith.maximumf %32, %21 : vector<8x8xf32>
    %34 = arith.maximumf %33, %28 : vector<8x8xf32>
    %35 = arith.subf %7, %34 : vector<8x8xf32>
    %36 = math.exp %35 : vector<8x8xf32>
    %37 = arith.subf %14, %34 : vector<8x8xf32>
    %38 = math.exp %37 : vector<8x8xf32>
    %39 = arith.subf %21, %34 : vector<8x8xf32>
    %40 = math.exp %39 : vector<8x8xf32>
    %41 = arith.subf %28, %34 : vector<8x8xf32>
    %42 = math.exp %41 : vector<8x8xf32>
    %43 = arith.addf %36, %38 : vector<8x8xf32>
    %44 = arith.addf %43, %40 : vector<8x8xf32>
    %45 = arith.addf %44, %42 : vector<8x8xf32>
    %cst_37 = arith.constant 1.000000e+00 : f32
    %46 = vector.broadcast %cst_37 : f32 to vector<8x8xf32>
    %47 = arith.divf %46, %45 : vector<8x8xf32>
    %48 = arith.mulf %36, %47 : vector<8x8xf32>
    %49 = arith.mulf %38, %47 : vector<8x8xf32>
    %50 = arith.addf %48, %49 : vector<8x8xf32>
    %51 = arith.mulf %40, %47 : vector<8x8xf32>
    %52 = arith.addf %50, %51 : vector<8x8xf32>
    %53 = arith.mulf %42, %47 : vector<8x8xf32>
    %54 = arith.addf %52, %53 : vector<8x8xf32>
    %c0_38 = arith.constant 0 : index
    %c0_39 = arith.constant 0 : index
    %c0_40 = arith.constant 0 : index
    %55 = vector.load %arg5[%c0_38, %c0_39, %c0_40] : memref<1x8x8xf32, #tpu.memory_space<vmem>>, vector<1x8x8xf32>
    %56 = vector.shape_cast %55 : vector<1x8x8xf32> to vector<8x8xf32>
    %57 = vector.shape_cast %54 : vector<8x8xf32> to vector<1x8x8xf32>
    tpu.vector_store %arg5[%c0_38, %c0_39, %c0_40], %57 {strides = array<i32>} : memref<1x8x8xf32, #tpu.memory_space<vmem>>, vector<1x8x8xf32>,
    return
  }
  func.func @transform_0(%arg0: i32) -> (i32, i32, i32) {
    %c0_i32 = arith.constant 0 : i32
    %c0_i32_0 = arith.constant 0 : i32
    %c0_i32_1 = arith.constant 0 : i32
    return %arg0, %c0_i32, %c0_i32_0 : i32, i32, i32
  }
  func.func @transform_1(%arg0: i32) -> (i32, i32, i32) {
    %c0_i32 = arith.constant 0 : i32
    %c0_i32_0 = arith.constant 0 : i32
    %c0_i32_1 = arith.constant 0 : i32
    return %arg0, %c0_i32, %c0_i32_0 : i32, i32, i32
  }
  func.func @transform_2(%arg0: i32) -> (i32, i32, i32) {
    %c0_i32 = arith.constant 0 : i32
    %c0_i32_0 = arith.constant 0 : i32
    %c0_i32_1 = arith.constant 0 : i32
    %c0_i32_2 = arith.constant 0 : i32
    return %c0_i32, %c0_i32_0, %c0_i32_1 : i32, i32, i32
  }
  func.func @transform_3(%arg0: i32) -> (i32, i32, i32, i32) {
    %c0_i32 = arith.constant 0 : i32
    %c0_i32_0 = arith.constant 0 : i32
    %c0_i32_1 = arith.constant 0 : i32
    %c0_i32_2 = arith.constant 0 : i32
    return %arg0, %c0_i32, %c0_i32_0, %c0_i32_1 : i32, i32, i32, i32
  }
  func.func @transform_4(%arg0: i32) -> (i32, i32, i32) {
    %c0_i32 = arith.constant 0 : i32
    %c0_i32_0 = arith.constant 0 : i32
    %c0_i32_1 = arith.constant 0 : i32
    return %arg0, %c0_i32, %c0_i32_0 : i32, i32, i32
  }
}

module attributes {stable_mosaic.version = 11 : i64} {
  func.func @_gcn_refine_kernel(%arg0: i32, %arg1: memref<1x8x8xf32, #tpu.memory_space<vmem>>, %arg2: memref<1x20x8x8xf32, #tpu.memory_space<vmem>>, %arg3: memref<1x8x20xf32, #tpu.memory_space<vmem>>, %arg4: memref<1x8x32xf32, #tpu.memory_space<vmem>>, %arg5: memref<1x8x1xf32, #tpu.memory_space<vmem>>, %arg6: memref<32x32xf32, #tpu.memory_space<vmem>>, %arg7: memref<1x32xf32, #tpu.memory_space<vmem>>, %arg8: memref<1x32xf32, #tpu.memory_space<vmem>>, %arg9: memref<1x32xf32, #tpu.memory_space<vmem>>, %arg10: memref<20x4xf32, #tpu.memory_space<smem>>, %arg11: memref<52x4xf32, #tpu.memory_space<vmem>>, %arg12: memref<4x52xf32, #tpu.memory_space<vmem>>, %arg13: memref<1x4xf32, #tpu.memory_space<smem>>, %arg14: memref<1x8x32xf32, #tpu.memory_space<vmem>>, %arg15: memref<1x4x8x8xf32, #tpu.memory_space<vmem>>) attributes {dimension_semantics = [#tpu.dimension_semantics<parallel>], iteration_bounds = array<i64: 2>, scalar_prefetch = 0 : i64, scratch_operands = 0 : i64, tpu.core_type = #tpu.core_type<tc>, window_params = [{transform_indices = @transform_0, window_bounds = array<i64: 1, 8, 8>}, {transform_indices = @transform_1, window_bounds = array<i64: 1, 20, 8, 8>}, {transform_indices = @transform_2, window_bounds = array<i64: 1, 8, 20>}, {transform_indices = @transform_3, window_bounds = array<i64: 1, 8, 32>}, {transform_indices = @transform_4, window_bounds = array<i64: 1, 8, 1>}, {pipeline_mode = #tpu.pipeline_mode<synchronous>, transform_indices = @transform_5, window_bounds = array<i64: 32, 32>}, {pipeline_mode = #tpu.pipeline_mode<synchronous>, transform_indices = @transform_6, window_bounds = array<i64: 1, 32>}, {pipeline_mode = #tpu.pipeline_mode<synchronous>, transform_indices = @transform_7, window_bounds = array<i64: 1, 32>}, {pipeline_mode = #tpu.pipeline_mode<synchronous>, transform_indices = @transform_8, window_bounds = array<i64: 1, 32>}, {transform_indices = @transform_9, window_bounds = array<i64: 20, 4>}, {pipeline_mode = #tpu.pipeline_mode<synchronous>, transform_indices = @transform_10, window_bounds = array<i64: 52, 4>}, {pipeline_mode = #tpu.pipeline_mode<synchronous>, transform_indices = @transform_11, window_bounds = array<i64: 4, 52>}, {transform_indices = @transform_12, window_bounds = array<i64: 1, 4>}, {transform_indices = @transform_13, window_bounds = array<i64: 1, 8, 32>}, {transform_indices = @transform_14, window_bounds = array<i64: 1, 4, 8, 8>}]} {
    %c0 = arith.constant 0 : index
    %c0_0 = arith.constant 0 : index
    %c0_1 = arith.constant 0 : index
    %0 = vector.load %arg1[%c0, %c0_0, %c0_1] : memref<1x8x8xf32, #tpu.memory_space<vmem>>, vector<1x8x8xf32>
    %1 = vector.shape_cast %0 : vector<1x8x8xf32> to vector<8x8xf32>
    %c0_2 = arith.constant 0 : index
    %c0_3 = arith.constant 0 : index
    %c0_4 = arith.constant 0 : index
    %2 = vector.load %arg4[%c0_2, %c0_3, %c0_4] : memref<1x8x32xf32, #tpu.memory_space<vmem>>, vector<1x8x32xf32>
    %3 = vector.shape_cast %2 : vector<1x8x32xf32> to vector<8x32xf32>
    %c0_5 = arith.constant 0 : index
    %c0_6 = arith.constant 0 : index
    %c0_7 = arith.constant 0 : index
    %4 = vector.load %arg5[%c0_5, %c0_6, %c0_7] : memref<1x8x1xf32, #tpu.memory_space<vmem>>, vector<1x8x1xf32>
    %5 = vector.shape_cast %4 : vector<1x8x1xf32> to vector<8x1xf32>
    %cst = arith.constant dense<0.000000e+00> : vector<8x32xf32>
    %6 = tpu.matmul %1, %3, %cst {dimension_numbers = #tpu.dot_dimension_numbers<[1], [0], [0], [1], [0, 0, 1, 1], [], []>} : vector<8x8xf32>, vector<8x32xf32>, vector<8x32xf32> -> vector<8x32xf32>
    %cst_8 = arith.constant 5.000000e-02 : f32
    %7 = vector.broadcast %cst_8 : f32 to vector<8x32xf32>
    %8 = arith.mulf %6, %7 : vector<8x32xf32>
    %9 = vector.broadcast %5 : vector<8x1xf32> to vector<8x32xf32>
    %10 = arith.mulf %9, %3 : vector<8x32xf32>
    %11 = arith.addf %8, %10 : vector<8x32xf32>
    %c0_9 = arith.constant 0 : index
    %c0_10 = arith.constant 0 : index
    %12 = vector.load %arg6[%c0_9, %c0_10] : memref<32x32xf32, #tpu.memory_space<vmem>>, vector<32x32xf32>
    %cst_11 = arith.constant dense<0.000000e+00> : vector<8x32xf32>
    %13 = tpu.matmul %11, %12, %cst_11 {dimension_numbers = #tpu.dot_dimension_numbers<[1], [0], [0], [1], [0, 0, 1, 1], [], []>} : vector<8x32xf32>, vector<32x32xf32>, vector<8x32xf32> -> vector<8x32xf32>
    %c0_12 = arith.constant 0 : index
    %c0_13 = arith.constant 0 : index
    %14 = vector.load %arg7[%c0_12, %c0_13] : memref<1x32xf32, #tpu.memory_space<vmem>>, vector<1x32xf32>
    %15 = vector.broadcast %14 : vector<1x32xf32> to vector<8x32xf32>
    %16 = arith.addf %13, %15 : vector<8x32xf32>
    %cst_14 = arith.constant dense<0.000000e+00> : vector<8xf32>
    %17 = vector.multi_reduction <add>, %16, %cst_14 [1] : vector<8x32xf32> to vector<8xf32>
    %18 = vector.shape_cast %17 : vector<8xf32> to vector<8x1xf32>
    %cst_15 = arith.constant 3.200000e+01 : f32
    %19 = vector.broadcast %cst_15 : f32 to vector<8x1xf32>
    %20 = arith.divf %18, %19 : vector<8x1xf32>
    %21 = vector.broadcast %20 : vector<8x1xf32> to vector<8x32xf32>
    %22 = arith.subf %16, %21 : vector<8x32xf32>
    %23 = arith.mulf %22, %22 : vector<8x32xf32>
    %cst_16 = arith.constant dense<0.000000e+00> : vector<8xf32>
    %24 = vector.multi_reduction <add>, %23, %cst_16 [1] : vector<8x32xf32> to vector<8xf32>
    %25 = vector.shape_cast %24 : vector<8xf32> to vector<8x1xf32>
    %cst_17 = arith.constant 0.0322580636 : f32
    %26 = vector.broadcast %cst_17 : f32 to vector<8x1xf32>
    %27 = arith.mulf %25, %26 : vector<8x1xf32>
    %28 = math.sqrt %27 : vector<8x1xf32>
    %c0_18 = arith.constant 0 : index
    %c0_19 = arith.constant 0 : index
    %29 = vector.load %arg8[%c0_18, %c0_19] : memref<1x32xf32, #tpu.memory_space<vmem>>, vector<1x32xf32>
    %30 = vector.broadcast %29 : vector<1x32xf32> to vector<8x32xf32>
    %31 = arith.mulf %30, %22 : vector<8x32xf32>
    %cst_20 = arith.constant 9.99999997E-7 : f32
    %32 = vector.broadcast %cst_20 : f32 to vector<8x1xf32>
    %33 = arith.addf %28, %32 : vector<8x1xf32>
    %34 = vector.broadcast %33 : vector<8x1xf32> to vector<8x32xf32>
    %35 = arith.divf %31, %34 : vector<8x32xf32>
    %c0_21 = arith.constant 0 : index
    %c0_22 = arith.constant 0 : index
    %36 = vector.load %arg9[%c0_21, %c0_22] : memref<1x32xf32, #tpu.memory_space<vmem>>, vector<1x32xf32>
    %37 = vector.broadcast %36 : vector<1x32xf32> to vector<8x32xf32>
    %38 = arith.addf %35, %37 : vector<8x32xf32>
    %cst_23 = arith.constant 0.000000e+00 : f32
    %39 = vector.broadcast %cst_23 : f32 to vector<8x32xf32>
    %40 = arith.maximumf %38, %39 : vector<8x32xf32>
    %c0_24 = arith.constant 0 : index
    %c0_25 = arith.constant 0 : index
    %c0_26 = arith.constant 0 : index
    %41 = vector.load %arg14[%c0_24, %c0_25, %c0_26] : memref<1x8x32xf32, #tpu.memory_space<vmem>>, vector<1x8x32xf32>
    %42 = vector.shape_cast %41 : vector<1x8x32xf32> to vector<8x32xf32>
    %43 = vector.shape_cast %40 : vector<8x32xf32> to vector<1x8x32xf32>
    tpu.vector_store %arg14[%c0_24, %c0_25, %c0_26], %43 {strides = array<i32>} : memref<1x8x32xf32, #tpu.memory_space<vmem>>, vector<1x8x32xf32>,
    %c0_27 = arith.constant 0 : index
    %c0_28 = arith.constant 0 : index
    %c0_29 = arith.constant 0 : index
    %44 = vector.load %arg3[%c0_27, %c0_28, %c0_29] : memref<1x8x20xf32, #tpu.memory_space<vmem>>, vector<1x8x20xf32>
    %45 = vector.shape_cast %44 : vector<1x8x20xf32> to vector<8x20xf32>
    %46 = tpu.concatenate %45, %40 in 1 : vector<8x20xf32>, vector<8x32xf32> -> vector<8x52xf32>
    %c0_30 = arith.constant 0 : index
    %c0_31 = arith.constant 0 : index
    %47 = vector.load %arg11[%c0_30, %c0_31] : memref<52x4xf32, #tpu.memory_space<vmem>>, vector<52x4xf32>
    %cst_32 = arith.constant dense<0.000000e+00> : vector<8x4xf32>
    %48 = tpu.matmul %46, %47, %cst_32 {dimension_numbers = #tpu.dot_dimension_numbers<[1], [0], [0], [1], [0, 0, 1, 1], [], []>} : vector<8x52xf32>, vector<52x4xf32>, vector<8x4xf32> -> vector<8x4xf32>
    %c0_33 = arith.constant 0 : index
    %c0_34 = arith.constant 0 : index
    %49 = vector.load %arg12[%c0_33, %c0_34] : memref<4x52xf32, #tpu.memory_space<vmem>>, vector<4x52xf32>
    %cst_35 = arith.constant dense<0.000000e+00> : vector<4x8xf32>
    %50 = tpu.matmul %49, %46, %cst_35 {dimension_numbers = #tpu.dot_dimension_numbers<[1], [1], [0], [0], [0, 0, 1, 0], [], []>} : vector<4x52xf32>, vector<8x52xf32>, vector<4x8xf32> -> vector<4x8xf32>
    %c0_36 = arith.constant 0 : index
    %c0_37 = arith.constant 0 : index
    %51 = memref.load %arg10[%c0_36, %c0_37] : memref<20x4xf32, #tpu.memory_space<smem>>
    %c0_38 = arith.constant 0 : index
    %c0_39 = arith.constant 0 : index
    %c0_40 = arith.constant 0 : index
    %c0_41 = arith.constant 0 : index
    %52 = vector.load %arg2[%c0_38, %c0_39, %c0_40, %c0_41] : memref<1x20x8x8xf32, #tpu.memory_space<vmem>>, vector<1x1x8x8xf32>
    %53 = vector.shape_cast %52 : vector<1x1x8x8xf32> to vector<8x8xf32>
    %54 = vector.broadcast %51 : f32 to vector<8x8xf32>
    %55 = arith.mulf %54, %53 : vector<8x8xf32>
    %c1 = arith.constant 1 : index
    %c0_42 = arith.constant 0 : index
    %56 = memref.load %arg10[%c1, %c0_42] : memref<20x4xf32, #tpu.memory_space<smem>>
    %c0_43 = arith.constant 0 : index
    %c1_44 = arith.constant 1 : index
    %c0_45 = arith.constant 0 : index
    %c0_46 = arith.constant 0 : index
    %57 = vector.load %arg2[%c0_43, %c1_44, %c0_45, %c0_46] : memref<1x20x8x8xf32, #tpu.memory_space<vmem>>, vector<1x1x8x8xf32>
    %58 = vector.shape_cast %57 : vector<1x1x8x8xf32> to vector<8x8xf32>
    %59 = vector.broadcast %56 : f32 to vector<8x8xf32>
    %60 = arith.mulf %59, %58 : vector<8x8xf32>
    %61 = arith.addf %55, %60 : vector<8x8xf32>
    %c2 = arith.constant 2 : index
    %c0_47 = arith.constant 0 : index
    %62 = memref.load %arg10[%c2, %c0_47] : memref<20x4xf32, #tpu.memory_space<smem>>
    %c0_48 = arith.constant 0 : index
    %c2_49 = arith.constant 2 : index
    %c0_50 = arith.constant 0 : index
    %c0_51 = arith.constant 0 : index
    %63 = vector.load %arg2[%c0_48, %c2_49, %c0_50, %c0_51] : memref<1x20x8x8xf32, #tpu.memory_space<vmem>>, vector<1x1x8x8xf32>
    %64 = vector.shape_cast %63 : vector<1x1x8x8xf32> to vector<8x8xf32>
    %65 = vector.broadcast %62 : f32 to vector<8x8xf32>
    %66 = arith.mulf %65, %64 : vector<8x8xf32>
    %67 = arith.addf %61, %66 : vector<8x8xf32>
    %c3 = arith.constant 3 : index
    %c0_52 = arith.constant 0 : index
    %68 = memref.load %arg10[%c3, %c0_52] : memref<20x4xf32, #tpu.memory_space<smem>>
    %c0_53 = arith.constant 0 : index
    %c3_54 = arith.constant 3 : index
    %c0_55 = arith.constant 0 : index
    %c0_56 = arith.constant 0 : index
    %69 = vector.load %arg2[%c0_53, %c3_54, %c0_55, %c0_56] : memref<1x20x8x8xf32, #tpu.memory_space<vmem>>, vector<1x1x8x8xf32>
    %70 = vector.shape_cast %69 : vector<1x1x8x8xf32> to vector<8x8xf32>
    %71 = vector.broadcast %68 : f32 to vector<8x8xf32>
    %72 = arith.mulf %71, %70 : vector<8x8xf32>
    %73 = arith.addf %67, %72 : vector<8x8xf32>
    %c4 = arith.constant 4 : index
    %c0_57 = arith.constant 0 : index
    %74 = memref.load %arg10[%c4, %c0_57] : memref<20x4xf32, #tpu.memory_space<smem>>
    %c0_58 = arith.constant 0 : index
    %c4_59 = arith.constant 4 : index
    %c0_60 = arith.constant 0 : index
    %c0_61 = arith.constant 0 : index
    %75 = vector.load %arg2[%c0_58, %c4_59, %c0_60, %c0_61] : memref<1x20x8x8xf32, #tpu.memory_space<vmem>>, vector<1x1x8x8xf32>
    %76 = vector.shape_cast %75 : vector<1x1x8x8xf32> to vector<8x8xf32>
    %77 = vector.broadcast %74 : f32 to vector<8x8xf32>
    %78 = arith.mulf %77, %76 : vector<8x8xf32>
    %79 = arith.addf %73, %78 : vector<8x8xf32>
    %c5 = arith.constant 5 : index
    %c0_62 = arith.constant 0 : index
    %80 = memref.load %arg10[%c5, %c0_62] : memref<20x4xf32, #tpu.memory_space<smem>>
    %c0_63 = arith.constant 0 : index
    %c5_64 = arith.constant 5 : index
    %c0_65 = arith.constant 0 : index
    %c0_66 = arith.constant 0 : index
    %81 = vector.load %arg2[%c0_63, %c5_64, %c0_65, %c0_66] : memref<1x20x8x8xf32, #tpu.memory_space<vmem>>, vector<1x1x8x8xf32>
    %82 = vector.shape_cast %81 : vector<1x1x8x8xf32> to vector<8x8xf32>
    %83 = vector.broadcast %80 : f32 to vector<8x8xf32>
    %84 = arith.mulf %83, %82 : vector<8x8xf32>
    %85 = arith.addf %79, %84 : vector<8x8xf32>
    %c6 = arith.constant 6 : index
    %c0_67 = arith.constant 0 : index
    %86 = memref.load %arg10[%c6, %c0_67] : memref<20x4xf32, #tpu.memory_space<smem>>
    %c0_68 = arith.constant 0 : index
    %c6_69 = arith.constant 6 : index
    %c0_70 = arith.constant 0 : index
    %c0_71 = arith.constant 0 : index
    %87 = vector.load %arg2[%c0_68, %c6_69, %c0_70, %c0_71] : memref<1x20x8x8xf32, #tpu.memory_space<vmem>>, vector<1x1x8x8xf32>
    %88 = vector.shape_cast %87 : vector<1x1x8x8xf32> to vector<8x8xf32>
    %89 = vector.broadcast %86 : f32 to vector<8x8xf32>
    %90 = arith.mulf %89, %88 : vector<8x8xf32>
    %91 = arith.addf %85, %90 : vector<8x8xf32>
    %c7 = arith.constant 7 : index
    %c0_72 = arith.constant 0 : index
    %92 = memref.load %arg10[%c7, %c0_72] : memref<20x4xf32, #tpu.memory_space<smem>>
    %c0_73 = arith.constant 0 : index
    %c7_74 = arith.constant 7 : index
    %c0_75 = arith.constant 0 : index
    %c0_76 = arith.constant 0 : index
    %93 = vector.load %arg2[%c0_73, %c7_74, %c0_75, %c0_76] : memref<1x20x8x8xf32, #tpu.memory_space<vmem>>, vector<1x1x8x8xf32>
    %94 = vector.shape_cast %93 : vector<1x1x8x8xf32> to vector<8x8xf32>
    %95 = vector.broadcast %92 : f32 to vector<8x8xf32>
    %96 = arith.mulf %95, %94 : vector<8x8xf32>
    %97 = arith.addf %91, %96 : vector<8x8xf32>
    %c8 = arith.constant 8 : index
    %c0_77 = arith.constant 0 : index
    %98 = memref.load %arg10[%c8, %c0_77] : memref<20x4xf32, #tpu.memory_space<smem>>
    %c0_78 = arith.constant 0 : index
    %c8_79 = arith.constant 8 : index
    %c0_80 = arith.constant 0 : index
    %c0_81 = arith.constant 0 : index
    %99 = vector.load %arg2[%c0_78, %c8_79, %c0_80, %c0_81] : memref<1x20x8x8xf32, #tpu.memory_space<vmem>>, vector<1x1x8x8xf32>
    %100 = vector.shape_cast %99 : vector<1x1x8x8xf32> to vector<8x8xf32>
    %101 = vector.broadcast %98 : f32 to vector<8x8xf32>
    %102 = arith.mulf %101, %100 : vector<8x8xf32>
    %103 = arith.addf %97, %102 : vector<8x8xf32>
    %c9 = arith.constant 9 : index
    %c0_82 = arith.constant 0 : index
    %104 = memref.load %arg10[%c9, %c0_82] : memref<20x4xf32, #tpu.memory_space<smem>>
    %c0_83 = arith.constant 0 : index
    %c9_84 = arith.constant 9 : index
    %c0_85 = arith.constant 0 : index
    %c0_86 = arith.constant 0 : index
    %105 = vector.load %arg2[%c0_83, %c9_84, %c0_85, %c0_86] : memref<1x20x8x8xf32, #tpu.memory_space<vmem>>, vector<1x1x8x8xf32>
    %106 = vector.shape_cast %105 : vector<1x1x8x8xf32> to vector<8x8xf32>
    %107 = vector.broadcast %104 : f32 to vector<8x8xf32>
    %108 = arith.mulf %107, %106 : vector<8x8xf32>
    %109 = arith.addf %103, %108 : vector<8x8xf32>
    %c10 = arith.constant 10 : index
    %c0_87 = arith.constant 0 : index
    %110 = memref.load %arg10[%c10, %c0_87] : memref<20x4xf32, #tpu.memory_space<smem>>
    %c0_88 = arith.constant 0 : index
    %c10_89 = arith.constant 10 : index
    %c0_90 = arith.constant 0 : index
    %c0_91 = arith.constant 0 : index
    %111 = vector.load %arg2[%c0_88, %c10_89, %c0_90, %c0_91] : memref<1x20x8x8xf32, #tpu.memory_space<vmem>>, vector<1x1x8x8xf32>
    %112 = vector.shape_cast %111 : vector<1x1x8x8xf32> to vector<8x8xf32>
    %113 = vector.broadcast %110 : f32 to vector<8x8xf32>
    %114 = arith.mulf %113, %112 : vector<8x8xf32>
    %115 = arith.addf %109, %114 : vector<8x8xf32>
    %c11 = arith.constant 11 : index
    %c0_92 = arith.constant 0 : index
    %116 = memref.load %arg10[%c11, %c0_92] : memref<20x4xf32, #tpu.memory_space<smem>>
    %c0_93 = arith.constant 0 : index
    %c11_94 = arith.constant 11 : index
    %c0_95 = arith.constant 0 : index
    %c0_96 = arith.constant 0 : index
    %117 = vector.load %arg2[%c0_93, %c11_94, %c0_95, %c0_96] : memref<1x20x8x8xf32, #tpu.memory_space<vmem>>, vector<1x1x8x8xf32>
    %118 = vector.shape_cast %117 : vector<1x1x8x8xf32> to vector<8x8xf32>
    %119 = vector.broadcast %116 : f32 to vector<8x8xf32>
    %120 = arith.mulf %119, %118 : vector<8x8xf32>
    %121 = arith.addf %115, %120 : vector<8x8xf32>
    %c12 = arith.constant 12 : index
    %c0_97 = arith.constant 0 : index
    %122 = memref.load %arg10[%c12, %c0_97] : memref<20x4xf32, #tpu.memory_space<smem>>
    %c0_98 = arith.constant 0 : index
    %c12_99 = arith.constant 12 : index
    %c0_100 = arith.constant 0 : index
    %c0_101 = arith.constant 0 : index
    %123 = vector.load %arg2[%c0_98, %c12_99, %c0_100, %c0_101] : memref<1x20x8x8xf32, #tpu.memory_space<vmem>>, vector<1x1x8x8xf32>
    %124 = vector.shape_cast %123 : vector<1x1x8x8xf32> to vector<8x8xf32>
    %125 = vector.broadcast %122 : f32 to vector<8x8xf32>
    %126 = arith.mulf %125, %124 : vector<8x8xf32>
    %127 = arith.addf %121, %126 : vector<8x8xf32>
    %c13 = arith.constant 13 : index
    %c0_102 = arith.constant 0 : index
    %128 = memref.load %arg10[%c13, %c0_102] : memref<20x4xf32, #tpu.memory_space<smem>>
    %c0_103 = arith.constant 0 : index
    %c13_104 = arith.constant 13 : index
    %c0_105 = arith.constant 0 : index
    %c0_106 = arith.constant 0 : index
    %129 = vector.load %arg2[%c0_103, %c13_104, %c0_105, %c0_106] : memref<1x20x8x8xf32, #tpu.memory_space<vmem>>, vector<1x1x8x8xf32>
    %130 = vector.shape_cast %129 : vector<1x1x8x8xf32> to vector<8x8xf32>
    %131 = vector.broadcast %128 : f32 to vector<8x8xf32>
    %132 = arith.mulf %131, %130 : vector<8x8xf32>
    %133 = arith.addf %127, %132 : vector<8x8xf32>
    %c14 = arith.constant 14 : index
    %c0_107 = arith.constant 0 : index
    %134 = memref.load %arg10[%c14, %c0_107] : memref<20x4xf32, #tpu.memory_space<smem>>
    %c0_108 = arith.constant 0 : index
    %c14_109 = arith.constant 14 : index
    %c0_110 = arith.constant 0 : index
    %c0_111 = arith.constant 0 : index
    %135 = vector.load %arg2[%c0_108, %c14_109, %c0_110, %c0_111] : memref<1x20x8x8xf32, #tpu.memory_space<vmem>>, vector<1x1x8x8xf32>
    %136 = vector.shape_cast %135 : vector<1x1x8x8xf32> to vector<8x8xf32>
    %137 = vector.broadcast %134 : f32 to vector<8x8xf32>
    %138 = arith.mulf %137, %136 : vector<8x8xf32>
    %139 = arith.addf %133, %138 : vector<8x8xf32>
    %c15 = arith.constant 15 : index
    %c0_112 = arith.constant 0 : index
    %140 = memref.load %arg10[%c15, %c0_112] : memref<20x4xf32, #tpu.memory_space<smem>>
    %c0_113 = arith.constant 0 : index
    %c15_114 = arith.constant 15 : index
    %c0_115 = arith.constant 0 : index
    %c0_116 = arith.constant 0 : index
    %141 = vector.load %arg2[%c0_113, %c15_114, %c0_115, %c0_116] : memref<1x20x8x8xf32, #tpu.memory_space<vmem>>, vector<1x1x8x8xf32>
    %142 = vector.shape_cast %141 : vector<1x1x8x8xf32> to vector<8x8xf32>
    %143 = vector.broadcast %140 : f32 to vector<8x8xf32>
    %144 = arith.mulf %143, %142 : vector<8x8xf32>
    %145 = arith.addf %139, %144 : vector<8x8xf32>
    %c16 = arith.constant 16 : index
    %c0_117 = arith.constant 0 : index
    %146 = memref.load %arg10[%c16, %c0_117] : memref<20x4xf32, #tpu.memory_space<smem>>
    %c0_118 = arith.constant 0 : index
    %c16_119 = arith.constant 16 : index
    %c0_120 = arith.constant 0 : index
    %c0_121 = arith.constant 0 : index
    %147 = vector.load %arg2[%c0_118, %c16_119, %c0_120, %c0_121] : memref<1x20x8x8xf32, #tpu.memory_space<vmem>>, vector<1x1x8x8xf32>
    %148 = vector.shape_cast %147 : vector<1x1x8x8xf32> to vector<8x8xf32>
    %149 = vector.broadcast %146 : f32 to vector<8x8xf32>
    %150 = arith.mulf %149, %148 : vector<8x8xf32>
    %151 = arith.addf %145, %150 : vector<8x8xf32>
    %c17 = arith.constant 17 : index
    %c0_122 = arith.constant 0 : index
    %152 = memref.load %arg10[%c17, %c0_122] : memref<20x4xf32, #tpu.memory_space<smem>>
    %c0_123 = arith.constant 0 : index
    %c17_124 = arith.constant 17 : index
    %c0_125 = arith.constant 0 : index
    %c0_126 = arith.constant 0 : index
    %153 = vector.load %arg2[%c0_123, %c17_124, %c0_125, %c0_126] : memref<1x20x8x8xf32, #tpu.memory_space<vmem>>, vector<1x1x8x8xf32>
    %154 = vector.shape_cast %153 : vector<1x1x8x8xf32> to vector<8x8xf32>
    %155 = vector.broadcast %152 : f32 to vector<8x8xf32>
    %156 = arith.mulf %155, %154 : vector<8x8xf32>
    %157 = arith.addf %151, %156 : vector<8x8xf32>
    %c18 = arith.constant 18 : index
    %c0_127 = arith.constant 0 : index
    %158 = memref.load %arg10[%c18, %c0_127] : memref<20x4xf32, #tpu.memory_space<smem>>
    %c0_128 = arith.constant 0 : index
    %c18_129 = arith.constant 18 : index
    %c0_130 = arith.constant 0 : index
    %c0_131 = arith.constant 0 : index
    %159 = vector.load %arg2[%c0_128, %c18_129, %c0_130, %c0_131] : memref<1x20x8x8xf32, #tpu.memory_space<vmem>>, vector<1x1x8x8xf32>
    %160 = vector.shape_cast %159 : vector<1x1x8x8xf32> to vector<8x8xf32>
    %161 = vector.broadcast %158 : f32 to vector<8x8xf32>
    %162 = arith.mulf %161, %160 : vector<8x8xf32>
    %163 = arith.addf %157, %162 : vector<8x8xf32>
    %c19 = arith.constant 19 : index
    %c0_132 = arith.constant 0 : index
    %164 = memref.load %arg10[%c19, %c0_132] : memref<20x4xf32, #tpu.memory_space<smem>>
    %c0_133 = arith.constant 0 : index
    %c19_134 = arith.constant 19 : index
    %c0_135 = arith.constant 0 : index
    %c0_136 = arith.constant 0 : index
    %165 = vector.load %arg2[%c0_133, %c19_134, %c0_135, %c0_136] : memref<1x20x8x8xf32, #tpu.memory_space<vmem>>, vector<1x1x8x8xf32>
    %166 = vector.shape_cast %165 : vector<1x1x8x8xf32> to vector<8x8xf32>
    %167 = vector.broadcast %164 : f32 to vector<8x8xf32>
    %168 = arith.mulf %167, %166 : vector<8x8xf32>
    %169 = arith.addf %163, %168 : vector<8x8xf32>
    %170 = vector.extract_strided_slice %50 {offsets = [0, 0], sizes = [1, 8], strides = [1, 1]} : vector<4x8xf32> to vector<1x8xf32>
    %171 = vector.broadcast %170 : vector<1x8xf32> to vector<8x8xf32>
    %172 = arith.addf %169, %171 : vector<8x8xf32>
    %173 = vector.extract_strided_slice %48 {offsets = [0, 0], sizes = [8, 1], strides = [1, 1]} : vector<8x4xf32> to vector<8x1xf32>
    %174 = vector.broadcast %173 : vector<8x1xf32> to vector<8x8xf32>
    %175 = arith.addf %172, %174 : vector<8x8xf32>
    %c0_137 = arith.constant 0 : index
    %c0_138 = arith.constant 0 : index
    %176 = memref.load %arg13[%c0_137, %c0_138] : memref<1x4xf32, #tpu.memory_space<smem>>
    %177 = vector.broadcast %176 : f32 to vector<8x8xf32>
    %178 = arith.addf %175, %177 : vector<8x8xf32>
    %c0_139 = arith.constant 0 : index
    %c0_140 = arith.constant 0 : index
    %c0_141 = arith.constant 0 : index
    %c0_142 = arith.constant 0 : index
    %179 = vector.load %arg15[%c0_139, %c0_140, %c0_141, %c0_142] : memref<1x4x8x8xf32, #tpu.memory_space<vmem>>, vector<1x1x8x8xf32>
    %180 = vector.shape_cast %179 : vector<1x1x8x8xf32> to vector<8x8xf32>
    %181 = vector.shape_cast %178 : vector<8x8xf32> to vector<1x1x8x8xf32>
    tpu.vector_store %arg15[%c0_139, %c0_140, %c0_141, %c0_142], %181 {strides = array<i32>} : memref<1x4x8x8xf32, #tpu.memory_space<vmem>>, vector<1x1x8x8xf32>,
    %c0_143 = arith.constant 0 : index
    %c1_144 = arith.constant 1 : index
    %182 = memref.load %arg10[%c0_143, %c1_144] : memref<20x4xf32, #tpu.memory_space<smem>>
    %c0_145 = arith.constant 0 : index
    %c0_146 = arith.constant 0 : index
    %c0_147 = arith.constant 0 : index
    %c0_148 = arith.constant 0 : index
    %183 = vector.load %arg2[%c0_145, %c0_146, %c0_147, %c0_148] : memref<1x20x8x8xf32, #tpu.memory_space<vmem>>, vector<1x1x8x8xf32>
    %184 = vector.shape_cast %183 : vector<1x1x8x8xf32> to vector<8x8xf32>
    %185 = vector.broadcast %182 : f32 to vector<8x8xf32>
    %186 = arith.mulf %185, %184 : vector<8x8xf32>
    %c1_149 = arith.constant 1 : index
    %c1_150 = arith.constant 1 : index
    %187 = memref.load %arg10[%c1_149, %c1_150] : memref<20x4xf32, #tpu.memory_space<smem>>
    %c0_151 = arith.constant 0 : index
    %c1_152 = arith.constant 1 : index
    %c0_153 = arith.constant 0 : index
    %c0_154 = arith.constant 0 : index
    %188 = vector.load %arg2[%c0_151, %c1_152, %c0_153, %c0_154] : memref<1x20x8x8xf32, #tpu.memory_space<vmem>>, vector<1x1x8x8xf32>
    %189 = vector.shape_cast %188 : vector<1x1x8x8xf32> to vector<8x8xf32>
    %190 = vector.broadcast %187 : f32 to vector<8x8xf32>
    %191 = arith.mulf %190, %189 : vector<8x8xf32>
    %192 = arith.addf %186, %191 : vector<8x8xf32>
    %c2_155 = arith.constant 2 : index
    %c1_156 = arith.constant 1 : index
    %193 = memref.load %arg10[%c2_155, %c1_156] : memref<20x4xf32, #tpu.memory_space<smem>>
    %c0_157 = arith.constant 0 : index
    %c2_158 = arith.constant 2 : index
    %c0_159 = arith.constant 0 : index
    %c0_160 = arith.constant 0 : index
    %194 = vector.load %arg2[%c0_157, %c2_158, %c0_159, %c0_160] : memref<1x20x8x8xf32, #tpu.memory_space<vmem>>, vector<1x1x8x8xf32>
    %195 = vector.shape_cast %194 : vector<1x1x8x8xf32> to vector<8x8xf32>
    %196 = vector.broadcast %193 : f32 to vector<8x8xf32>
    %197 = arith.mulf %196, %195 : vector<8x8xf32>
    %198 = arith.addf %192, %197 : vector<8x8xf32>
    %c3_161 = arith.constant 3 : index
    %c1_162 = arith.constant 1 : index
    %199 = memref.load %arg10[%c3_161, %c1_162] : memref<20x4xf32, #tpu.memory_space<smem>>
    %c0_163 = arith.constant 0 : index
    %c3_164 = arith.constant 3 : index
    %c0_165 = arith.constant 0 : index
    %c0_166 = arith.constant 0 : index
    %200 = vector.load %arg2[%c0_163, %c3_164, %c0_165, %c0_166] : memref<1x20x8x8xf32, #tpu.memory_space<vmem>>, vector<1x1x8x8xf32>
    %201 = vector.shape_cast %200 : vector<1x1x8x8xf32> to vector<8x8xf32>
    %202 = vector.broadcast %199 : f32 to vector<8x8xf32>
    %203 = arith.mulf %202, %201 : vector<8x8xf32>
    %204 = arith.addf %198, %203 : vector<8x8xf32>
    %c4_167 = arith.constant 4 : index
    %c1_168 = arith.constant 1 : index
    %205 = memref.load %arg10[%c4_167, %c1_168] : memref<20x4xf32, #tpu.memory_space<smem>>
    %c0_169 = arith.constant 0 : index
    %c4_170 = arith.constant 4 : index
    %c0_171 = arith.constant 0 : index
    %c0_172 = arith.constant 0 : index
    %206 = vector.load %arg2[%c0_169, %c4_170, %c0_171, %c0_172] : memref<1x20x8x8xf32, #tpu.memory_space<vmem>>, vector<1x1x8x8xf32>
    %207 = vector.shape_cast %206 : vector<1x1x8x8xf32> to vector<8x8xf32>
    %208 = vector.broadcast %205 : f32 to vector<8x8xf32>
    %209 = arith.mulf %208, %207 : vector<8x8xf32>
    %210 = arith.addf %204, %209 : vector<8x8xf32>
    %c5_173 = arith.constant 5 : index
    %c1_174 = arith.constant 1 : index
    %211 = memref.load %arg10[%c5_173, %c1_174] : memref<20x4xf32, #tpu.memory_space<smem>>
    %c0_175 = arith.constant 0 : index
    %c5_176 = arith.constant 5 : index
    %c0_177 = arith.constant 0 : index
    %c0_178 = arith.constant 0 : index
    %212 = vector.load %arg2[%c0_175, %c5_176, %c0_177, %c0_178] : memref<1x20x8x8xf32, #tpu.memory_space<vmem>>, vector<1x1x8x8xf32>
    %213 = vector.shape_cast %212 : vector<1x1x8x8xf32> to vector<8x8xf32>
    %214 = vector.broadcast %211 : f32 to vector<8x8xf32>
    %215 = arith.mulf %214, %213 : vector<8x8xf32>
    %216 = arith.addf %210, %215 : vector<8x8xf32>
    %c6_179 = arith.constant 6 : index
    %c1_180 = arith.constant 1 : index
    %217 = memref.load %arg10[%c6_179, %c1_180] : memref<20x4xf32, #tpu.memory_space<smem>>
    %c0_181 = arith.constant 0 : index
    %c6_182 = arith.constant 6 : index
    %c0_183 = arith.constant 0 : index
    %c0_184 = arith.constant 0 : index
    %218 = vector.load %arg2[%c0_181, %c6_182, %c0_183, %c0_184] : memref<1x20x8x8xf32, #tpu.memory_space<vmem>>, vector<1x1x8x8xf32>
    %219 = vector.shape_cast %218 : vector<1x1x8x8xf32> to vector<8x8xf32>
    %220 = vector.broadcast %217 : f32 to vector<8x8xf32>
    %221 = arith.mulf %220, %219 : vector<8x8xf32>
    %222 = arith.addf %216, %221 : vector<8x8xf32>
    %c7_185 = arith.constant 7 : index
    %c1_186 = arith.constant 1 : index
    %223 = memref.load %arg10[%c7_185, %c1_186] : memref<20x4xf32, #tpu.memory_space<smem>>
    %c0_187 = arith.constant 0 : index
    %c7_188 = arith.constant 7 : index
    %c0_189 = arith.constant 0 : index
    %c0_190 = arith.constant 0 : index
    %224 = vector.load %arg2[%c0_187, %c7_188, %c0_189, %c0_190] : memref<1x20x8x8xf32, #tpu.memory_space<vmem>>, vector<1x1x8x8xf32>
    %225 = vector.shape_cast %224 : vector<1x1x8x8xf32> to vector<8x8xf32>
    %226 = vector.broadcast %223 : f32 to vector<8x8xf32>
    %227 = arith.mulf %226, %225 : vector<8x8xf32>
    %228 = arith.addf %222, %227 : vector<8x8xf32>
    %c8_191 = arith.constant 8 : index
    %c1_192 = arith.constant 1 : index
    %229 = memref.load %arg10[%c8_191, %c1_192] : memref<20x4xf32, #tpu.memory_space<smem>>
    %c0_193 = arith.constant 0 : index
    %c8_194 = arith.constant 8 : index
    %c0_195 = arith.constant 0 : index
    %c0_196 = arith.constant 0 : index
    %230 = vector.load %arg2[%c0_193, %c8_194, %c0_195, %c0_196] : memref<1x20x8x8xf32, #tpu.memory_space<vmem>>, vector<1x1x8x8xf32>
    %231 = vector.shape_cast %230 : vector<1x1x8x8xf32> to vector<8x8xf32>
    %232 = vector.broadcast %229 : f32 to vector<8x8xf32>
    %233 = arith.mulf %232, %231 : vector<8x8xf32>
    %234 = arith.addf %228, %233 : vector<8x8xf32>
    %c9_197 = arith.constant 9 : index
    %c1_198 = arith.constant 1 : index
    %235 = memref.load %arg10[%c9_197, %c1_198] : memref<20x4xf32, #tpu.memory_space<smem>>
    %c0_199 = arith.constant 0 : index
    %c9_200 = arith.constant 9 : index
    %c0_201 = arith.constant 0 : index
    %c0_202 = arith.constant 0 : index
    %236 = vector.load %arg2[%c0_199, %c9_200, %c0_201, %c0_202] : memref<1x20x8x8xf32, #tpu.memory_space<vmem>>, vector<1x1x8x8xf32>
    %237 = vector.shape_cast %236 : vector<1x1x8x8xf32> to vector<8x8xf32>
    %238 = vector.broadcast %235 : f32 to vector<8x8xf32>
    %239 = arith.mulf %238, %237 : vector<8x8xf32>
    %240 = arith.addf %234, %239 : vector<8x8xf32>
    %c10_203 = arith.constant 10 : index
    %c1_204 = arith.constant 1 : index
    %241 = memref.load %arg10[%c10_203, %c1_204] : memref<20x4xf32, #tpu.memory_space<smem>>
    %c0_205 = arith.constant 0 : index
    %c10_206 = arith.constant 10 : index
    %c0_207 = arith.constant 0 : index
    %c0_208 = arith.constant 0 : index
    %242 = vector.load %arg2[%c0_205, %c10_206, %c0_207, %c0_208] : memref<1x20x8x8xf32, #tpu.memory_space<vmem>>, vector<1x1x8x8xf32>
    %243 = vector.shape_cast %242 : vector<1x1x8x8xf32> to vector<8x8xf32>
    %244 = vector.broadcast %241 : f32 to vector<8x8xf32>
    %245 = arith.mulf %244, %243 : vector<8x8xf32>
    %246 = arith.addf %240, %245 : vector<8x8xf32>
    %c11_209 = arith.constant 11 : index
    %c1_210 = arith.constant 1 : index
    %247 = memref.load %arg10[%c11_209, %c1_210] : memref<20x4xf32, #tpu.memory_space<smem>>
    %c0_211 = arith.constant 0 : index
    %c11_212 = arith.constant 11 : index
    %c0_213 = arith.constant 0 : index
    %c0_214 = arith.constant 0 : index
    %248 = vector.load %arg2[%c0_211, %c11_212, %c0_213, %c0_214] : memref<1x20x8x8xf32, #tpu.memory_space<vmem>>, vector<1x1x8x8xf32>
    %249 = vector.shape_cast %248 : vector<1x1x8x8xf32> to vector<8x8xf32>
    %250 = vector.broadcast %247 : f32 to vector<8x8xf32>
    %251 = arith.mulf %250, %249 : vector<8x8xf32>
    %252 = arith.addf %246, %251 : vector<8x8xf32>
    %c12_215 = arith.constant 12 : index
    %c1_216 = arith.constant 1 : index
    %253 = memref.load %arg10[%c12_215, %c1_216] : memref<20x4xf32, #tpu.memory_space<smem>>
    %c0_217 = arith.constant 0 : index
    %c12_218 = arith.constant 12 : index
    %c0_219 = arith.constant 0 : index
    %c0_220 = arith.constant 0 : index
    %254 = vector.load %arg2[%c0_217, %c12_218, %c0_219, %c0_220] : memref<1x20x8x8xf32, #tpu.memory_space<vmem>>, vector<1x1x8x8xf32>
    %255 = vector.shape_cast %254 : vector<1x1x8x8xf32> to vector<8x8xf32>
    %256 = vector.broadcast %253 : f32 to vector<8x8xf32>
    %257 = arith.mulf %256, %255 : vector<8x8xf32>
    %258 = arith.addf %252, %257 : vector<8x8xf32>
    %c13_221 = arith.constant 13 : index
    %c1_222 = arith.constant 1 : index
    %259 = memref.load %arg10[%c13_221, %c1_222] : memref<20x4xf32, #tpu.memory_space<smem>>
    %c0_223 = arith.constant 0 : index
    %c13_224 = arith.constant 13 : index
    %c0_225 = arith.constant 0 : index
    %c0_226 = arith.constant 0 : index
    %260 = vector.load %arg2[%c0_223, %c13_224, %c0_225, %c0_226] : memref<1x20x8x8xf32, #tpu.memory_space<vmem>>, vector<1x1x8x8xf32>
    %261 = vector.shape_cast %260 : vector<1x1x8x8xf32> to vector<8x8xf32>
    %262 = vector.broadcast %259 : f32 to vector<8x8xf32>
    %263 = arith.mulf %262, %261 : vector<8x8xf32>
    %264 = arith.addf %258, %263 : vector<8x8xf32>
    %c14_227 = arith.constant 14 : index
    %c1_228 = arith.constant 1 : index
    %265 = memref.load %arg10[%c14_227, %c1_228] : memref<20x4xf32, #tpu.memory_space<smem>>
    %c0_229 = arith.constant 0 : index
    %c14_230 = arith.constant 14 : index
    %c0_231 = arith.constant 0 : index
    %c0_232 = arith.constant 0 : index
    %266 = vector.load %arg2[%c0_229, %c14_230, %c0_231, %c0_232] : memref<1x20x8x8xf32, #tpu.memory_space<vmem>>, vector<1x1x8x8xf32>
    %267 = vector.shape_cast %266 : vector<1x1x8x8xf32> to vector<8x8xf32>
    %268 = vector.broadcast %265 : f32 to vector<8x8xf32>
    %269 = arith.mulf %268, %267 : vector<8x8xf32>
    %270 = arith.addf %264, %269 : vector<8x8xf32>
    %c15_233 = arith.constant 15 : index
    %c1_234 = arith.constant 1 : index
    %271 = memref.load %arg10[%c15_233, %c1_234] : memref<20x4xf32, #tpu.memory_space<smem>>
    %c0_235 = arith.constant 0 : index
    %c15_236 = arith.constant 15 : index
    %c0_237 = arith.constant 0 : index
    %c0_238 = arith.constant 0 : index
    %272 = vector.load %arg2[%c0_235, %c15_236, %c0_237, %c0_238] : memref<1x20x8x8xf32, #tpu.memory_space<vmem>>, vector<1x1x8x8xf32>
    %273 = vector.shape_cast %272 : vector<1x1x8x8xf32> to vector<8x8xf32>
    %274 = vector.broadcast %271 : f32 to vector<8x8xf32>
    %275 = arith.mulf %274, %273 : vector<8x8xf32>
    %276 = arith.addf %270, %275 : vector<8x8xf32>
    %c16_239 = arith.constant 16 : index
    %c1_240 = arith.constant 1 : index
    %277 = memref.load %arg10[%c16_239, %c1_240] : memref<20x4xf32, #tpu.memory_space<smem>>
    %c0_241 = arith.constant 0 : index
    %c16_242 = arith.constant 16 : index
    %c0_243 = arith.constant 0 : index
    %c0_244 = arith.constant 0 : index
    %278 = vector.load %arg2[%c0_241, %c16_242, %c0_243, %c0_244] : memref<1x20x8x8xf32, #tpu.memory_space<vmem>>, vector<1x1x8x8xf32>
    %279 = vector.shape_cast %278 : vector<1x1x8x8xf32> to vector<8x8xf32>
    %280 = vector.broadcast %277 : f32 to vector<8x8xf32>
    %281 = arith.mulf %280, %279 : vector<8x8xf32>
    %282 = arith.addf %276, %281 : vector<8x8xf32>
    %c17_245 = arith.constant 17 : index
    %c1_246 = arith.constant 1 : index
    %283 = memref.load %arg10[%c17_245, %c1_246] : memref<20x4xf32, #tpu.memory_space<smem>>
    %c0_247 = arith.constant 0 : index
    %c17_248 = arith.constant 17 : index
    %c0_249 = arith.constant 0 : index
    %c0_250 = arith.constant 0 : index
    %284 = vector.load %arg2[%c0_247, %c17_248, %c0_249, %c0_250] : memref<1x20x8x8xf32, #tpu.memory_space<vmem>>, vector<1x1x8x8xf32>
    %285 = vector.shape_cast %284 : vector<1x1x8x8xf32> to vector<8x8xf32>
    %286 = vector.broadcast %283 : f32 to vector<8x8xf32>
    %287 = arith.mulf %286, %285 : vector<8x8xf32>
    %288 = arith.addf %282, %287 : vector<8x8xf32>
    %c18_251 = arith.constant 18 : index
    %c1_252 = arith.constant 1 : index
    %289 = memref.load %arg10[%c18_251, %c1_252] : memref<20x4xf32, #tpu.memory_space<smem>>
    %c0_253 = arith.constant 0 : index
    %c18_254 = arith.constant 18 : index
    %c0_255 = arith.constant 0 : index
    %c0_256 = arith.constant 0 : index
    %290 = vector.load %arg2[%c0_253, %c18_254, %c0_255, %c0_256] : memref<1x20x8x8xf32, #tpu.memory_space<vmem>>, vector<1x1x8x8xf32>
    %291 = vector.shape_cast %290 : vector<1x1x8x8xf32> to vector<8x8xf32>
    %292 = vector.broadcast %289 : f32 to vector<8x8xf32>
    %293 = arith.mulf %292, %291 : vector<8x8xf32>
    %294 = arith.addf %288, %293 : vector<8x8xf32>
    %c19_257 = arith.constant 19 : index
    %c1_258 = arith.constant 1 : index
    %295 = memref.load %arg10[%c19_257, %c1_258] : memref<20x4xf32, #tpu.memory_space<smem>>
    %c0_259 = arith.constant 0 : index
    %c19_260 = arith.constant 19 : index
    %c0_261 = arith.constant 0 : index
    %c0_262 = arith.constant 0 : index
    %296 = vector.load %arg2[%c0_259, %c19_260, %c0_261, %c0_262] : memref<1x20x8x8xf32, #tpu.memory_space<vmem>>, vector<1x1x8x8xf32>
    %297 = vector.shape_cast %296 : vector<1x1x8x8xf32> to vector<8x8xf32>
    %298 = vector.broadcast %295 : f32 to vector<8x8xf32>
    %299 = arith.mulf %298, %297 : vector<8x8xf32>
    %300 = arith.addf %294, %299 : vector<8x8xf32>
    %301 = vector.extract_strided_slice %50 {offsets = [1, 0], sizes = [1, 8], strides = [1, 1]} : vector<4x8xf32> to vector<1x8xf32>
    %302 = vector.broadcast %301 : vector<1x8xf32> to vector<8x8xf32>
    %303 = arith.addf %300, %302 : vector<8x8xf32>
    %304 = vector.extract_strided_slice %48 {offsets = [0, 1], sizes = [8, 1], strides = [1, 1]} : vector<8x4xf32> to vector<8x1xf32>
    %305 = vector.broadcast %304 : vector<8x1xf32> to vector<8x8xf32>
    %306 = arith.addf %303, %305 : vector<8x8xf32>
    %c0_263 = arith.constant 0 : index
    %c1_264 = arith.constant 1 : index
    %307 = memref.load %arg13[%c0_263, %c1_264] : memref<1x4xf32, #tpu.memory_space<smem>>
    %308 = vector.broadcast %307 : f32 to vector<8x8xf32>
    %309 = arith.addf %306, %308 : vector<8x8xf32>
    %c0_265 = arith.constant 0 : index
    %c1_266 = arith.constant 1 : index
    %c0_267 = arith.constant 0 : index
    %c0_268 = arith.constant 0 : index
    %310 = vector.load %arg15[%c0_265, %c1_266, %c0_267, %c0_268] : memref<1x4x8x8xf32, #tpu.memory_space<vmem>>, vector<1x1x8x8xf32>
    %311 = vector.shape_cast %310 : vector<1x1x8x8xf32> to vector<8x8xf32>
    %312 = vector.shape_cast %309 : vector<8x8xf32> to vector<1x1x8x8xf32>
    tpu.vector_store %arg15[%c0_265, %c1_266, %c0_267, %c0_268], %312 {strides = array<i32>} : memref<1x4x8x8xf32, #tpu.memory_space<vmem>>, vector<1x1x8x8xf32>,
    %c0_269 = arith.constant 0 : index
    %c2_270 = arith.constant 2 : index
    %313 = memref.load %arg10[%c0_269, %c2_270] : memref<20x4xf32, #tpu.memory_space<smem>>
    %c0_271 = arith.constant 0 : index
    %c0_272 = arith.constant 0 : index
    %c0_273 = arith.constant 0 : index
    %c0_274 = arith.constant 0 : index
    %314 = vector.load %arg2[%c0_271, %c0_272, %c0_273, %c0_274] : memref<1x20x8x8xf32, #tpu.memory_space<vmem>>, vector<1x1x8x8xf32>
    %315 = vector.shape_cast %314 : vector<1x1x8x8xf32> to vector<8x8xf32>
    %316 = vector.broadcast %313 : f32 to vector<8x8xf32>
    %317 = arith.mulf %316, %315 : vector<8x8xf32>
    %c1_275 = arith.constant 1 : index
    %c2_276 = arith.constant 2 : index
    %318 = memref.load %arg10[%c1_275, %c2_276] : memref<20x4xf32, #tpu.memory_space<smem>>
    %c0_277 = arith.constant 0 : index
    %c1_278 = arith.constant 1 : index
    %c0_279 = arith.constant 0 : index
    %c0_280 = arith.constant 0 : index
    %319 = vector.load %arg2[%c0_277, %c1_278, %c0_279, %c0_280] : memref<1x20x8x8xf32, #tpu.memory_space<vmem>>, vector<1x1x8x8xf32>
    %320 = vector.shape_cast %319 : vector<1x1x8x8xf32> to vector<8x8xf32>
    %321 = vector.broadcast %318 : f32 to vector<8x8xf32>
    %322 = arith.mulf %321, %320 : vector<8x8xf32>
    %323 = arith.addf %317, %322 : vector<8x8xf32>
    %c2_281 = arith.constant 2 : index
    %c2_282 = arith.constant 2 : index
    %324 = memref.load %arg10[%c2_281, %c2_282] : memref<20x4xf32, #tpu.memory_space<smem>>
    %c0_283 = arith.constant 0 : index
    %c2_284 = arith.constant 2 : index
    %c0_285 = arith.constant 0 : index
    %c0_286 = arith.constant 0 : index
    %325 = vector.load %arg2[%c0_283, %c2_284, %c0_285, %c0_286] : memref<1x20x8x8xf32, #tpu.memory_space<vmem>>, vector<1x1x8x8xf32>
    %326 = vector.shape_cast %325 : vector<1x1x8x8xf32> to vector<8x8xf32>
    %327 = vector.broadcast %324 : f32 to vector<8x8xf32>
    %328 = arith.mulf %327, %326 : vector<8x8xf32>
    %329 = arith.addf %323, %328 : vector<8x8xf32>
    %c3_287 = arith.constant 3 : index
    %c2_288 = arith.constant 2 : index
    %330 = memref.load %arg10[%c3_287, %c2_288] : memref<20x4xf32, #tpu.memory_space<smem>>
    %c0_289 = arith.constant 0 : index
    %c3_290 = arith.constant 3 : index
    %c0_291 = arith.constant 0 : index
    %c0_292 = arith.constant 0 : index
    %331 = vector.load %arg2[%c0_289, %c3_290, %c0_291, %c0_292] : memref<1x20x8x8xf32, #tpu.memory_space<vmem>>, vector<1x1x8x8xf32>
    %332 = vector.shape_cast %331 : vector<1x1x8x8xf32> to vector<8x8xf32>
    %333 = vector.broadcast %330 : f32 to vector<8x8xf32>
    %334 = arith.mulf %333, %332 : vector<8x8xf32>
    %335 = arith.addf %329, %334 : vector<8x8xf32>
    %c4_293 = arith.constant 4 : index
    %c2_294 = arith.constant 2 : index
    %336 = memref.load %arg10[%c4_293, %c2_294] : memref<20x4xf32, #tpu.memory_space<smem>>
    %c0_295 = arith.constant 0 : index
    %c4_296 = arith.constant 4 : index
    %c0_297 = arith.constant 0 : index
    %c0_298 = arith.constant 0 : index
    %337 = vector.load %arg2[%c0_295, %c4_296, %c0_297, %c0_298] : memref<1x20x8x8xf32, #tpu.memory_space<vmem>>, vector<1x1x8x8xf32>
    %338 = vector.shape_cast %337 : vector<1x1x8x8xf32> to vector<8x8xf32>
    %339 = vector.broadcast %336 : f32 to vector<8x8xf32>
    %340 = arith.mulf %339, %338 : vector<8x8xf32>
    %341 = arith.addf %335, %340 : vector<8x8xf32>
    %c5_299 = arith.constant 5 : index
    %c2_300 = arith.constant 2 : index
    %342 = memref.load %arg10[%c5_299, %c2_300] : memref<20x4xf32, #tpu.memory_space<smem>>
    %c0_301 = arith.constant 0 : index
    %c5_302 = arith.constant 5 : index
    %c0_303 = arith.constant 0 : index
    %c0_304 = arith.constant 0 : index
    %343 = vector.load %arg2[%c0_301, %c5_302, %c0_303, %c0_304] : memref<1x20x8x8xf32, #tpu.memory_space<vmem>>, vector<1x1x8x8xf32>
    %344 = vector.shape_cast %343 : vector<1x1x8x8xf32> to vector<8x8xf32>
    %345 = vector.broadcast %342 : f32 to vector<8x8xf32>
    %346 = arith.mulf %345, %344 : vector<8x8xf32>
    %347 = arith.addf %341, %346 : vector<8x8xf32>
    %c6_305 = arith.constant 6 : index
    %c2_306 = arith.constant 2 : index
    %348 = memref.load %arg10[%c6_305, %c2_306] : memref<20x4xf32, #tpu.memory_space<smem>>
    %c0_307 = arith.constant 0 : index
    %c6_308 = arith.constant 6 : index
    %c0_309 = arith.constant 0 : index
    %c0_310 = arith.constant 0 : index
    %349 = vector.load %arg2[%c0_307, %c6_308, %c0_309, %c0_310] : memref<1x20x8x8xf32, #tpu.memory_space<vmem>>, vector<1x1x8x8xf32>
    %350 = vector.shape_cast %349 : vector<1x1x8x8xf32> to vector<8x8xf32>
    %351 = vector.broadcast %348 : f32 to vector<8x8xf32>
    %352 = arith.mulf %351, %350 : vector<8x8xf32>
    %353 = arith.addf %347, %352 : vector<8x8xf32>
    %c7_311 = arith.constant 7 : index
    %c2_312 = arith.constant 2 : index
    %354 = memref.load %arg10[%c7_311, %c2_312] : memref<20x4xf32, #tpu.memory_space<smem>>
    %c0_313 = arith.constant 0 : index
    %c7_314 = arith.constant 7 : index
    %c0_315 = arith.constant 0 : index
    %c0_316 = arith.constant 0 : index
    %355 = vector.load %arg2[%c0_313, %c7_314, %c0_315, %c0_316] : memref<1x20x8x8xf32, #tpu.memory_space<vmem>>, vector<1x1x8x8xf32>
    %356 = vector.shape_cast %355 : vector<1x1x8x8xf32> to vector<8x8xf32>
    %357 = vector.broadcast %354 : f32 to vector<8x8xf32>
    %358 = arith.mulf %357, %356 : vector<8x8xf32>
    %359 = arith.addf %353, %358 : vector<8x8xf32>
    %c8_317 = arith.constant 8 : index
    %c2_318 = arith.constant 2 : index
    %360 = memref.load %arg10[%c8_317, %c2_318] : memref<20x4xf32, #tpu.memory_space<smem>>
    %c0_319 = arith.constant 0 : index
    %c8_320 = arith.constant 8 : index
    %c0_321 = arith.constant 0 : index
    %c0_322 = arith.constant 0 : index
    %361 = vector.load %arg2[%c0_319, %c8_320, %c0_321, %c0_322] : memref<1x20x8x8xf32, #tpu.memory_space<vmem>>, vector<1x1x8x8xf32>
    %362 = vector.shape_cast %361 : vector<1x1x8x8xf32> to vector<8x8xf32>
    %363 = vector.broadcast %360 : f32 to vector<8x8xf32>
    %364 = arith.mulf %363, %362 : vector<8x8xf32>
    %365 = arith.addf %359, %364 : vector<8x8xf32>
    %c9_323 = arith.constant 9 : index
    %c2_324 = arith.constant 2 : index
    %366 = memref.load %arg10[%c9_323, %c2_324] : memref<20x4xf32, #tpu.memory_space<smem>>
    %c0_325 = arith.constant 0 : index
    %c9_326 = arith.constant 9 : index
    %c0_327 = arith.constant 0 : index
    %c0_328 = arith.constant 0 : index
    %367 = vector.load %arg2[%c0_325, %c9_326, %c0_327, %c0_328] : memref<1x20x8x8xf32, #tpu.memory_space<vmem>>, vector<1x1x8x8xf32>
    %368 = vector.shape_cast %367 : vector<1x1x8x8xf32> to vector<8x8xf32>
    %369 = vector.broadcast %366 : f32 to vector<8x8xf32>
    %370 = arith.mulf %369, %368 : vector<8x8xf32>
    %371 = arith.addf %365, %370 : vector<8x8xf32>
    %c10_329 = arith.constant 10 : index
    %c2_330 = arith.constant 2 : index
    %372 = memref.load %arg10[%c10_329, %c2_330] : memref<20x4xf32, #tpu.memory_space<smem>>
    %c0_331 = arith.constant 0 : index
    %c10_332 = arith.constant 10 : index
    %c0_333 = arith.constant 0 : index
    %c0_334 = arith.constant 0 : index
    %373 = vector.load %arg2[%c0_331, %c10_332, %c0_333, %c0_334] : memref<1x20x8x8xf32, #tpu.memory_space<vmem>>, vector<1x1x8x8xf32>
    %374 = vector.shape_cast %373 : vector<1x1x8x8xf32> to vector<8x8xf32>
    %375 = vector.broadcast %372 : f32 to vector<8x8xf32>
    %376 = arith.mulf %375, %374 : vector<8x8xf32>
    %377 = arith.addf %371, %376 : vector<8x8xf32>
    %c11_335 = arith.constant 11 : index
    %c2_336 = arith.constant 2 : index
    %378 = memref.load %arg10[%c11_335, %c2_336] : memref<20x4xf32, #tpu.memory_space<smem>>
    %c0_337 = arith.constant 0 : index
    %c11_338 = arith.constant 11 : index
    %c0_339 = arith.constant 0 : index
    %c0_340 = arith.constant 0 : index
    %379 = vector.load %arg2[%c0_337, %c11_338, %c0_339, %c0_340] : memref<1x20x8x8xf32, #tpu.memory_space<vmem>>, vector<1x1x8x8xf32>
    %380 = vector.shape_cast %379 : vector<1x1x8x8xf32> to vector<8x8xf32>
    %381 = vector.broadcast %378 : f32 to vector<8x8xf32>
    %382 = arith.mulf %381, %380 : vector<8x8xf32>
    %383 = arith.addf %377, %382 : vector<8x8xf32>
    %c12_341 = arith.constant 12 : index
    %c2_342 = arith.constant 2 : index
    %384 = memref.load %arg10[%c12_341, %c2_342] : memref<20x4xf32, #tpu.memory_space<smem>>
    %c0_343 = arith.constant 0 : index
    %c12_344 = arith.constant 12 : index
    %c0_345 = arith.constant 0 : index
    %c0_346 = arith.constant 0 : index
    %385 = vector.load %arg2[%c0_343, %c12_344, %c0_345, %c0_346] : memref<1x20x8x8xf32, #tpu.memory_space<vmem>>, vector<1x1x8x8xf32>
    %386 = vector.shape_cast %385 : vector<1x1x8x8xf32> to vector<8x8xf32>
    %387 = vector.broadcast %384 : f32 to vector<8x8xf32>
    %388 = arith.mulf %387, %386 : vector<8x8xf32>
    %389 = arith.addf %383, %388 : vector<8x8xf32>
    %c13_347 = arith.constant 13 : index
    %c2_348 = arith.constant 2 : index
    %390 = memref.load %arg10[%c13_347, %c2_348] : memref<20x4xf32, #tpu.memory_space<smem>>
    %c0_349 = arith.constant 0 : index
    %c13_350 = arith.constant 13 : index
    %c0_351 = arith.constant 0 : index
    %c0_352 = arith.constant 0 : index
    %391 = vector.load %arg2[%c0_349, %c13_350, %c0_351, %c0_352] : memref<1x20x8x8xf32, #tpu.memory_space<vmem>>, vector<1x1x8x8xf32>
    %392 = vector.shape_cast %391 : vector<1x1x8x8xf32> to vector<8x8xf32>
    %393 = vector.broadcast %390 : f32 to vector<8x8xf32>
    %394 = arith.mulf %393, %392 : vector<8x8xf32>
    %395 = arith.addf %389, %394 : vector<8x8xf32>
    %c14_353 = arith.constant 14 : index
    %c2_354 = arith.constant 2 : index
    %396 = memref.load %arg10[%c14_353, %c2_354] : memref<20x4xf32, #tpu.memory_space<smem>>
    %c0_355 = arith.constant 0 : index
    %c14_356 = arith.constant 14 : index
    %c0_357 = arith.constant 0 : index
    %c0_358 = arith.constant 0 : index
    %397 = vector.load %arg2[%c0_355, %c14_356, %c0_357, %c0_358] : memref<1x20x8x8xf32, #tpu.memory_space<vmem>>, vector<1x1x8x8xf32>
    %398 = vector.shape_cast %397 : vector<1x1x8x8xf32> to vector<8x8xf32>
    %399 = vector.broadcast %396 : f32 to vector<8x8xf32>
    %400 = arith.mulf %399, %398 : vector<8x8xf32>
    %401 = arith.addf %395, %400 : vector<8x8xf32>
    %c15_359 = arith.constant 15 : index
    %c2_360 = arith.constant 2 : index
    %402 = memref.load %arg10[%c15_359, %c2_360] : memref<20x4xf32, #tpu.memory_space<smem>>
    %c0_361 = arith.constant 0 : index
    %c15_362 = arith.constant 15 : index
    %c0_363 = arith.constant 0 : index
    %c0_364 = arith.constant 0 : index
    %403 = vector.load %arg2[%c0_361, %c15_362, %c0_363, %c0_364] : memref<1x20x8x8xf32, #tpu.memory_space<vmem>>, vector<1x1x8x8xf32>
    %404 = vector.shape_cast %403 : vector<1x1x8x8xf32> to vector<8x8xf32>
    %405 = vector.broadcast %402 : f32 to vector<8x8xf32>
    %406 = arith.mulf %405, %404 : vector<8x8xf32>
    %407 = arith.addf %401, %406 : vector<8x8xf32>
    %c16_365 = arith.constant 16 : index
    %c2_366 = arith.constant 2 : index
    %408 = memref.load %arg10[%c16_365, %c2_366] : memref<20x4xf32, #tpu.memory_space<smem>>
    %c0_367 = arith.constant 0 : index
    %c16_368 = arith.constant 16 : index
    %c0_369 = arith.constant 0 : index
    %c0_370 = arith.constant 0 : index
    %409 = vector.load %arg2[%c0_367, %c16_368, %c0_369, %c0_370] : memref<1x20x8x8xf32, #tpu.memory_space<vmem>>, vector<1x1x8x8xf32>
    %410 = vector.shape_cast %409 : vector<1x1x8x8xf32> to vector<8x8xf32>
    %411 = vector.broadcast %408 : f32 to vector<8x8xf32>
    %412 = arith.mulf %411, %410 : vector<8x8xf32>
    %413 = arith.addf %407, %412 : vector<8x8xf32>
    %c17_371 = arith.constant 17 : index
    %c2_372 = arith.constant 2 : index
    %414 = memref.load %arg10[%c17_371, %c2_372] : memref<20x4xf32, #tpu.memory_space<smem>>
    %c0_373 = arith.constant 0 : index
    %c17_374 = arith.constant 17 : index
    %c0_375 = arith.constant 0 : index
    %c0_376 = arith.constant 0 : index
    %415 = vector.load %arg2[%c0_373, %c17_374, %c0_375, %c0_376] : memref<1x20x8x8xf32, #tpu.memory_space<vmem>>, vector<1x1x8x8xf32>
    %416 = vector.shape_cast %415 : vector<1x1x8x8xf32> to vector<8x8xf32>
    %417 = vector.broadcast %414 : f32 to vector<8x8xf32>
    %418 = arith.mulf %417, %416 : vector<8x8xf32>
    %419 = arith.addf %413, %418 : vector<8x8xf32>
    %c18_377 = arith.constant 18 : index
    %c2_378 = arith.constant 2 : index
    %420 = memref.load %arg10[%c18_377, %c2_378] : memref<20x4xf32, #tpu.memory_space<smem>>
    %c0_379 = arith.constant 0 : index
    %c18_380 = arith.constant 18 : index
    %c0_381 = arith.constant 0 : index
    %c0_382 = arith.constant 0 : index
    %421 = vector.load %arg2[%c0_379, %c18_380, %c0_381, %c0_382] : memref<1x20x8x8xf32, #tpu.memory_space<vmem>>, vector<1x1x8x8xf32>
    %422 = vector.shape_cast %421 : vector<1x1x8x8xf32> to vector<8x8xf32>
    %423 = vector.broadcast %420 : f32 to vector<8x8xf32>
    %424 = arith.mulf %423, %422 : vector<8x8xf32>
    %425 = arith.addf %419, %424 : vector<8x8xf32>
    %c19_383 = arith.constant 19 : index
    %c2_384 = arith.constant 2 : index
    %426 = memref.load %arg10[%c19_383, %c2_384] : memref<20x4xf32, #tpu.memory_space<smem>>
    %c0_385 = arith.constant 0 : index
    %c19_386 = arith.constant 19 : index
    %c0_387 = arith.constant 0 : index
    %c0_388 = arith.constant 0 : index
    %427 = vector.load %arg2[%c0_385, %c19_386, %c0_387, %c0_388] : memref<1x20x8x8xf32, #tpu.memory_space<vmem>>, vector<1x1x8x8xf32>
    %428 = vector.shape_cast %427 : vector<1x1x8x8xf32> to vector<8x8xf32>
    %429 = vector.broadcast %426 : f32 to vector<8x8xf32>
    %430 = arith.mulf %429, %428 : vector<8x8xf32>
    %431 = arith.addf %425, %430 : vector<8x8xf32>
    %432 = vector.extract_strided_slice %50 {offsets = [2, 0], sizes = [1, 8], strides = [1, 1]} : vector<4x8xf32> to vector<1x8xf32>
    %433 = vector.broadcast %432 : vector<1x8xf32> to vector<8x8xf32>
    %434 = arith.addf %431, %433 : vector<8x8xf32>
    %435 = vector.extract_strided_slice %48 {offsets = [0, 2], sizes = [8, 1], strides = [1, 1]} : vector<8x4xf32> to vector<8x1xf32>
    %436 = vector.broadcast %435 : vector<8x1xf32> to vector<8x8xf32>
    %437 = arith.addf %434, %436 : vector<8x8xf32>
    %c0_389 = arith.constant 0 : index
    %c2_390 = arith.constant 2 : index
    %438 = memref.load %arg13[%c0_389, %c2_390] : memref<1x4xf32, #tpu.memory_space<smem>>
    %439 = vector.broadcast %438 : f32 to vector<8x8xf32>
    %440 = arith.addf %437, %439 : vector<8x8xf32>
    %c0_391 = arith.constant 0 : index
    %c2_392 = arith.constant 2 : index
    %c0_393 = arith.constant 0 : index
    %c0_394 = arith.constant 0 : index
    %441 = vector.load %arg15[%c0_391, %c2_392, %c0_393, %c0_394] : memref<1x4x8x8xf32, #tpu.memory_space<vmem>>, vector<1x1x8x8xf32>
    %442 = vector.shape_cast %441 : vector<1x1x8x8xf32> to vector<8x8xf32>
    %443 = vector.shape_cast %440 : vector<8x8xf32> to vector<1x1x8x8xf32>
    tpu.vector_store %arg15[%c0_391, %c2_392, %c0_393, %c0_394], %443 {strides = array<i32>} : memref<1x4x8x8xf32, #tpu.memory_space<vmem>>, vector<1x1x8x8xf32>,
    %c0_395 = arith.constant 0 : index
    %c3_396 = arith.constant 3 : index
    %444 = memref.load %arg10[%c0_395, %c3_396] : memref<20x4xf32, #tpu.memory_space<smem>>
    %c0_397 = arith.constant 0 : index
    %c0_398 = arith.constant 0 : index
    %c0_399 = arith.constant 0 : index
    %c0_400 = arith.constant 0 : index
    %445 = vector.load %arg2[%c0_397, %c0_398, %c0_399, %c0_400] : memref<1x20x8x8xf32, #tpu.memory_space<vmem>>, vector<1x1x8x8xf32>
    %446 = vector.shape_cast %445 : vector<1x1x8x8xf32> to vector<8x8xf32>
    %447 = vector.broadcast %444 : f32 to vector<8x8xf32>
    %448 = arith.mulf %447, %446 : vector<8x8xf32>
    %c1_401 = arith.constant 1 : index
    %c3_402 = arith.constant 3 : index
    %449 = memref.load %arg10[%c1_401, %c3_402] : memref<20x4xf32, #tpu.memory_space<smem>>
    %c0_403 = arith.constant 0 : index
    %c1_404 = arith.constant 1 : index
    %c0_405 = arith.constant 0 : index
    %c0_406 = arith.constant 0 : index
    %450 = vector.load %arg2[%c0_403, %c1_404, %c0_405, %c0_406] : memref<1x20x8x8xf32, #tpu.memory_space<vmem>>, vector<1x1x8x8xf32>
    %451 = vector.shape_cast %450 : vector<1x1x8x8xf32> to vector<8x8xf32>
    %452 = vector.broadcast %449 : f32 to vector<8x8xf32>
    %453 = arith.mulf %452, %451 : vector<8x8xf32>
    %454 = arith.addf %448, %453 : vector<8x8xf32>
    %c2_407 = arith.constant 2 : index
    %c3_408 = arith.constant 3 : index
    %455 = memref.load %arg10[%c2_407, %c3_408] : memref<20x4xf32, #tpu.memory_space<smem>>
    %c0_409 = arith.constant 0 : index
    %c2_410 = arith.constant 2 : index
    %c0_411 = arith.constant 0 : index
    %c0_412 = arith.constant 0 : index
    %456 = vector.load %arg2[%c0_409, %c2_410, %c0_411, %c0_412] : memref<1x20x8x8xf32, #tpu.memory_space<vmem>>, vector<1x1x8x8xf32>
    %457 = vector.shape_cast %456 : vector<1x1x8x8xf32> to vector<8x8xf32>
    %458 = vector.broadcast %455 : f32 to vector<8x8xf32>
    %459 = arith.mulf %458, %457 : vector<8x8xf32>
    %460 = arith.addf %454, %459 : vector<8x8xf32>
    %c3_413 = arith.constant 3 : index
    %c3_414 = arith.constant 3 : index
    %461 = memref.load %arg10[%c3_413, %c3_414] : memref<20x4xf32, #tpu.memory_space<smem>>
    %c0_415 = arith.constant 0 : index
    %c3_416 = arith.constant 3 : index
    %c0_417 = arith.constant 0 : index
    %c0_418 = arith.constant 0 : index
    %462 = vector.load %arg2[%c0_415, %c3_416, %c0_417, %c0_418] : memref<1x20x8x8xf32, #tpu.memory_space<vmem>>, vector<1x1x8x8xf32>
    %463 = vector.shape_cast %462 : vector<1x1x8x8xf32> to vector<8x8xf32>
    %464 = vector.broadcast %461 : f32 to vector<8x8xf32>
    %465 = arith.mulf %464, %463 : vector<8x8xf32>
    %466 = arith.addf %460, %465 : vector<8x8xf32>
    %c4_419 = arith.constant 4 : index
    %c3_420 = arith.constant 3 : index
    %467 = memref.load %arg10[%c4_419, %c3_420] : memref<20x4xf32, #tpu.memory_space<smem>>
    %c0_421 = arith.constant 0 : index
    %c4_422 = arith.constant 4 : index
    %c0_423 = arith.constant 0 : index
    %c0_424 = arith.constant 0 : index
    %468 = vector.load %arg2[%c0_421, %c4_422, %c0_423, %c0_424] : memref<1x20x8x8xf32, #tpu.memory_space<vmem>>, vector<1x1x8x8xf32>
    %469 = vector.shape_cast %468 : vector<1x1x8x8xf32> to vector<8x8xf32>
    %470 = vector.broadcast %467 : f32 to vector<8x8xf32>
    %471 = arith.mulf %470, %469 : vector<8x8xf32>
    %472 = arith.addf %466, %471 : vector<8x8xf32>
    %c5_425 = arith.constant 5 : index
    %c3_426 = arith.constant 3 : index
    %473 = memref.load %arg10[%c5_425, %c3_426] : memref<20x4xf32, #tpu.memory_space<smem>>
    %c0_427 = arith.constant 0 : index
    %c5_428 = arith.constant 5 : index
    %c0_429 = arith.constant 0 : index
    %c0_430 = arith.constant 0 : index
    %474 = vector.load %arg2[%c0_427, %c5_428, %c0_429, %c0_430] : memref<1x20x8x8xf32, #tpu.memory_space<vmem>>, vector<1x1x8x8xf32>
    %475 = vector.shape_cast %474 : vector<1x1x8x8xf32> to vector<8x8xf32>
    %476 = vector.broadcast %473 : f32 to vector<8x8xf32>
    %477 = arith.mulf %476, %475 : vector<8x8xf32>
    %478 = arith.addf %472, %477 : vector<8x8xf32>
    %c6_431 = arith.constant 6 : index
    %c3_432 = arith.constant 3 : index
    %479 = memref.load %arg10[%c6_431, %c3_432] : memref<20x4xf32, #tpu.memory_space<smem>>
    %c0_433 = arith.constant 0 : index
    %c6_434 = arith.constant 6 : index
    %c0_435 = arith.constant 0 : index
    %c0_436 = arith.constant 0 : index
    %480 = vector.load %arg2[%c0_433, %c6_434, %c0_435, %c0_436] : memref<1x20x8x8xf32, #tpu.memory_space<vmem>>, vector<1x1x8x8xf32>
    %481 = vector.shape_cast %480 : vector<1x1x8x8xf32> to vector<8x8xf32>
    %482 = vector.broadcast %479 : f32 to vector<8x8xf32>
    %483 = arith.mulf %482, %481 : vector<8x8xf32>
    %484 = arith.addf %478, %483 : vector<8x8xf32>
    %c7_437 = arith.constant 7 : index
    %c3_438 = arith.constant 3 : index
    %485 = memref.load %arg10[%c7_437, %c3_438] : memref<20x4xf32, #tpu.memory_space<smem>>
    %c0_439 = arith.constant 0 : index
    %c7_440 = arith.constant 7 : index
    %c0_441 = arith.constant 0 : index
    %c0_442 = arith.constant 0 : index
    %486 = vector.load %arg2[%c0_439, %c7_440, %c0_441, %c0_442] : memref<1x20x8x8xf32, #tpu.memory_space<vmem>>, vector<1x1x8x8xf32>
    %487 = vector.shape_cast %486 : vector<1x1x8x8xf32> to vector<8x8xf32>
    %488 = vector.broadcast %485 : f32 to vector<8x8xf32>
    %489 = arith.mulf %488, %487 : vector<8x8xf32>
    %490 = arith.addf %484, %489 : vector<8x8xf32>
    %c8_443 = arith.constant 8 : index
    %c3_444 = arith.constant 3 : index
    %491 = memref.load %arg10[%c8_443, %c3_444] : memref<20x4xf32, #tpu.memory_space<smem>>
    %c0_445 = arith.constant 0 : index
    %c8_446 = arith.constant 8 : index
    %c0_447 = arith.constant 0 : index
    %c0_448 = arith.constant 0 : index
    %492 = vector.load %arg2[%c0_445, %c8_446, %c0_447, %c0_448] : memref<1x20x8x8xf32, #tpu.memory_space<vmem>>, vector<1x1x8x8xf32>
    %493 = vector.shape_cast %492 : vector<1x1x8x8xf32> to vector<8x8xf32>
    %494 = vector.broadcast %491 : f32 to vector<8x8xf32>
    %495 = arith.mulf %494, %493 : vector<8x8xf32>
    %496 = arith.addf %490, %495 : vector<8x8xf32>
    %c9_449 = arith.constant 9 : index
    %c3_450 = arith.constant 3 : index
    %497 = memref.load %arg10[%c9_449, %c3_450] : memref<20x4xf32, #tpu.memory_space<smem>>
    %c0_451 = arith.constant 0 : index
    %c9_452 = arith.constant 9 : index
    %c0_453 = arith.constant 0 : index
    %c0_454 = arith.constant 0 : index
    %498 = vector.load %arg2[%c0_451, %c9_452, %c0_453, %c0_454] : memref<1x20x8x8xf32, #tpu.memory_space<vmem>>, vector<1x1x8x8xf32>
    %499 = vector.shape_cast %498 : vector<1x1x8x8xf32> to vector<8x8xf32>
    %500 = vector.broadcast %497 : f32 to vector<8x8xf32>
    %501 = arith.mulf %500, %499 : vector<8x8xf32>
    %502 = arith.addf %496, %501 : vector<8x8xf32>
    %c10_455 = arith.constant 10 : index
    %c3_456 = arith.constant 3 : index
    %503 = memref.load %arg10[%c10_455, %c3_456] : memref<20x4xf32, #tpu.memory_space<smem>>
    %c0_457 = arith.constant 0 : index
    %c10_458 = arith.constant 10 : index
    %c0_459 = arith.constant 0 : index
    %c0_460 = arith.constant 0 : index
    %504 = vector.load %arg2[%c0_457, %c10_458, %c0_459, %c0_460] : memref<1x20x8x8xf32, #tpu.memory_space<vmem>>, vector<1x1x8x8xf32>
    %505 = vector.shape_cast %504 : vector<1x1x8x8xf32> to vector<8x8xf32>
    %506 = vector.broadcast %503 : f32 to vector<8x8xf32>
    %507 = arith.mulf %506, %505 : vector<8x8xf32>
    %508 = arith.addf %502, %507 : vector<8x8xf32>
    %c11_461 = arith.constant 11 : index
    %c3_462 = arith.constant 3 : index
    %509 = memref.load %arg10[%c11_461, %c3_462] : memref<20x4xf32, #tpu.memory_space<smem>>
    %c0_463 = arith.constant 0 : index
    %c11_464 = arith.constant 11 : index
    %c0_465 = arith.constant 0 : index
    %c0_466 = arith.constant 0 : index
    %510 = vector.load %arg2[%c0_463, %c11_464, %c0_465, %c0_466] : memref<1x20x8x8xf32, #tpu.memory_space<vmem>>, vector<1x1x8x8xf32>
    %511 = vector.shape_cast %510 : vector<1x1x8x8xf32> to vector<8x8xf32>
    %512 = vector.broadcast %509 : f32 to vector<8x8xf32>
    %513 = arith.mulf %512, %511 : vector<8x8xf32>
    %514 = arith.addf %508, %513 : vector<8x8xf32>
    %c12_467 = arith.constant 12 : index
    %c3_468 = arith.constant 3 : index
    %515 = memref.load %arg10[%c12_467, %c3_468] : memref<20x4xf32, #tpu.memory_space<smem>>
    %c0_469 = arith.constant 0 : index
    %c12_470 = arith.constant 12 : index
    %c0_471 = arith.constant 0 : index
    %c0_472 = arith.constant 0 : index
    %516 = vector.load %arg2[%c0_469, %c12_470, %c0_471, %c0_472] : memref<1x20x8x8xf32, #tpu.memory_space<vmem>>, vector<1x1x8x8xf32>
    %517 = vector.shape_cast %516 : vector<1x1x8x8xf32> to vector<8x8xf32>
    %518 = vector.broadcast %515 : f32 to vector<8x8xf32>
    %519 = arith.mulf %518, %517 : vector<8x8xf32>
    %520 = arith.addf %514, %519 : vector<8x8xf32>
    %c13_473 = arith.constant 13 : index
    %c3_474 = arith.constant 3 : index
    %521 = memref.load %arg10[%c13_473, %c3_474] : memref<20x4xf32, #tpu.memory_space<smem>>
    %c0_475 = arith.constant 0 : index
    %c13_476 = arith.constant 13 : index
    %c0_477 = arith.constant 0 : index
    %c0_478 = arith.constant 0 : index
    %522 = vector.load %arg2[%c0_475, %c13_476, %c0_477, %c0_478] : memref<1x20x8x8xf32, #tpu.memory_space<vmem>>, vector<1x1x8x8xf32>
    %523 = vector.shape_cast %522 : vector<1x1x8x8xf32> to vector<8x8xf32>
    %524 = vector.broadcast %521 : f32 to vector<8x8xf32>
    %525 = arith.mulf %524, %523 : vector<8x8xf32>
    %526 = arith.addf %520, %525 : vector<8x8xf32>
    %c14_479 = arith.constant 14 : index
    %c3_480 = arith.constant 3 : index
    %527 = memref.load %arg10[%c14_479, %c3_480] : memref<20x4xf32, #tpu.memory_space<smem>>
    %c0_481 = arith.constant 0 : index
    %c14_482 = arith.constant 14 : index
    %c0_483 = arith.constant 0 : index
    %c0_484 = arith.constant 0 : index
    %528 = vector.load %arg2[%c0_481, %c14_482, %c0_483, %c0_484] : memref<1x20x8x8xf32, #tpu.memory_space<vmem>>, vector<1x1x8x8xf32>
    %529 = vector.shape_cast %528 : vector<1x1x8x8xf32> to vector<8x8xf32>
    %530 = vector.broadcast %527 : f32 to vector<8x8xf32>
    %531 = arith.mulf %530, %529 : vector<8x8xf32>
    %532 = arith.addf %526, %531 : vector<8x8xf32>
    %c15_485 = arith.constant 15 : index
    %c3_486 = arith.constant 3 : index
    %533 = memref.load %arg10[%c15_485, %c3_486] : memref<20x4xf32, #tpu.memory_space<smem>>
    %c0_487 = arith.constant 0 : index
    %c15_488 = arith.constant 15 : index
    %c0_489 = arith.constant 0 : index
    %c0_490 = arith.constant 0 : index
    %534 = vector.load %arg2[%c0_487, %c15_488, %c0_489, %c0_490] : memref<1x20x8x8xf32, #tpu.memory_space<vmem>>, vector<1x1x8x8xf32>
    %535 = vector.shape_cast %534 : vector<1x1x8x8xf32> to vector<8x8xf32>
    %536 = vector.broadcast %533 : f32 to vector<8x8xf32>
    %537 = arith.mulf %536, %535 : vector<8x8xf32>
    %538 = arith.addf %532, %537 : vector<8x8xf32>
    %c16_491 = arith.constant 16 : index
    %c3_492 = arith.constant 3 : index
    %539 = memref.load %arg10[%c16_491, %c3_492] : memref<20x4xf32, #tpu.memory_space<smem>>
    %c0_493 = arith.constant 0 : index
    %c16_494 = arith.constant 16 : index
    %c0_495 = arith.constant 0 : index
    %c0_496 = arith.constant 0 : index
    %540 = vector.load %arg2[%c0_493, %c16_494, %c0_495, %c0_496] : memref<1x20x8x8xf32, #tpu.memory_space<vmem>>, vector<1x1x8x8xf32>
    %541 = vector.shape_cast %540 : vector<1x1x8x8xf32> to vector<8x8xf32>
    %542 = vector.broadcast %539 : f32 to vector<8x8xf32>
    %543 = arith.mulf %542, %541 : vector<8x8xf32>
    %544 = arith.addf %538, %543 : vector<8x8xf32>
    %c17_497 = arith.constant 17 : index
    %c3_498 = arith.constant 3 : index
    %545 = memref.load %arg10[%c17_497, %c3_498] : memref<20x4xf32, #tpu.memory_space<smem>>
    %c0_499 = arith.constant 0 : index
    %c17_500 = arith.constant 17 : index
    %c0_501 = arith.constant 0 : index
    %c0_502 = arith.constant 0 : index
    %546 = vector.load %arg2[%c0_499, %c17_500, %c0_501, %c0_502] : memref<1x20x8x8xf32, #tpu.memory_space<vmem>>, vector<1x1x8x8xf32>
    %547 = vector.shape_cast %546 : vector<1x1x8x8xf32> to vector<8x8xf32>
    %548 = vector.broadcast %545 : f32 to vector<8x8xf32>
    %549 = arith.mulf %548, %547 : vector<8x8xf32>
    %550 = arith.addf %544, %549 : vector<8x8xf32>
    %c18_503 = arith.constant 18 : index
    %c3_504 = arith.constant 3 : index
    %551 = memref.load %arg10[%c18_503, %c3_504] : memref<20x4xf32, #tpu.memory_space<smem>>
    %c0_505 = arith.constant 0 : index
    %c18_506 = arith.constant 18 : index
    %c0_507 = arith.constant 0 : index
    %c0_508 = arith.constant 0 : index
    %552 = vector.load %arg2[%c0_505, %c18_506, %c0_507, %c0_508] : memref<1x20x8x8xf32, #tpu.memory_space<vmem>>, vector<1x1x8x8xf32>
    %553 = vector.shape_cast %552 : vector<1x1x8x8xf32> to vector<8x8xf32>
    %554 = vector.broadcast %551 : f32 to vector<8x8xf32>
    %555 = arith.mulf %554, %553 : vector<8x8xf32>
    %556 = arith.addf %550, %555 : vector<8x8xf32>
    %c19_509 = arith.constant 19 : index
    %c3_510 = arith.constant 3 : index
    %557 = memref.load %arg10[%c19_509, %c3_510] : memref<20x4xf32, #tpu.memory_space<smem>>
    %c0_511 = arith.constant 0 : index
    %c19_512 = arith.constant 19 : index
    %c0_513 = arith.constant 0 : index
    %c0_514 = arith.constant 0 : index
    %558 = vector.load %arg2[%c0_511, %c19_512, %c0_513, %c0_514] : memref<1x20x8x8xf32, #tpu.memory_space<vmem>>, vector<1x1x8x8xf32>
    %559 = vector.shape_cast %558 : vector<1x1x8x8xf32> to vector<8x8xf32>
    %560 = vector.broadcast %557 : f32 to vector<8x8xf32>
    %561 = arith.mulf %560, %559 : vector<8x8xf32>
    %562 = arith.addf %556, %561 : vector<8x8xf32>
    %563 = vector.extract_strided_slice %50 {offsets = [3, 0], sizes = [1, 8], strides = [1, 1]} : vector<4x8xf32> to vector<1x8xf32>
    %564 = vector.broadcast %563 : vector<1x8xf32> to vector<8x8xf32>
    %565 = arith.addf %562, %564 : vector<8x8xf32>
    %566 = vector.extract_strided_slice %48 {offsets = [0, 3], sizes = [8, 1], strides = [1, 1]} : vector<8x4xf32> to vector<8x1xf32>
    %567 = vector.broadcast %566 : vector<8x1xf32> to vector<8x8xf32>
    %568 = arith.addf %565, %567 : vector<8x8xf32>
    %c0_515 = arith.constant 0 : index
    %c3_516 = arith.constant 3 : index
    %569 = memref.load %arg13[%c0_515, %c3_516] : memref<1x4xf32, #tpu.memory_space<smem>>
    %570 = vector.broadcast %569 : f32 to vector<8x8xf32>
    %571 = arith.addf %568, %570 : vector<8x8xf32>
    %c0_517 = arith.constant 0 : index
    %c3_518 = arith.constant 3 : index
    %c0_519 = arith.constant 0 : index
    %c0_520 = arith.constant 0 : index
    %572 = vector.load %arg15[%c0_517, %c3_518, %c0_519, %c0_520] : memref<1x4x8x8xf32, #tpu.memory_space<vmem>>, vector<1x1x8x8xf32>
    %573 = vector.shape_cast %572 : vector<1x1x8x8xf32> to vector<8x8xf32>
    %574 = vector.shape_cast %571 : vector<8x8xf32> to vector<1x1x8x8xf32>
    tpu.vector_store %arg15[%c0_517, %c3_518, %c0_519, %c0_520], %574 {strides = array<i32>} : memref<1x4x8x8xf32, #tpu.memory_space<vmem>>, vector<1x1x8x8xf32>,
    return
  }
  func.func @transform_0(%arg0: i32) -> (i32, i32, i32) {
    %c0_i32 = arith.constant 0 : i32
    %c0_i32_0 = arith.constant 0 : i32
    %c0_i32_1 = arith.constant 0 : i32
    return %arg0, %c0_i32, %c0_i32_0 : i32, i32, i32
  }
  func.func @transform_1(%arg0: i32) -> (i32, i32, i32, i32) {
    %c0_i32 = arith.constant 0 : i32
    %c0_i32_0 = arith.constant 0 : i32
    %c0_i32_1 = arith.constant 0 : i32
    %c0_i32_2 = arith.constant 0 : i32
    return %arg0, %c0_i32, %c0_i32_0, %c0_i32_1 : i32, i32, i32, i32
  }
  func.func @transform_2(%arg0: i32) -> (i32, i32, i32) {
    %c0_i32 = arith.constant 0 : i32
    %c0_i32_0 = arith.constant 0 : i32
    %c0_i32_1 = arith.constant 0 : i32
    return %arg0, %c0_i32, %c0_i32_0 : i32, i32, i32
  }
  func.func @transform_3(%arg0: i32) -> (i32, i32, i32) {
    %c0_i32 = arith.constant 0 : i32
    %c0_i32_0 = arith.constant 0 : i32
    %c0_i32_1 = arith.constant 0 : i32
    return %arg0, %c0_i32, %c0_i32_0 : i32, i32, i32
  }
  func.func @transform_4(%arg0: i32) -> (i32, i32, i32) {
    %c0_i32 = arith.constant 0 : i32
    %c0_i32_0 = arith.constant 0 : i32
    %c0_i32_1 = arith.constant 0 : i32
    return %arg0, %c0_i32, %c0_i32_0 : i32, i32, i32
  }
  func.func @transform_5(%arg0: i32) -> (i32, i32) {
    %c0_i32 = arith.constant 0 : i32
    %c0_i32_0 = arith.constant 0 : i32
    %c0_i32_1 = arith.constant 0 : i32
    return %c0_i32, %c0_i32_0 : i32, i32
  }
  func.func @transform_6(%arg0: i32) -> (i32, i32) {
    %c0_i32 = arith.constant 0 : i32
    %c0_i32_0 = arith.constant 0 : i32
    %c0_i32_1 = arith.constant 0 : i32
    return %c0_i32, %c0_i32_0 : i32, i32
  }
  func.func @transform_7(%arg0: i32) -> (i32, i32) {
    %c0_i32 = arith.constant 0 : i32
    %c0_i32_0 = arith.constant 0 : i32
    %c0_i32_1 = arith.constant 0 : i32
    return %c0_i32, %c0_i32_0 : i32, i32
  }
  func.func @transform_8(%arg0: i32) -> (i32, i32) {
    %c0_i32 = arith.constant 0 : i32
    %c0_i32_0 = arith.constant 0 : i32
    %c0_i32_1 = arith.constant 0 : i32
    return %c0_i32, %c0_i32_0 : i32, i32
  }
  func.func @transform_9(%arg0: i32) -> (i32, i32) {
    %c0_i32 = arith.constant 0 : i32
    %c0_i32_0 = arith.constant 0 : i32
    %c0_i32_1 = arith.constant 0 : i32
    return %c0_i32, %c0_i32_0 : i32, i32
  }
  func.func @transform_10(%arg0: i32) -> (i32, i32) {
    %c0_i32 = arith.constant 0 : i32
    %c0_i32_0 = arith.constant 0 : i32
    %c0_i32_1 = arith.constant 0 : i32
    return %c0_i32, %c0_i32_0 : i32, i32
  }
  func.func @transform_11(%arg0: i32) -> (i32, i32) {
    %c0_i32 = arith.constant 0 : i32
    %c0_i32_0 = arith.constant 0 : i32
    %c0_i32_1 = arith.constant 0 : i32
    return %c0_i32, %c0_i32_0 : i32, i32
  }
  func.func @transform_12(%arg0: i32) -> (i32, i32) {
    %c0_i32 = arith.constant 0 : i32
    %c0_i32_0 = arith.constant 0 : i32
    %c0_i32_1 = arith.constant 0 : i32
    return %c0_i32, %c0_i32_0 : i32, i32
  }
  func.func @transform_13(%arg0: i32) -> (i32, i32, i32) {
    %c0_i32 = arith.constant 0 : i32
    %c0_i32_0 = arith.constant 0 : i32
    %c0_i32_1 = arith.constant 0 : i32
    return %arg0, %c0_i32, %c0_i32_0 : i32, i32, i32
  }
  func.func @transform_14(%arg0: i32) -> (i32, i32, i32, i32) {
    %c0_i32 = arith.constant 0 : i32
    %c0_i32_0 = arith.constant 0 : i32
    %c0_i32_1 = arith.constant 0 : i32
    %c0_i32_2 = arith.constant 0 : i32
    return %arg0, %c0_i32, %c0_i32_0, %c0_i32_1 : i32, i32, i32, i32
  }
}

</mosaic_0001>

<llo_original>
// kernel: emcgcn_forward.3
$region0: #{emcgcn_forward.3}
  #allocation0 [shape = 'u32[]', space=smem, size = 0x4, offset = 0x4, fixed_abs, tag = 'smem constant byte address 0x4 - core index']
  #allocation1 [shape = 'u32[144,128]{1,0:T(1,128)}', space=vmem, size = 0x12000, scoped, tag = 'internal scratch']
  %s0 = inlined_call_operand.vmem [shape: f32[16,64], index: 0, kind: input, shape index: {}]
  %s1 = inlined_call_operand.vmem [shape: f32[64,96], index: 1, kind: input, shape index: {}]
  %s2 = inlined_call_operand.vmem [shape: f32[1,96], index: 2, kind: input, shape index: {}]
  %s3 = inlined_call_operand.vmem [shape: f32[16,96], index: 3, kind: output, shape index: {}]
  %s4 = sld [smem:[#allocation0]]
  $region22: #{emcgcn_forward.3} parent=0
    _
  %s6 = ssub.s32 1, %s4
  %s7 = scalar_select 0, %s6, %s4
  // Predicated region
  $region2: #{emcgcn_forward.3} parent=0 // pred_check
    _
  $region3: #{emcgcn_forward.3} parent=0 // pred_check_branch
    %9 = sbr.rel (0) target = $region5
  $region4: #{emcgcn_forward.3} parent=0 // pred_region
    _
  $region5: #{emcgcn_forward.3} parent=0 // pred_fallthru
    _
  // Predicated region
  $region6: #{emcgcn_forward.3} parent=0 // pred_check
    _
  $region7: #{emcgcn_forward.3} parent=0 // pred_check_branch
    %11 = sbr.rel (0) target = $region9
  $region8: #{emcgcn_forward.3} parent=0 // pred_region
    _
  $region9: #{emcgcn_forward.3} parent=0 // pred_fallthru
    _
  // Predicated region
  $region10: #{emcgcn_forward.3} parent=0 // pred_check
    _
  $region11: #{emcgcn_forward.3} parent=0 // pred_check_branch
    %13 = sbr.rel (0) target = $region13
  $region12: #{emcgcn_forward.3} parent=0 // pred_region
    _
  $region13: #{emcgcn_forward.3} parent=0 // pred_fallthru
    _
  %v14 = vld [vmem:[%s0] sm:$0xff]
  %v15 = vld [vmem:[%s0 + $0x8] sm:$0xff]
  %v16 = vld [vmem:[%s1] sm:$0xff]
  %v17 = vld [vmem:[%s1 + $0x8] sm:$0xff]
  %v18 = vld [vmem:[%s1 + $0x10] sm:$0xff]
  %v19 = vld [vmem:[%s1 + $0x18] sm:$0xff]
  %v20 = vld [vmem:[%s1 + $0x20] sm:$0xff]
  %v21 = vld [vmem:[%s1 + $0x28] sm:$0xff]
  %v22 = vld [vmem:[%s1 + $0x30] sm:$0xff]
  %v23 = vld [vmem:[%s1 + $0x38] sm:$0xff]
  %v24 = vld [vmem:[%s2] sm:$0x1]
  %v26 = vlaneseq
  %v27 = vshrl.u32 %v26, 7
  %v28 = vsub.s32 0, %v27
  %v29 = vrot.slane %v24, %v28
  %vm31 = vcmask 523264
  %v33 = vsel %vm31, %v14, 0
  %v36 = vsel %vm31, %v15, 0
  %38 = vmatprep.subr.mxu0 0.0
  %39 = vmatpush1.msra.mxu0 %v16
  %40 = vmatprep.subr.mxu0 0.0
  %41 = vmatpush1.msra.mxu0 %v17
  %42 = vmatprep.subr.mxu0 0.0
  %43 = vmatpush1.msra.mxu0 %v18
  %44 = vmatprep.subr.mxu0 0.0
  %45 = vmatpush1.msra.mxu0 %v19
  %46 = vmatprep.subr.mxu0 0.0
  %47 = vmatpush1.msra.mxu0 %v20
  %48 = vmatprep.subr.mxu0 0.0
  %49 = vmatpush1.msra.mxu0 %v21
  %50 = vmatprep.subr.mxu0 0.0
  %51 = vmatpush1.msra.mxu0 %v22
  %52 = vmatprep.subr.mxu0 0.0
  %53 = vmatpush1.msra.mxu0 %v23
  %54 = vmatprep.subr.mxu0 0.0
  %55 = vmatpush1.msra.mxu0 0.0
  %56 = vmatprep.subr.mxu0 0.0
  %57 = vmatpush1.msra.mxu0 0.0
  %58 = vmatprep.subr.mxu0 0.0
  %59 = vmatpush1.msra.mxu0 0.0
  %60 = vmatprep.subr.mxu0 0.0
  %61 = vmatpush1.msra.mxu0 0.0
  %62 = vmatprep.subr.mxu0 0.0
  %63 = vmatpush1.msra.mxu0 0.0
  %64 = vmatprep.subr.mxu0 0.0
  %65 = vmatpush1.msra.mxu0 0.0
  %66 = vmatprep.subr.mxu0 0.0
  %67 = vmatpush1.msra.mxu0 0.0
  %68 = vmatprep.subr.mxu0 0.0
  %69 = vmatpush1.msra.mxu0 0.0
  %70 = vmatprep.subr.mxu0 0.0
  %71 = vmatpush1.msra.mxu0 0.0
  %72 = vmatprep.subr.mxu0 0.0
  %73 = vmatpush1.msra.mxu0 0.0
  %74 = vmatprep.subr.mxu0 0.0
  %75 = vmatpush1.msra.mxu0 0.0
  %76 = vmatprep.subr.mxu0 0.0
  %77 = vmatpush1.msra.mxu0 0.0
  %78 = vmatprep.subr.mxu0 0.0
  %79 = vmatpush1.msra.mxu0 0.0
  %80 = vmatprep.subr.mxu0 0.0
  %81 = vmatpush1.msra.mxu0 0.0
  %82 = vmatprep.subr.mxu0 0.0
  %83 = vmatpush1.msra.mxu0 0.0
  %84 = vmatprep.subr.mxu0 0.0
  %85 = vmatpush1.msra.mxu0 0.0
  %86 = vmatprep.subr.mxu0 0.0
  %87 = vmatpush1.msra.mxu0 0.0
  %88 = vmatprep.subr.mxu0 0.0
  %89 = vmatpush1.msra.mxu0 0.0
  %90 = vmatprep.subr.mxu0 0.0
  %91 = vmatpush1.msra.mxu0 0.0
  %92 = vmatprep.subr.mxu0 0.0
  %93 = vmatpush1.msra.mxu0 0.0
  %94 = vmatprep.subr.mxu0 0.0
  %95 = vmatpush1.msra.mxu0 0.0
  %96 = vmatprep.subr.mxu0 0.0
  %97 = vmatpush1.msra.mxu0 0.0
  %98 = vmatprep.subr.mxu0 0.0
  %99 = vmatpush1.msra.mxu0 0.0
  %100 = vmatprep.subr.mxu0 0.0
  %101 = vmatpush1.msra.mxu0 0.0
  %102 = vmatprep.mubr.f32.mxu0 0.0
  %103 = vmatmul.mubr.f32.gmra.mrb[0].mxu0 %v33
  %v104 = vpop.f32.mrb[0].mxu0
  %v105 = vadd.f32 %v29, %v104
  %v106 = vpop.f32.mrb[0].mxu0
  %107 = vmatprep.mubr.f32.mxu0 0.0
  %108 = vmatmul.mubr.f32.gmra.mrb[0].mxu0 %v36
  %v109 = vpop.f32.mrb[0].mxu0
  %v110 = vadd.f32 %v29, %v109
  %v111 = vpop.f32.mrb[0].mxu0
  %112 = vdwg.mxu0
  %v113 = vmax.f32 %v105, 0.0
  %v114 = vmax.f32 %v110, 0.0
  %vm115 = vcmask 785408
  %116 = vst.msk [vmem:[%s3] sm:$0xff] %vm115, %v113
  %117 = vst.msk [vmem:[%s3 + $0x8] sm:$0xff] %vm115, %v114
  // Predicated region
  $region14: #{emcgcn_forward.3} parent=0 // pred_check
    _
  $region15: #{emcgcn_forward.3} parent=0 // pred_check_branch
    %119 = sbr.rel (0) target = $region17
  $region16: #{emcgcn_forward.3} parent=0 // pred_region
    _
  $region17: #{emcgcn_forward.3} parent=0 // pred_fallthru
    _
  // Predicated region
  $region18: #{emcgcn_forward.3} parent=0 // pred_check
    _
  $region19: #{emcgcn_forward.3} parent=0 // pred_check_branch
    %121 = sbr.rel (0) target = $region21
  $region20: #{emcgcn_forward.3} parent=0 // pred_region
    _
  $region21: #{emcgcn_forward.3} parent=0 // pred_fallthru
    _

// kernel: emcgcn_forward.4
$region0: #{emcgcn_forward.4}
  #allocation0 [shape = 'u32[]', space=smem, size = 0x4, offset = 0x4, fixed_abs, tag = 'smem constant byte address 0x4 - core index']
  #allocation1 [shape = 'u32[144,128]{1,0:T(1,128)}', space=vmem, size = 0x12000, scoped, tag = 'internal scratch']
  %s0 = inlined_call_operand.vmem [shape: f32[2,8,40], index: 0, kind: input, shape index: {}]
  %s1 = inlined_call_operand.vmem [shape: f32[2,8,40], index: 1, kind: input, shape index: {}]
  %s2 = inlined_call_operand.vmem [shape: f32[4,40,40], index: 2, kind: input, shape index: {}]
  %s3 = inlined_call_operand.vmem [shape: f32[2,4,8,8], index: 3, kind: output, shape index: {0}]
  %s4 = inlined_call_operand.vmem [shape: f32[2,8,8], index: 4, kind: output, shape index: {1}]
  %5 = xla_tuple %s3, %s4
  %s6 = sld [smem:[#allocation0]]
  $region53: #{emcgcn_forward.4} parent=0
    _
  %s8 = ssub.s32 1, %s6
  %s9 = scalar_select 0, %s8, %s6
  loop: start=0, step=1, limit=4
  $region2: #{emcgcn_forward.4} parent=0 // loop_pre_header
    _
  $region3: #{emcgcn_forward.4} parent=0 // loop_header
    %s11 = sphi 0, %s15
    %p12 = scmp.ge.s32.totalorder %s11, 4
    %s21 = sphi 0, %s23
    %s24 = sphi 0, %s21
    %s25 = sphi 0, %s24
    %s41 = sphi 0, %s25
    %s47 = sphi 0, %s49
    %s50 = sphi 0, %s47
    %s51 = sphi 0, %s50
    %s67 = sphi 0, %s51
    %s71 = sphi 0, %s71
    %s73 = sphi 0, %s71
    %s74 = sphi 0, %s73
    %s88 = sphi 0, %s74
    %s94 = sphi 0, %s96
    %s97 = sphi 0, %s94
    %s98 = sphi 0, %s97
    %s114 = sphi 0, %s98
    %s120 = sphi 0, %s122
    %s123 = sphi 0, %s120
    %s124 = sphi 0, %s123
    %s140 = sphi 0, %s124
  $region4: #{emcgcn_forward.4} parent=0 // loop_header_branch
    %14 = sbr.rel (%p12) target = $region8
  $region5: #{emcgcn_forward.4} parent=0 // loop_body
    %s16 = ssub.s32 %s11, 1
    %s17 = ssub.s32 %s11, 2
    %s18 = sadd.s32 %s11, 1
    %s19 = ssub.s32 %s11, %s18
    %p20 = scmp.eq.s32.totalorder %s19, 0
    %s22 = sadd.s32 %s21, 1
    %s23 = scalar_select %p20, %s21, %s22
    %p26 = pneg %p20
    %p27 = scmp.eq.s32.totalorder %s11, 1
    %p28 = por %p26, %p27
    %p29 = scmp.ne.s32.totalorder %s21, %s24
    %p30 = scmp.eq.s32.totalorder %s11, 0
    %p31 = por %p29, %p30
    %p32 = scmp.ne.s32.totalorder %s21, %s24
    %p33 = scmp.eq.s32.totalorder %s16, 1
    %p34 = por %p32, %p33
    %p35 = scmp.ne.s32.totalorder %s24, %s25
    %p36 = scmp.eq.s32.totalorder %s16, 0
    %p37 = por %p35, %p36
    %p38 = scmp.ne.s32.totalorder %s24, %s25
    %p39 = scmp.eq.s32.totalorder %s17, 1
    %p40 = por %p38, %p39
    %p42 = scmp.ne.s32.totalorder %s25, %s41
    %p43 = scmp.eq.s32.totalorder %s17, 0
    %p44 = por %p42, %p43
    %s45 = ssub.s32 %s11, %s18
    %p46 = scmp.eq.s32.totalorder %s45, 0
    %s48 = sadd.s32 %s47, 1
    %s49 = scalar_select %p46, %s47, %s48
    %p52 = pneg %p46
    %p53 = scmp.eq.s32.totalorder %s11, 1
    %p54 = por %p52, %p53
    %p55 = scmp.ne.s32.totalorder %s47, %s50
    %p56 = scmp.eq.s32.totalorder %s11, 0
    %p57 = por %p55, %p56
    %p58 = scmp.ne.s32.totalorder %s47, %s50
    %p59 = scmp.eq.s32.totalorder %s16, 1
    %p60 = por %p58, %p59
    %p61 = scmp.ne.s32.totalorder %s50, %s51
    %p62 = scmp.eq.s32.totalorder %s16, 0
    %p63 = por %p61, %p62
    %p64 = scmp.ne.s32.totalorder %s50, %s51
    %p65 = scmp.eq.s32.totalorder %s17, 1
    %p66 = por %p64, %p65
    %p68 = scmp.ne.s32.totalorder %s51, %s67
    %p69 = scmp.eq.s32.totalorder %s17, 0
    %p70 = por %p68, %p69
    %s72 = sadd.s32 %s71, 1
    %p75 = scmp.eq.s32.totalorder %s11, 1
    %p76 = scmp.ne.s32.totalorder %s71, %s73
    %p77 = scmp.eq.s32.totalorder %s11, 0
    %p78 = por %p76, %p77
    %p79 = scmp.ne.s32.totalorder %s71, %s73
    %p80 = scmp.eq.s32.totalorder %s16, 1
    %p81 = por %p79, %p80
    %p82 = scmp.ne.s32.totalorder %s73, %s74
    %p83 = scmp.eq.s32.totalorder %s16, 0
    %p84 = por %p82, %p83
    %p85 = scmp.ne.s32.totalorder %s73, %s74
    %p86 = scmp.eq.s32.totalorder %s17, 1
    %p87 = por %p85, %p86
    %p89 = scmp.ne.s32.totalorder %s74, %s88
    %p90 = scmp.eq.s32.totalorder %s17, 0
    %p91 = por %p89, %p90
    %s92 = ssub.s32 %s11, %s18
    %p93 = scmp.eq.s32.totalorder %s92, 0
    %s95 = sadd.s32 %s94, 1
    %s96 = scalar_select %p93, %s94, %s95
    %p99 = pneg %p93
    %p100 = scmp.eq.s32.totalorder %s11, 1
    %p101 = por %p99, %p100
    %p102 = scmp.ne.s32.totalorder %s94, %s97
    %p103 = scmp.eq.s32.totalorder %s11, 0
    %p104 = por %p102, %p103
    %p105 = scmp.ne.s32.totalorder %s94, %s97
    %p106 = scmp.eq.s32.totalorder %s16, 1
    %p107 = por %p105, %p106
    %p108 = scmp.ne.s32.totalorder %s97, %s98
    %p109 = scmp.eq.s32.totalorder %s16, 0
    %p110 = por %p108, %p109
    %p111 = scmp.ne.s32.totalorder %s97, %s98
    %p112 = scmp.eq.s32.totalorder %s17, 1
    %p113 = por %p111, %p112
    %p115 = scmp.ne.s32.totalorder %s98, %s114
    %p116 = scmp.eq.s32.totalorder %s17, 0
    %p117 = por %p115, %p116
    %s118 = ssub.s32 %s11, %s18
    %p119 = scmp.eq.s32.totalorder %s118, 0
    %s121 = sadd.s32 %s120, 1
    %s122 = scalar_select %p119, %s120, %s121
    %p125 = pneg %p119
    %p126 = scmp.eq.s32.totalorder %s11, 1
    %p127 = por %p125, %p126
    %p128 = scmp.ne.s32.totalorder %s120, %s123
    %p129 = scmp.eq.s32.totalorder %s11, 0
    %p130 = por %p128, %p129
    %p131 = scmp.ne.s32.totalorder %s120, %s123
    %p132 = scmp.eq.s32.totalorder %s16, 1
    %p133 = por %p131, %p132
    %p134 = scmp.ne.s32.totalorder %s123, %s124
    %p135 = scmp.eq.s32.totalorder %s16, 0
    %p136 = por %p134, %p135
    %p137 = scmp.ne.s32.totalorder %s123, %s124
    %p138 = scmp.eq.s32.totalorder %s17, 1
    %p139 = por %p137, %p138
    %p141 = scmp.ne.s32.totalorder %s124, %s140
    %p142 = scmp.eq.s32.totalorder %s17, 0
    %p143 = por %p141, %p142
    %p144 = scmp.le.s32.totalorder 1, %s11
    %p145 = scmp.lt.s32.totalorder %s11, 3
    %p146 = pnand %p144, %p145
    %p147 = pneg %p146
    // Predicated region
    $region9: #{emcgcn_forward.4} parent=5 // pred_check
      _
    $region10: #{emcgcn_forward.4} parent=5 // pred_check_branch
      %149 = sbr.rel (%p146) target = $region12
    $region11: #{emcgcn_forward.4} parent=5 // pred_region
      %s150 = ssub.s32 %s11, 1
      // Predicated region
      $region13: #{emcgcn_forward.4} parent=11 // pred_check
        %p151 = pneg %p84
      $region14: #{emcgcn_forward.4} parent=11 // pred_check_branch
        %153 = sbr.rel (%p151) target = $region16
      $region15: #{emcgcn_forward.4} parent=11 // pred_region
        _
      $region16: #{emcgcn_forward.4} parent=11 // pred_fallthru
        _
    $region12: #{emcgcn_forward.4} parent=5 // pred_fallthru
      _
    %p154 = scmp.lt.s32.totalorder %s11, 2
    // Predicated region
    $region17: #{emcgcn_forward.4} parent=5 // pred_check
      %p155 = pneg %p154
    $region18: #{emcgcn_forward.4} parent=5 // pred_check_branch
      %157 = sbr.rel (%p155) target = $region20
    $region19: #{emcgcn_forward.4} parent=5 // pred_region
      // Predicated region
      $region21: #{emcgcn_forward.4} parent=19 // pred_check
        %p158 = pneg %p31
      $region22: #{emcgcn_forward.4} parent=19 // pred_check_branch
        %160 = sbr.rel (%p158) target = $region24
      $region23: #{emcgcn_forward.4} parent=19 // pred_region
        %p161 = scmp.lt.s32.totalorder %s11, 1
        %s162 = scalar_select %p161, %s11, 1
        %s163 = smul.addr %s162, 8
        %s164 = scalar_lea.vmem %s0, %s163
      $region24: #{emcgcn_forward.4} parent=19 // pred_fallthru
        _
      // Predicated region
      $region25: #{emcgcn_forward.4} parent=19 // pred_check
        %p165 = pneg %p57
      $region26: #{emcgcn_forward.4} parent=19 // pred_check_branch
        %167 = sbr.rel (%p165) target = $region28
      $region27: #{emcgcn_forward.4} parent=19 // pred_region
        %p168 = scmp.lt.s32.totalorder %s11, 1
        %s169 = scalar_select %p168, %s11, 1
        %s170 = smul.addr %s169, 8
        %s171 = scalar_lea.vmem %s1, %s170
      $region28: #{emcgcn_forward.4} parent=19 // pred_fallthru
        _
    $region20: #{emcgcn_forward.4} parent=5 // pred_fallthru
      _
    %p172 = scmp.le.s32.totalorder 1, %s11
    %p173 = scmp.lt.s32.totalorder %s11, 3
    %p174 = pnand %p172, %p173
    %p175 = pneg %p174
    // Predicated region
    $region29: #{emcgcn_forward.4} parent=5 // pred_check
      _
    $region30: #{emcgcn_forward.4} parent=5 // pred_check_branch
      %177 = sbr.rel (%p174) target = $region32
    $region31: #{emcgcn_forward.4} parent=5 // pred_region
      %s178 = ssub.s32 %s11, 1
      %p179 = scmp.lt.s32.totalorder %s16, 1
      %s180 = scalar_select %p179, %s16, 1
      %s181 = smul.addr %s180, 8
      %s182 = scalar_lea.vmem %s0, %s181
      %p183 = pneg %p37
      %p184 = pneg %p34
      %p185 = scmp.lt.s32.totalorder %s16, 1
      %s186 = scalar_select %p185, %s16, 1
      %s187 = smul.addr %s186, 8
      %s188 = scalar_lea.vmem %s1, %s187
      %p189 = pneg %p63
      %p190 = pneg %p60
      %p191 = pneg %p84
      %p192 = pneg %p81
      %p193 = pneg %p110
      %p194 = pneg %p107
      %p195 = scmp.lt.s32.totalorder %s16, 1
      %s196 = scalar_select %p195, %s16, 1
      %s197 = smul.addr %s196, 4
      %s198 = smul.addr %s197, 8
      %s199 = scalar_lea.vmem %s3, %s198
      %p200 = pneg %p136
      %p201 = pneg %p133
      %p202 = scmp.lt.s32.totalorder %s16, 1
      %s203 = scalar_select %p202, %s16, 1
      %s204 = smul.addr %s203, 8
      %s205 = scalar_lea.vmem %s4, %s204
      %p206 = scmp.lt.s32.totalorder %s16, 1
      %s207 = scalar_select %p206, %s16, 1
      %s208 = smul.addr %s207, 8
      %s209 = scalar_lea.vmem %s0, %s208
      %p210 = scmp.lt.s32.totalorder %s16, 1
      %s211 = scalar_select %p210, %s16, 1
      %s212 = smul.addr %s211, 8
      %s213 = scalar_lea.vmem %s1, %s212
      %p214 = scmp.lt.s32.totalorder %s16, 1
      %s215 = scalar_select %p214, %s16, 1
      %s216 = smul.addr %s215, 4
      %s217 = smul.addr %s216, 8
      %s218 = scalar_lea.vmem %s3, %s217
      %p219 = scmp.lt.s32.totalorder %s16, 1
      %s220 = scalar_select %p219, %s16, 1
      %s221 = smul.addr %s220, 8
      %s222 = scalar_lea.vmem %s4, %s221
      %v223 = vld [vmem:[%s209] sm:$0xff]
      %v224 = vld [vmem:[%s213] sm:$0xff]
      %v225 = vld [vmem:[%s2] sm:$0xff]
      %v226 = vld [vmem:[%s2 + $0x8] sm:$0xff]
      %v227 = vld [vmem:[%s2 + $0x10] sm:$0xff]
      %v228 = vld [vmem:[%s2 + $0x18] sm:$0xff]
      %v229 = vld [vmem:[%s2 + $0x20] sm:$0xff]
      %vm230 = vcmask 326656
      %v232 = vsel %vm230, %v223, 0
      %234 = vmatprep.subr.mxu0 0.0
      %235 = vmatpush1.msra.mxu0 %v225
      %236 = vmatprep.subr.mxu0 0.0
      %237 = vmatpush1.msra.mxu0 %v226
      %238 = vmatprep.subr.mxu0 0.0
      %239 = vmatpush1.msra.mxu0 %v227
      %240 = vmatprep.subr.mxu0 0.0
      %241 = vmatpush1.msra.mxu0 %v228
      %242 = vmatprep.subr.mxu0 0.0
      %243 = vmatpush1.msra.mxu0 %v229
      %244 = vmatprep.subr.mxu0 0.0
      %245 = vmatpush1.msra.mxu0 0.0
      %246 = vmatprep.subr.mxu0 0.0
      %247 = vmatpush1.msra.mxu0 0.0
      %248 = vmatprep.subr.mxu0 0.0
      %249 = vmatpush1.msra.mxu0 0.0
      %250 = vmatprep.subr.mxu0 0.0
      %251 = vmatpush1.msra.mxu0 0.0
      %252 = vmatprep.subr.mxu0 0.0
      %253 = vmatpush1.msra.mxu0 0.0
      %254 = vmatprep.subr.mxu0 0.0
      %255 = vmatpush1.msra.mxu0 0.0
      %256 = vmatprep.subr.mxu0 0.0
      %257 = vmatpush1.msra.mxu0 0.0
      %258 = vmatprep.subr.mxu0 0.0
      %259 = vmatpush1.msra.mxu0 0.0
      %260 = vmatprep.subr.mxu0 0.0
      %261 = vmatpush1.msra.mxu0 0.0
      %262 = vmatprep.subr.mxu0 0.0
      %263 = vmatpush1.msra.mxu0 0.0
      %264 = vmatprep.subr.mxu0 0.0
      %265 = vmatpush1.msra.mxu0 0.0
      %266 = vmatprep.subr.mxu0 0.0
      %267 = vmatpush1.msra.mxu0 0.0
      %268 = vmatprep.subr.mxu0 0.0
      %269 = vmatpush1.msra.mxu0 0.0
      %270 = vmatprep.subr.mxu0 0.0
      %271 = vmatpush1.msra.mxu0 0.0
      %272 = vmatprep.subr.mxu0 0.0
      %273 = vmatpush1.msra.mxu0 0.0
      %274 = vmatprep.subr.mxu0 0.0
      %275 = vmatpush1.msra.mxu0 0.0
      %276 = vmatprep.subr.mxu0 0.0
      %277 = vmatpush1.msra.mxu0 0.0
      %278 = vmatprep.subr.mxu0 0.0
      %279 = vmatpush1.msra.mxu0 0.0
      %280 = vmatprep.subr.mxu0 0.0
      %281 = vmatpush1.msra.mxu0 0.0
      %282 = vmatprep.subr.mxu0 0.0
      %283 = vmatpush1.msra.mxu0 0.0
      %284 = vmatprep.subr.mxu0 0.0
      %285 = vmatpush1.msra.mxu0 0.0
      %286 = vmatprep.subr.mxu0 0.0
      %287 = vmatpush1.msra.mxu0 0.0
      %288 = vmatprep.subr.mxu0 0.0
      %289 = vmatpush1.msra.mxu0 0.0
      %290 = vmatprep.subr.mxu0 0.0
      %291 = vmatpush1.msra.mxu0 0.0
      %292 = vmatprep.subr.mxu0 0.0
      %293 = vmatpush1.msra.mxu0 0.0
      %294 = vmatprep.subr.mxu0 0.0
      %295 = vmatpush1.msra.mxu0 0.0
      %296 = vmatprep.subr.mxu0 0.0
      %297 = vmatpush1.msra.mxu0 0.0
      %298 = vmatprep.mubr.f32.mxu0 0.0
      %299 = vmatmul.mubr.f32.gmra.mrb[0].mxu0 %v232
      %v300 = vpop.f32.mrb[0].mxu0
      %v301 = vadd.f32 0.0, %v300
      %v302 = vpop.f32.mrb[0].mxu0
      %303 = vdwg.mxu0
      %v305 = vsel %vm230, %v224, 0
      %v308 = vsel %vm230, %v301, 0
      %310 = vmatprep.subr.mxu0 0.0
      %311 = vmatpush1.xpose.msra.mxu0 %v308
      %312 = vmatprep.subr.mxu0 0.0
      %313 = vmatpush1.xpose.msra.mxu0 0.0
      %314 = vmatprep.subr.mxu0 0.0
      %315 = vmatpush1.xpose.msra.mxu0 0.0
      %316 = vmatprep.subr.mxu0 0.0
      %317 = vmatpush1.xpose.msra.mxu0 0.0
      %318 = vmatprep.subr.mxu0 0.0
      %319 = vmatpush1.xpose.msra.mxu0 0.0
      %320 = vmatprep.subr.mxu0 0.0
      %321 = vmatpush1.xpose.msra.mxu0 0.0
      %322 = vmatprep.subr.mxu0 0.0
      %323 = vmatpush1.xpose.msra.mxu0 0.0
      %324 = vmatprep.subr.mxu0 0.0
      %325 = vmatpush1.xpose.msra.mxu0 0.0
      %326 = vmatprep.subr.mxu0 0.0
      %327 = vmatpush1.xpose.msra.mxu0 0.0
      %328 = vmatprep.subr.mxu0 0.0
      %329 = vmatpush1.xpose.msra.mxu0 0.0
      %330 = vmatprep.subr.mxu0 0.0
      %331 = vmatpush1.xpose.msra.mxu0 0.0
      %332 = vmatprep.subr.mxu0 0.0
      %333 = vmatpush1.xpose.msra.mxu0 0.0
      %334 = vmatprep.subr.mxu0 0.0
      %335 = vmatpush1.xpose.msra.mxu0 0.0
      %336 = vmatprep.subr.mxu0 0.0
      %337 = vmatpush1.xpose.msra.mxu0 0.0
      %338 = vmatprep.subr.mxu0 0.0
      %339 = vmatpush1.xpose.msra.mxu0 0.0
      %340 = vmatprep.subr.mxu0 0.0
      %341 = vmatpush1.xpose.msra.mxu0 0.0
      %342 = vmatprep.subr.mxu0 0.0
      %343 = vmatpush1.xpose.msra.mxu0 0.0
      %344 = vmatprep.subr.mxu0 0.0
      %345 = vmatpush1.xpose.msra.mxu0 0.0
      %346 = vmatprep.subr.mxu0 0.0
      %347 = vmatpush1.xpose.msra.mxu0 0.0
      %348 = vmatprep.subr.mxu0 0.0
      %349 = vmatpush1.xpose.msra.mxu0 0.0
      %350 = vmatprep.subr.mxu0 0.0
      %351 = vmatpush1.xpose.msra.mxu0 0.0
      %352 = vmatprep.subr.mxu0 0.0
      %353 = vmatpush1.xpose.msra.mxu0 0.0
      %354 = vmatprep.subr.mxu0 0.0
      %355 = vmatpush1.xpose.msra.mxu0 0.0
      %356 = vmatprep.subr.mxu0 0.0
      %357 = vmatpush1.xpose.msra.mxu0 0.0
      %358 = vmatprep.subr.mxu0 0.0
      %359 = vmatpush1.xpose.msra.mxu0 0.0
      %360 = vmatprep.subr.mxu0 0.0
      %361 = vmatpush1.xpose.msra.mxu0 0.0
      %362 = vmatprep.subr.mxu0 0.0
      %363 = vmatpush1.xpose.msra.mxu0 0.0
      %364 = vmatprep.subr.mxu0 0.0
      %365 = vmatpush1.xpose.msra.mxu0 0.0
      %366 = vmatprep.subr.mxu0 0.0
      %367 = vmatpush1.xpose.msra.mxu0 0.0
      %368 = vmatprep.subr.mxu0 0.0
      %369 = vmatpush1.xpose.msra.mxu0 0.0
      %370 = vmatprep.subr.mxu0 0.0
      %371 = vmatpush1.xpose.msra.mxu0 0.0
      %372 = vmatprep.subr.mxu0 0.0
      %373 = vmatpush1.xpose.msra.mxu0 0.0
      %374 = vmatprep.mubr.f32.mxu0 0.0
      %375 = vmatmul.mubr.f32.gmra.mrb[0].mxu0 %v305
      %v376 = vpop.f32.mrb[0].mxu0
      %v377 = vadd.f32 0.0, %v376
      %v378 = vpop.f32.mrb[0].mxu0
      %379 = vdwg.mxu0
      %vm380 = vcmask 64512
      %381 = vst.msk [vmem:[%s218] sm:$0xff] %vm380, %v377
      %s382 = scalar_lea.vmem %s2, 40
      %v383 = vld [vmem:[%s382] sm:$0xff]
      %v384 = vld [vmem:[%s382 + $0x8] sm:$0xff]
      %v385 = vld [vmem:[%s382 + $0x10] sm:$0xff]
      %v386 = vld [vmem:[%s382 + $0x18] sm:$0xff]
      %v387 = vld [vmem:[%s382 + $0x20] sm:$0xff]
      %388 = vmatprep.subr.mxu0 0.0
      %389 = vmatpush1.msra.mxu0 %v383
      %390 = vmatprep.subr.mxu0 0.0
      %391 = vmatpush1.msra.mxu0 %v384
      %392 = vmatprep.subr.mxu0 0.0
      %393 = vmatpush1.msra.mxu0 %v385
      %394 = vmatprep.subr.mxu0 0.0
      %395 = vmatpush1.msra.mxu0 %v386
      %396 = vmatprep.subr.mxu0 0.0
      %397 = vmatpush1.msra.mxu0 %v387
      %398 = vmatprep.subr.mxu0 0.0
      %399 = vmatpush1.msra.mxu0 0.0
      %400 = vmatprep.subr.mxu0 0.0
      %401 = vmatpush1.msra.mxu0 0.0
      %402 = vmatprep.subr.mxu0 0.0
      %403 = vmatpush1.msra.mxu0 0.0
      %404 = vmatprep.subr.mxu0 0.0
      %405 = vmatpush1.msra.mxu0 0.0
      %406 = vmatprep.subr.mxu0 0.0
      %407 = vmatpush1.msra.mxu0 0.0
      %408 = vmatprep.subr.mxu0 0.0
      %409 = vmatpush1.msra.mxu0 0.0
      %410 = vmatprep.subr.mxu0 0.0
      %411 = vmatpush1.msra.mxu0 0.0
      %412 = vmatprep.subr.mxu0 0.0
      %413 = vmatpush1.msra.mxu0 0.0
      %414 = vmatprep.subr.mxu0 0.0
      %415 = vmatpush1.msra.mxu0 0.0
      %416 = vmatprep.subr.mxu0 0.0
      %417 = vmatpush1.msra.mxu0 0.0
      %418 = vmatprep.subr.mxu0 0.0
      %419 = vmatpush1.msra.mxu0 0.0
      %420 = vmatprep.subr.mxu0 0.0
      %421 = vmatpush1.msra.mxu0 0.0
      %422 = vmatprep.subr.mxu0 0.0
      %423 = vmatpush1.msra.mxu0 0.0
      %424 = vmatprep.subr.mxu0 0.0
      %425 = vmatpush1.msra.mxu0 0.0
      %426 = vmatprep.subr.mxu0 0.0
      %427 = vmatpush1.msra.mxu0 0.0
      %428 = vmatprep.subr.mxu0 0.0
      %429 = vmatpush1.msra.mxu0 0.0
      %430 = vmatprep.subr.mxu0 0.0
      %431 = vmatpush1.msra.mxu0 0.0
      %432 = vmatprep.subr.mxu0 0.0
      %433 = vmatpush1.msra.mxu0 0.0
      %434 = vmatprep.subr.mxu0 0.0
      %435 = vmatpush1.msra.mxu0 0.0
      %436 = vmatprep.subr.mxu0 0.0
      %437 = vmatpush1.msra.mxu0 0.0
      %438 = vmatprep.subr.mxu0 0.0
      %439 = vmatpush1.msra.mxu0 0.0
      %440 = vmatprep.subr.mxu0 0.0
      %441 = vmatpush1.msra.mxu0 0.0
      %442 = vmatprep.subr.mxu0 0.0
      %443 = vmatpush1.msra.mxu0 0.0
      %444 = vmatprep.subr.mxu0 0.0
      %445 = vmatpush1.msra.mxu0 0.0
      %446 = vmatprep.subr.mxu0 0.0
      %447 = vmatpush1.msra.mxu0 0.0
      %448 = vmatprep.subr.mxu0 0.0
      %449 = vmatpush1.msra.mxu0 0.0
      %450 = vmatprep.subr.mxu0 0.0
      %451 = vmatpush1.msra.mxu0 0.0
      %452 = vmatprep.mubr.f32.mxu0 0.0
      %453 = vmatmul.mubr.f32.gmra.mrb[0].mxu0 %v232
      %v454 = vpop.f32.mrb[0].mxu0
      %v455 = vadd.f32 0.0, %v454
      %v456 = vpop.f32.mrb[0].mxu0
      %457 = vdwg.mxu0
      %v459 = vsel %vm230, %v455, 0
      %461 = vmatprep.subr.mxu0 0.0
      %462 = vmatpush1.xpose.msra.mxu0 %v459
      %463 = vmatprep.subr.mxu0 0.0
      %464 = vmatpush1.xpose.msra.mxu0 0.0
      %465 = vmatprep.subr.mxu0 0.0
      %466 = vmatpush1.xpose.msra.mxu0 0.0
      %467 = vmatprep.subr.mxu0 0.0
      %468 = vmatpush1.xpose.msra.mxu0 0.0
      %469 = vmatprep.subr.mxu0 0.0
      %470 = vmatpush1.xpose.msra.mxu0 0.0
      %471 = vmatprep.subr.mxu0 0.0
      %472 = vmatpush1.xpose.msra.mxu0 0.0
      %473 = vmatprep.subr.mxu0 0.0
      %474 = vmatpush1.xpose.msra.mxu0 0.0
      %475 = vmatprep.subr.mxu0 0.0
      %476 = vmatpush1.xpose.msra.mxu0 0.0
      %477 = vmatprep.subr.mxu0 0.0
      %478 = vmatpush1.xpose.msra.mxu0 0.0
      %479 = vmatprep.subr.mxu0 0.0
      %480 = vmatpush1.xpose.msra.mxu0 0.0
      %481 = vmatprep.subr.mxu0 0.0
      %482 = vmatpush1.xpose.msra.mxu0 0.0
      %483 = vmatprep.subr.mxu0 0.0
      %484 = vmatpush1.xpose.msra.mxu0 0.0
      %485 = vmatprep.subr.mxu0 0.0
      %486 = vmatpush1.xpose.msra.mxu0 0.0
      %487 = vmatprep.subr.mxu0 0.0
      %488 = vmatpush1.xpose.msra.mxu0 0.0
      %489 = vmatprep.subr.mxu0 0.0
      %490 = vmatpush1.xpose.msra.mxu0 0.0
      %491 = vmatprep.subr.mxu0 0.0
      %492 = vmatpush1.xpose.msra.mxu0 0.0
      %493 = vmatprep.subr.mxu0 0.0
      %494 = vmatpush1.xpose.msra.mxu0 0.0
      %495 = vmatprep.subr.mxu0 0.0
      %496 = vmatpush1.xpose.msra.mxu0 0.0
      %497 = vmatprep.subr.mxu0 0.0
      %498 = vmatpush1.xpose.msra.mxu0 0.0
      %499 = vmatprep.subr.mxu0 0.0
      %500 = vmatpush1.xpose.msra.mxu0 0.0
      %501 = vmatprep.subr.mxu0 0.0
      %502 = vmatpush1.xpose.msra.mxu0 0.0
      %503 = vmatprep.subr.mxu0 0.0
      %504 = vmatpush1.xpose.msra.mxu0 0.0
      %505 = vmatprep.subr.mxu0 0.0
      %506 = vmatpush1.xpose.msra.mxu0 0.0
      %507 = vmatprep.subr.mxu0 0.0
      %508 = vmatpush1.xpose.msra.mxu0 0.0
      %509 = vmatprep.subr.mxu0 0.0
      %510 = vmatpush1.xpose.msra.mxu0 0.0
      %511 = vmatprep.subr.mxu0 0.0
      %512 = vmatpush1.xpose.msra.mxu0 0.0
      %513 = vmatprep.subr.mxu0 0.0
      %514 = vmatpush1.xpose.msra.mxu0 0.0
      %515 = vmatprep.subr.mxu0 0.0
      %516 = vmatpush1.xpose.msra.mxu0 0.0
      %517 = vmatprep.subr.mxu0 0.0
      %518 = vmatpush1.xpose.msra.mxu0 0.0
      %519 = vmatprep.subr.mxu0 0.0
      %520 = vmatpush1.xpose.msra.mxu0 0.0
      %521 = vmatprep.subr.mxu0 0.0
      %522 = vmatpush1.xpose.msra.mxu0 0.0
      %523 = vmatprep.subr.mxu0 0.0
      %524 = vmatpush1.xpose.msra.mxu0 0.0
      %525 = vmatprep.mubr.f32.mxu0 0.0
      %526 = vmatmul.mubr.f32.gmra.mrb[0].mxu0 %v305
      %v527 = vpop.f32.mrb[0].mxu0
      %v528 = vadd.f32 0.0, %v527
      %v529 = vpop.f32.mrb[0].mxu0
      %530 = vdwg.mxu0
      %s531 = scalar_lea.vmem %s218, 8
      %532 = vst.msk [vmem:[%s531] sm:$0xff] %vm380, %v528
      %s533 = scalar_lea.vmem %s2, 80
      %v534 = vld [vmem:[%s533] sm:$0xff]
      %v535 = vld [vmem:[%s533 + $0x8] sm:$0xff]
      %v536 = vld [vmem:[%s533 + $0x10] sm:$0xff]
      %v537 = vld [vmem:[%s533 + $0x18] sm:$0xff]
      %v538 = vld [vmem:[%s533 + $0x20] sm:$0xff]
      %539 = vmatprep.subr.mxu0 0.0
      %540 = vmatpush1.msra.mxu0 %v534
      %541 = vmatprep.subr.mxu0 0.0
      %542 = vmatpush1.msra.mxu0 %v535
      %543 = vmatprep.subr.mxu0 0.0
      %544 = vmatpush1.msra.mxu0 %v536
      %545 = vmatprep.subr.mxu0 0.0
      %546 = vmatpush1.msra.mxu0 %v537
      %547 = vmatprep.subr.mxu0 0.0
      %548 = vmatpush1.msra.mxu0 %v538
      %549 = vmatprep.subr.mxu0 0.0
      %550 = vmatpush1.msra.mxu0 0.0
      %551 = vmatprep.subr.mxu0 0.0
      %552 = vmatpush1.msra.mxu0 0.0
      %553 = vmatprep.subr.mxu0 0.0
      %554 = vmatpush1.msra.mxu0 0.0
      %555 = vmatprep.subr.mxu0 0.0
      %556 = vmatpush1.msra.mxu0 0.0
      %557 = vmatprep.subr.mxu0 0.0
      %558 = vmatpush1.msra.mxu0 0.0
      %559 = vmatprep.subr.mxu0 0.0
      %560 = vmatpush1.msra.mxu0 0.0
      %561 = vmatprep.subr.mxu0 0.0
      %562 = vmatpush1.msra.mxu0 0.0
      %563 = vmatprep.subr.mxu0 0.0
      %564 = vmatpush1.msra.mxu0 0.0
      %565 = vmatprep.subr.mxu0 0.0
      %566 = vmatpush1.msra.mxu0 0.0
      %567 = vmatprep.subr.mxu0 0.0
      %568 = vmatpush1.msra.mxu0 0.0
      %569 = vmatprep.subr.mxu0 0.0
      %570 = vmatpush1.msra.mxu0 0.0
      %571 = vmatprep.subr.mxu0 0.0
      %572 = vmatpush1.msra.mxu0 0.0
      %573 = vmatprep.subr.mxu0 0.0
      %574 = vmatpush1.msra.mxu0 0.0
      %575 = vmatprep.subr.mxu0 0.0
      %576 = vmatpush1.msra.mxu0 0.0
      %577 = vmatprep.subr.mxu0 0.0
      %578 = vmatpush1.msra.mxu0 0.0
      %579 = vmatprep.subr.mxu0 0.0
      %580 = vmatpush1.msra.mxu0 0.0
      %581 = vmatprep.subr.mxu0 0.0
      %582 = vmatpush1.msra.mxu0 0.0
      %583 = vmatprep.subr.mxu0 0.0
      %584 = vmatpush1.msra.mxu0 0.0
      %585 = vmatprep.subr.mxu0 0.0
      %586 = vmatpush1.msra.mxu0 0.0
      %587 = vmatprep.subr.mxu0 0.0
      %588 = vmatpush1.msra.mxu0 0.0
      %589 = vmatprep.subr.mxu0 0.0
      %590 = vmatpush1.msra.mxu0 0.0
      %591 = vmatprep.subr.mxu0 0.0
      %592 = vmatpush1.msra.mxu0 0.0
      %593 = vmatprep.subr.mxu0 0.0
      %594 = vmatpush1.msra.mxu0 0.0
      %595 = vmatprep.subr.mxu0 0.0
      %596 = vmatpush1.msra.mxu0 0.0
      %597 = vmatprep.subr.mxu0 0.0
      %598 = vmatpush1.msra.mxu0 0.0
      %599 = vmatprep.subr.mxu0 0.0
      %600 = vmatpush1.msra.mxu0 0.0
      %601 = vmatprep.subr.mxu0 0.0
      %602 = vmatpush1.msra.mxu0 0.0
      %603 = vmatprep.mubr.f32.mxu0 0.0
      %604 = vmatmul.mubr.f32.gmra.mrb[0].mxu0 %v232
      %v605 = vpop.f32.mrb[0].mxu0
      %v606 = vadd.f32 0.0, %v605
      %v607 = vpop.f32.mrb[0].mxu0
      %608 = vdwg.mxu0
      %v610 = vsel %vm230, %v606, 0
      %612 = vmatprep.subr.mxu0 0.0
      %613 = vmatpush1.xpose.msra.mxu0 %v610
      %614 = vmatprep.subr.mxu0 0.0
      %615 = vmatpush1.xpose.msra.mxu0 0.0
      %616 = vmatprep.subr.mxu0 0.0
      %617 = vmatpush1.xpose.msra.mxu0 0.0
      %618 = vmatprep.subr.mxu0 0.0
      %619 = vmatpush1.xpose.msra.mxu0 0.0
      %620 = vmatprep.subr.mxu0 0.0
      %621 = vmatpush1.xpose.msra.mxu0 0.0
      %622 = vmatprep.subr.mxu0 0.0
      %623 = vmatpush1.xpose.msra.mxu0 0.0
      %624 = vmatprep.subr.mxu0 0.0
      %625 = vmatpush1.xpose.msra.mxu0 0.0
      %626 = vmatprep.subr.mxu0 0.0
      %627 = vmatpush1.xpose.msra.mxu0 0.0
      %628 = vmatprep.subr.mxu0 0.0
      %629 = vmatpush1.xpose.msra.mxu0 0.0
      %630 = vmatprep.subr.mxu0 0.0
      %631 = vmatpush1.xpose.msra.mxu0 0.0
      %632 = vmatprep.subr.mxu0 0.0
      %633 = vmatpush1.xpose.msra.mxu0 0.0
      %634 = vmatprep.subr.mxu0 0.0
      %635 = vmatpush1.xpose.msra.mxu0 0.0
      %636 = vmatprep.subr.mxu0 0.0
      %637 = vmatpush1.xpose.msra.mxu0 0.0
      %638 = vmatprep.subr.mxu0 0.0
      %639 = vmatpush1.xpose.msra.mxu0 0.0
      %640 = vmatprep.subr.mxu0 0.0
      %641 = vmatpush1.xpose.msra.mxu0 0.0
      %642 = vmatprep.subr.mxu0 0.0
      %643 = vmatpush1.xpose.msra.mxu0 0.0
      %644 = vmatprep.subr.mxu0 0.0
      %645 = vmatpush1.xpose.msra.mxu0 0.0
      %646 = vmatprep.subr.mxu0 0.0
      %647 = vmatpush1.xpose.msra.mxu0 0.0
      %648 = vmatprep.subr.mxu0 0.0
      %649 = vmatpush1.xpose.msra.mxu0 0.0
      %650 = vmatprep.subr.mxu0 0.0
      %651 = vmatpush1.xpose.msra.mxu0 0.0
      %652 = vmatprep.subr.mxu0 0.0
      %653 = vmatpush1.xpose.msra.mxu0 0.0
      %654 = vmatprep.subr.mxu0 0.0
      %655 = vmatpush1.xpose.msra.mxu0 0.0
      %656 = vmatprep.subr.mxu0 0.0
      %657 = vmatpush1.xpose.msra.mxu0 0.0
      %658 = vmatprep.subr.mxu0 0.0
      %659 = vmatpush1.xpose.msra.mxu0 0.0
      %660 = vmatprep.subr.mxu0 0.0
      %661 = vmatpush1.xpose.msra.mxu0 0.0
      %662 = vmatprep.subr.mxu0 0.0
      %663 = vmatpush1.xpose.msra.mxu0 0.0
      %664 = vmatprep.subr.mxu0 0.0
      %665 = vmatpush1.xpose.msra.mxu0 0.0
      %666 = vmatprep.subr.mxu0 0.0
      %667 = vmatpush1.xpose.msra.mxu0 0.0
      %668 = vmatprep.subr.mxu0 0.0
      %669 = vmatpush1.xpose.msra.mxu0 0.0
      %670 = vmatprep.subr.mxu0 0.0
      %671 = vmatpush1.xpose.msra.mxu0 0.0
      %672 = vmatprep.subr.mxu0 0.0
      %673 = vmatpush1.xpose.msra.mxu0 0.0
      %674 = vmatprep.subr.mxu0 0.0
      %675 = vmatpush1.xpose.msra.mxu0 0.0
      %676 = vmatprep.mubr.f32.mxu0 0.0
      %677 = vmatmul.mubr.f32.gmra.mrb[0].mxu0 %v305
      %v678 = vpop.f32.mrb[0].mxu0
      %v679 = vadd.f32 0.0, %v678
      %v680 = vpop.f32.mrb[0].mxu0
      %681 = vdwg.mxu0
      %s682 = scalar_lea.vmem %s218, 16
      %683 = vst.msk [vmem:[%s682] sm:$0xff] %vm380, %v679
      %s684 = scalar_lea.vmem %s2, 120
      %v685 = vld [vmem:[%s684] sm:$0xff]
      %v686 = vld [vmem:[%s684 + $0x8] sm:$0xff]
      %v687 = vld [vmem:[%s684 + $0x10] sm:$0xff]
      %v688 = vld [vmem:[%s684 + $0x18] sm:$0xff]
      %v689 = vld [vmem:[%s684 + $0x20] sm:$0xff]
      %690 = vmatprep.subr.mxu0 0.0
      %691 = vmatpush1.msra.mxu0 %v685
      %692 = vmatprep.subr.mxu0 0.0
      %693 = vmatpush1.msra.mxu0 %v686
      %694 = vmatprep.subr.mxu0 0.0
      %695 = vmatpush1.msra.mxu0 %v687
      %696 = vmatprep.subr.mxu0 0.0
      %697 = vmatpush1.msra.mxu0 %v688
      %698 = vmatprep.subr.mxu0 0.0
      %699 = vmatpush1.msra.mxu0 %v689
      %700 = vmatprep.subr.mxu0 0.0
      %701 = vmatpush1.msra.mxu0 0.0
      %702 = vmatprep.subr.mxu0 0.0
      %703 = vmatpush1.msra.mxu0 0.0
      %704 = vmatprep.subr.mxu0 0.0
      %705 = vmatpush1.msra.mxu0 0.0
      %706 = vmatprep.subr.mxu0 0.0
      %707 = vmatpush1.msra.mxu0 0.0
      %708 = vmatprep.subr.mxu0 0.0
      %709 = vmatpush1.msra.mxu0 0.0
      %710 = vmatprep.subr.mxu0 0.0
      %711 = vmatpush1.msra.mxu0 0.0
      %712 = vmatprep.subr.mxu0 0.0
      %713 = vmatpush1.msra.mxu0 0.0
      %714 = vmatprep.subr.mxu0 0.0
      %715 = vmatpush1.msra.mxu0 0.0
      %716 = vmatprep.subr.mxu0 0.0
      %717 = vmatpush1.msra.mxu0 0.0
      %718 = vmatprep.subr.mxu0 0.0
      %719 = vmatpush1.msra.mxu0 0.0
      %720 = vmatprep.subr.mxu0 0.0
      %721 = vmatpush1.msra.mxu0 0.0
      %722 = vmatprep.subr.mxu0 0.0
      %723 = vmatpush1.msra.mxu0 0.0
      %724 = vmatprep.subr.mxu0 0.0
      %725 = vmatpush1.msra.mxu0 0.0
      %726 = vmatprep.subr.mxu0 0.0
      %727 = vmatpush1.msra.mxu0 0.0
      %728 = vmatprep.subr.mxu0 0.0
      %729 = vmatpush1.msra.mxu0 0.0
      %730 = vmatprep.subr.mxu0 0.0
      %731 = vmatpush1.msra.mxu0 0.0
      %732 = vmatprep.subr.mxu0 0.0
      %733 = vmatpush1.msra.mxu0 0.0
      %734 = vmatprep.subr.mxu0 0.0
      %735 = vmatpush1.msra.mxu0 0.0
      %736 = vmatprep.subr.mxu0 0.0
      %737 = vmatpush1.msra.mxu0 0.0
      %738 = vmatprep.subr.mxu0 0.0
      %739 = vmatpush1.msra.mxu0 0.0
      %740 = vmatprep.subr.mxu0 0.0
      %741 = vmatpush1.msra.mxu0 0.0
      %742 = vmatprep.subr.mxu0 0.0
      %743 = vmatpush1.msra.mxu0 0.0
      %744 = vmatprep.subr.mxu0 0.0
      %745 = vmatpush1.msra.mxu0 0.0
      %746 = vmatprep.subr.mxu0 0.0
      %747 = vmatpush1.msra.mxu0 0.0
      %748 = vmatprep.subr.mxu0 0.0
      %749 = vmatpush1.msra.mxu0 0.0
      %750 = vmatprep.subr.mxu0 0.0
      %751 = vmatpush1.msra.mxu0 0.0
      %752 = vmatprep.subr.mxu0 0.0
      %753 = vmatpush1.msra.mxu0 0.0
      %754 = vmatprep.mubr.f32.mxu0 0.0
      %755 = vmatmul.mubr.f32.gmra.mrb[0].mxu0 %v232
      %v756 = vpop.f32.mrb[0].mxu0
      %v757 = vadd.f32 0.0, %v756
      %v758 = vpop.f32.mrb[0].mxu0
      %759 = vdwg.mxu0
      %v761 = vsel %vm230, %v757, 0
      %763 = vmatprep.subr.mxu0 0.0
      %764 = vmatpush1.xpose.msra.mxu0 %v761
      %765 = vmatprep.subr.mxu0 0.0
      %766 = vmatpush1.xpose.msra.mxu0 0.0
      %767 = vmatprep.subr.mxu0 0.0
      %768 = vmatpush1.xpose.msra.mxu0 0.0
      %769 = vmatprep.subr.mxu0 0.0
      %770 = vmatpush1.xpose.msra.mxu0 0.0
      %771 = vmatprep.subr.mxu0 0.0
      %772 = vmatpush1.xpose.msra.mxu0 0.0
      %773 = vmatprep.subr.mxu0 0.0
      %774 = vmatpush1.xpose.msra.mxu0 0.0
      %775 = vmatprep.subr.mxu0 0.0
      %776 = vmatpush1.xpose.msra.mxu0 0.0
      %777 = vmatprep.subr.mxu0 0.0
      %778 = vmatpush1.xpose.msra.mxu0 0.0
      %779 = vmatprep.subr.mxu0 0.0
      %780 = vmatpush1.xpose.msra.mxu0 0.0
      %781 = vmatprep.subr.mxu0 0.0
      %782 = vmatpush1.xpose.msra.mxu0 0.0
      %783 = vmatprep.subr.mxu0 0.0
      %784 = vmatpush1.xpose.msra.mxu0 0.0
      %785 = vmatprep.subr.mxu0 0.0
      %786 = vmatpush1.xpose.msra.mxu0 0.0
      %787 = vmatprep.subr.mxu0 0.0
      %788 = vmatpush1.xpose.msra.mxu0 0.0
      %789 = vmatprep.subr.mxu0 0.0
      %790 = vmatpush1.xpose.msra.mxu0 0.0
      %791 = vmatprep.subr.mxu0 0.0
      %792 = vmatpush1.xpose.msra.mxu0 0.0
      %793 = vmatprep.subr.mxu0 0.0
      %794 = vmatpush1.xpose.msra.mxu0 0.0
      %795 = vmatprep.subr.mxu0 0.0
      %796 = vmatpush1.xpose.msra.mxu0 0.0
      %797 = vmatprep.subr.mxu0 0.0
      %798 = vmatpush1.xpose.msra.mxu0 0.0
      %799 = vmatprep.subr.mxu0 0.0
      %800 = vmatpush1.xpose.msra.mxu0 0.0
      %801 = vmatprep.subr.mxu0 0.0
      %802 = vmatpush1.xpose.msra.mxu0 0.0
      %803 = vmatprep.subr.mxu0 0.0
      %804 = vmatpush1.xpose.msra.mxu0 0.0
      %805 = vmatprep.subr.mxu0 0.0
      %806 = vmatpush1.xpose.msra.mxu0 0.0
      %807 = vmatprep.subr.mxu0 0.0
      %808 = vmatpush1.xpose.msra.mxu0 0.0
      %809 = vmatprep.subr.mxu0 0.0
      %810 = vmatpush1.xpose.msra.mxu0 0.0
      %811 = vmatprep.subr.mxu0 0.0
      %812 = vmatpush1.xpose.msra.mxu0 0.0
      %813 = vmatprep.subr.mxu0 0.0
      %814 = vmatpush1.xpose.msra.mxu0 0.0
      %815 = vmatprep.subr.mxu0 0.0
      %816 = vmatpush1.xpose.msra.mxu0 0.0
      %817 = vmatprep.subr.mxu0 0.0
      %818 = vmatpush1.xpose.msra.mxu0 0.0
      %819 = vmatprep.subr.mxu0 0.0
      %820 = vmatpush1.xpose.msra.mxu0 0.0
      %821 = vmatprep.subr.mxu0 0.0
      %822 = vmatpush1.xpose.msra.mxu0 0.0
      %823 = vmatprep.subr.mxu0 0.0
      %824 = vmatpush1.xpose.msra.mxu0 0.0
      %825 = vmatprep.subr.mxu0 0.0
      %826 = vmatpush1.xpose.msra.mxu0 0.0
      %827 = vmatprep.mubr.f32.mxu0 0.0
      %828 = vmatmul.mubr.f32.gmra.mrb[0].mxu0 %v305
      %v829 = vpop.f32.mrb[0].mxu0
      %v830 = vadd.f32 0.0, %v829
      %v831 = vpop.f32.mrb[0].mxu0
      %832 = vdwg.mxu0
      %s833 = scalar_lea.vmem %s218, 24
      %834 = vst.msk [vmem:[%s833] sm:$0xff] %vm380, %v830
      %v835 = vmax.f32 %v377, %v528
      %v836 = vmax.f32 %v835, %v679
      %v837 = vmax.f32 %v836, %v830
      %v838 = vsub.f32 %v377, %v837
      %v839 = vmul.f32 %v838, 1.442695
      %v840 = vpow.pop %v839
      %v841 = vsub.f32 %v528, %v837
      %v842 = vmul.f32 %v841, 1.442695
      %v843 = vpow.pop %v842
      %v844 = vsub.f32 %v679, %v837
      %v845 = vmul.f32 %v844, 1.442695
      %v846 = vpow.pop %v845
      %v847 = vsub.f32 %v830, %v837
      %v848 = vmul.f32 %v847, 1.442695
      %v849 = vpow.pop %v848
      %v850 = vadd.f32 %v840, %v843
      %v851 = vadd.f32 %v850, %v846
      %v852 = vadd.f32 %v851, %v849
      %v853 = vrcp.pop %v852
      %v854 = vmul.f32 1.0, %v853
      %v855 = vmul.f32 %v840, %v854
      %v856 = vmul.f32 %v843, %v854
      %v857 = vadd.f32 %v855, %v856
      %v858 = vmul.f32 %v846, %v854
      %v859 = vadd.f32 %v857, %v858
      %v860 = vmul.f32 %v849, %v854
      %v861 = vadd.f32 %v859, %v860
      %862 = vst.msk [vmem:[%s222] sm:$0xff] %vm380, %v861
      %p863 = scmp.lt.s32.totalorder %s16, 1
      %s864 = scalar_select %p863, %s16, 1
      %s865 = smul.addr %s864, 4
      %s866 = smul.addr %s865, 8
      %s867 = scalar_lea.vmem %s3, %s866
      %p868 = scmp.lt.s32.totalorder %s16, 1
      %s869 = scalar_select %p868, %s16, 1
      %s870 = smul.addr %s869, 8
      %s871 = scalar_lea.vmem %s4, %s870
      // Predicated region
      $region33: #{emcgcn_forward.4} parent=31 // pred_check
        %p872 = pneg %p107
      $region34: #{emcgcn_forward.4} parent=31 // pred_check_branch
        %874 = sbr.rel (%p872) target = $region36
      $region35: #{emcgcn_forward.4} parent=31 // pred_region
        _
      $region36: #{emcgcn_forward.4} parent=31 // pred_fallthru
        _
      // Predicated region
      $region37: #{emcgcn_forward.4} parent=31 // pred_check
        %p875 = pneg %p133
      $region38: #{emcgcn_forward.4} parent=31 // pred_check_branch
        %877 = sbr.rel (%p875) target = $region40
      $region39: #{emcgcn_forward.4} parent=31 // pred_region
        _
      $region40: #{emcgcn_forward.4} parent=31 // pred_fallthru
        _
    $region32: #{emcgcn_forward.4} parent=5 // pred_fallthru
      _
    %p878 = scmp.le.s32.totalorder 2, %s11
    // Predicated region
    $region41: #{emcgcn_forward.4} parent=5 // pred_check
      %p879 = pneg %p878
    $region42: #{emcgcn_forward.4} parent=5 // pred_check_branch
      %881 = sbr.rel (%p879) target = $region44
    $region43: #{emcgcn_forward.4} parent=5 // pred_region
      %s882 = ssub.s32 %s11, 2
      // Predicated region
      $region45: #{emcgcn_forward.4} parent=43 // pred_check
        %p883 = pneg %p113
      $region46: #{emcgcn_forward.4} parent=43 // pred_check_branch
        %885 = sbr.rel (%p883) target = $region48
      $region47: #{emcgcn_forward.4} parent=43 // pred_region
        %p886 = scmp.lt.s32.totalorder %s17, 1
        %s887 = scalar_select %p886, %s17, 1
        %s888 = smul.addr %s887, 4
        %s889 = smul.addr %s888, 8
        %s890 = scalar_lea.vmem %s3, %s889
      $region48: #{emcgcn_forward.4} parent=43 // pred_fallthru
        _
      // Predicated region
      $region49: #{emcgcn_forward.4} parent=43 // pred_check
        %p891 = pneg %p139
      $region50: #{emcgcn_forward.4} parent=43 // pred_check_branch
        %893 = sbr.rel (%p891) target = $region52
      $region51: #{emcgcn_forward.4} parent=43 // pred_region
        %p894 = scmp.lt.s32.totalorder %s17, 1
        %s895 = scalar_select %p894, %s17, 1
        %s896 = smul.addr %s895, 8
        %s897 = scalar_lea.vmem %s4, %s896
      $region52: #{emcgcn_forward.4} parent=43 // pred_fallthru
        _
    $region44: #{emcgcn_forward.4} parent=5 // pred_fallthru
      _
  $region6: #{emcgcn_forward.4} parent=0 // loop_footer
    %s15 = sadd.s32 1, %s11
  $region7: #{emcgcn_forward.4} parent=0 // loop_footer_branch
    %10 = sbr.rel target = $region3
  $region8: #{emcgcn_forward.4} parent=0 // loop_exit
    _

// kernel: emcgcn_forward.5
$region0: #{emcgcn_forward.5}
  #allocation0 [shape = 'u32[]', space=smem, size = 0x4, offset = 0x4, fixed_abs, tag = 'smem constant byte address 0x4 - core index']
  #allocation1 [shape = 'u32[144,128]{1,0:T(1,128)}', space=vmem, size = 0x12000, scoped, tag = 'internal scratch']
  %s0 = inlined_call_operand.vmem [shape: f32[2,8,8], index: 0, kind: input, shape index: {}]
  %s1 = inlined_call_operand.vmem [shape: f32[2,20,8,8], index: 1, kind: input, shape index: {}]
  %s2 = inlined_call_operand.vmem [shape: f32[2,8,20], index: 2, kind: input, shape index: {}]
  %s3 = inlined_call_operand.vmem [shape: f32[2,8,32], index: 3, kind: input, shape index: {}]
  %s4 = inlined_call_operand.vmem [shape: f32[2,8,1], index: 4, kind: input, shape index: {}]
  %s5 = inlined_call_operand.vmem [shape: f32[32,32], index: 5, kind: input, shape index: {}]
  %s6 = inlined_call_operand.vmem [shape: f32[1,32], index: 6, kind: input, shape index: {}]
  %s7 = inlined_call_operand.vmem [shape: f32[1,32], index: 7, kind: input, shape index: {}]
  %s8 = inlined_call_operand.vmem [shape: f32[1,32], index: 8, kind: input, shape index: {}]
  %s9 = inlined_call_operand.vmem [shape: f32[20,4], index: 9, kind: input, shape index: {}]
  %s10 = inlined_call_operand.vmem [shape: f32[52,4], index: 10, kind: input, shape index: {}]
  %s11 = inlined_call_operand.vmem [shape: f32[4,52], index: 11, kind: input, shape index: {}]
  %s12 = inlined_call_operand.vmem [shape: f32[1,4], index: 12, kind: input, shape index: {}]
  %s13 = inlined_call_operand.hbm [shape: f32[2,8,32], index: 13, kind: output, shape index: {0}]
  %s14 = inlined_call_operand.vmem [shape: f32[2,4,8,8], index: 14, kind: output, shape index: {1}]
  %15 = xla_tuple %s13, %s14
  %s16 = sld [smem:[#allocation0]]
  $region101: #{emcgcn_forward.5} parent=0
    _
  %s18 = ssub.s32 1, %s16
  %s19 = scalar_select 0, %s18, %s16
  $region1: #{emcgcn_forward.5} parent=0
    #allocation2 [shape = 'u8[12288]{0}', space=smem, size = 0x3000, scoped, tag = 'input window, operand 9, single buffered']
    #allocation3 [shape = 's32[2]{0}', space=sflag, size = 0x8, scoped, tag = 'scoped memory for emcgcn_forward.5']
    #allocation4 [shape = 's32[2]{0}', space=sflag, size = 0x8, scoped, tag = 'scoped memory for emcgcn_forward.5']
    #allocation5 [shape = 'u8[512]{0}', space=smem, size = 0x200, scoped, tag = 'input window, operand 12, single buffered']
    #allocation6 [shape = 's32[1]{0}', space=sflag, size = 0x4, scoped, tag = 'scoped memory for emcgcn_forward.5']
    #allocation7 [shape = 'u8[8192]{0}', space=vmem, size = 0x2000, scoped, tag = 'output window, operand 0']
    %20 = vsyncpa [#allocation4], 0
    %21 = vsyncpa [#allocation6], 0
    %22 = vsyncpa [#allocation3], 0
    %s23 = scalar_lea.sflag [#allocation3], 1
    %24 = vsyncpa %s23, 0
    loop: start=0, step=1, limit=4
    $region2: #{emcgcn_forward.5} parent=1 // loop_pre_header
      _
    $region3: #{emcgcn_forward.5} parent=1 // loop_header
      %s26 = sphi 0, %s30
      %p27 = scmp.ge.s32.totalorder %s26, 4
      %s36 = sphi 0, %s38
      %s39 = sphi 0, %s36
      %s40 = sphi 0, %s39
      %s56 = sphi 0, %s40
      %s62 = sphi 0, %s64
      %s65 = sphi 0, %s62
      %s66 = sphi 0, %s65
      %s82 = sphi 0, %s66
      %s88 = sphi 0, %s90
      %s91 = sphi 0, %s88
      %s92 = sphi 0, %s91
      %s108 = sphi 0, %s92
      %s114 = sphi 0, %s116
      %s117 = sphi 0, %s114
      %s118 = sphi 0, %s117
      %s134 = sphi 0, %s118
      %s140 = sphi 0, %s142
      %s143 = sphi 0, %s140
      %s144 = sphi 0, %s143
      %s160 = sphi 0, %s144
      %s164 = sphi 0, %s164
      %s166 = sphi 0, %s164
      %s167 = sphi 0, %s166
      %s181 = sphi 0, %s167
      %s185 = sphi 0, %s185
      %s187 = sphi 0, %s185
      %s188 = sphi 0, %s187
      %s202 = sphi 0, %s188
      %s206 = sphi 0, %s206
      %s208 = sphi 0, %s206
      %s209 = sphi 0, %s208
      %s223 = sphi 0, %s209
      %s227 = sphi 0, %s227
      %s229 = sphi 0, %s227
      %s230 = sphi 0, %s229
      %s244 = sphi 0, %s230
      %s248 = sphi 0, %s248
      %s250 = sphi 0, %s248
      %s251 = sphi 0, %s250
      %s265 = sphi 0, %s251
      %s269 = sphi 0, %s269
      %s271 = sphi 0, %s269
      %s272 = sphi 0, %s271
      %s286 = sphi 0, %s272
      %s290 = sphi 0, %s290
      %s292 = sphi 0, %s290
      %s293 = sphi 0, %s292
      %s307 = sphi 0, %s293
      %s311 = sphi 0, %s311
      %s313 = sphi 0, %s311
      %s314 = sphi 0, %s313
      %s328 = sphi 0, %s314
      %s334 = sphi 0, %s336
      %s337 = sphi 0, %s334
      %s338 = sphi 0, %s337
      %s354 = sphi 0, %s338
      %s360 = sphi 0, %s362
      %s363 = sphi 0, %s360
      %s364 = sphi 0, %s363
      %s380 = sphi 0, %s364
    $region4: #{emcgcn_forward.5} parent=1 // loop_header_branch
      %29 = sbr.rel (%p27) target = $region8
    $region5: #{emcgcn_forward.5} parent=1 // loop_body
      %s31 = ssub.s32 %s26, 1
      %s32 = ssub.s32 %s26, 2
      %s33 = sadd.s32 %s26, 1
      %s34 = ssub.s32 %s26, %s33
      %p35 = scmp.eq.s32.totalorder %s34, 0
      %s37 = sadd.s32 %s36, 1
      %s38 = scalar_select %p35, %s36, %s37
      %p41 = pneg %p35
      %p42 = scmp.eq.s32.totalorder %s26, 1
      %p43 = por %p41, %p42
      %p44 = scmp.ne.s32.totalorder %s36, %s39
      %p45 = scmp.eq.s32.totalorder %s26, 0
      %p46 = por %p44, %p45
      %p47 = scmp.ne.s32.totalorder %s36, %s39
      %p48 = scmp.eq.s32.totalorder %s31, 1
      %p49 = por %p47, %p48
      %p50 = scmp.ne.s32.totalorder %s39, %s40
      %p51 = scmp.eq.s32.totalorder %s31, 0
      %p52 = por %p50, %p51
      %p53 = scmp.ne.s32.totalorder %s39, %s40
      %p54 = scmp.eq.s32.totalorder %s32, 1
      %p55 = por %p53, %p54
      %p57 = scmp.ne.s32.totalorder %s40, %s56
      %p58 = scmp.eq.s32.totalorder %s32, 0
      %p59 = por %p57, %p58
      %s60 = ssub.s32 %s26, %s33
      %p61 = scmp.eq.s32.totalorder %s60, 0
      %s63 = sadd.s32 %s62, 1
      %s64 = scalar_select %p61, %s62, %s63
      %p67 = pneg %p61
      %p68 = scmp.eq.s32.totalorder %s26, 1
      %p69 = por %p67, %p68
      %p70 = scmp.ne.s32.totalorder %s62, %s65
      %p71 = scmp.eq.s32.totalorder %s26, 0
      %p72 = por %p70, %p71
      %p73 = scmp.ne.s32.totalorder %s62, %s65
      %p74 = scmp.eq.s32.totalorder %s31, 1
      %p75 = por %p73, %p74
      %p76 = scmp.ne.s32.totalorder %s65, %s66
      %p77 = scmp.eq.s32.totalorder %s31, 0
      %p78 = por %p76, %p77
      %p79 = scmp.ne.s32.totalorder %s65, %s66
      %p80 = scmp.eq.s32.totalorder %s32, 1
      %p81 = por %p79, %p80
      %p83 = scmp.ne.s32.totalorder %s66, %s82
      %p84 = scmp.eq.s32.totalorder %s32, 0
      %p85 = por %p83, %p84
      %s86 = ssub.s32 %s26, %s33
      %p87 = scmp.eq.s32.totalorder %s86, 0
      %s89 = sadd.s32 %s88, 1
      %s90 = scalar_select %p87, %s88, %s89
      %p93 = pneg %p87
      %p94 = scmp.eq.s32.totalorder %s26, 1
      %p95 = por %p93, %p94
      %p96 = scmp.ne.s32.totalorder %s88, %s91
      %p97 = scmp.eq.s32.totalorder %s26, 0
      %p98 = por %p96, %p97
      %p99 = scmp.ne.s32.totalorder %s88, %s91
      %p100 = scmp.eq.s32.totalorder %s31, 1
      %p101 = por %p99, %p100
      %p102 = scmp.ne.s32.totalorder %s91, %s92
      %p103 = scmp.eq.s32.totalorder %s31, 0
      %p104 = por %p102, %p103
      %p105 = scmp.ne.s32.totalorder %s91, %s92
      %p106 = scmp.eq.s32.totalorder %s32, 1
      %p107 = por %p105, %p106
      %p109 = scmp.ne.s32.totalorder %s92, %s108
      %p110 = scmp.eq.s32.totalorder %s32, 0
      %p111 = por %p109, %p110
      %s112 = ssub.s32 %s26, %s33
      %p113 = scmp.eq.s32.totalorder %s112, 0
      %s115 = sadd.s32 %s114, 1
      %s116 = scalar_select %p113, %s114, %s115
      %p119 = pneg %p113
      %p120 = scmp.eq.s32.totalorder %s26, 1
      %p121 = por %p119, %p120
      %p122 = scmp.ne.s32.totalorder %s114, %s117
      %p123 = scmp.eq.s32.totalorder %s26, 0
      %p124 = por %p122, %p123
      %p125 = scmp.ne.s32.totalorder %s114, %s117
      %p126 = scmp.eq.s32.totalorder %s31, 1
      %p127 = por %p125, %p126
      %p128 = scmp.ne.s32.totalorder %s117, %s118
      %p129 = scmp.eq.s32.totalorder %s31, 0
      %p130 = por %p128, %p129
      %p131 = scmp.ne.s32.totalorder %s117, %s118
      %p132 = scmp.eq.s32.totalorder %s32, 1
      %p133 = por %p131, %p132
      %p135 = scmp.ne.s32.totalorder %s118, %s134
      %p136 = scmp.eq.s32.totalorder %s32, 0
      %p137 = por %p135, %p136
      %s138 = ssub.s32 %s26, %s33
      %p139 = scmp.eq.s32.totalorder %s138, 0
      %s141 = sadd.s32 %s140, 1
      %s142 = scalar_select %p139, %s140, %s141
      %p145 = pneg %p139
      %p146 = scmp.eq.s32.totalorder %s26, 1
      %p147 = por %p145, %p146
      %p148 = scmp.ne.s32.totalorder %s140, %s143
      %p149 = scmp.eq.s32.totalorder %s26, 0
      %p150 = por %p148, %p149
      %p151 = scmp.ne.s32.totalorder %s140, %s143
      %p152 = scmp.eq.s32.totalorder %s31, 1
      %p153 = por %p151, %p152
      %p154 = scmp.ne.s32.totalorder %s143, %s144
      %p155 = scmp.eq.s32.totalorder %s31, 0
      %p156 = por %p154, %p155
      %p157 = scmp.ne.s32.totalorder %s143, %s144
      %p158 = scmp.eq.s32.totalorder %s32, 1
      %p159 = por %p157, %p158
      %p161 = scmp.ne.s32.totalorder %s144, %s160
      %p162 = scmp.eq.s32.totalorder %s32, 0
      %p163 = por %p161, %p162
      %s165 = sadd.s32 %s164, 1
      %p168 = scmp.eq.s32.totalorder %s26, 1
      %p169 = scmp.ne.s32.totalorder %s164, %s166
      %p170 = scmp.eq.s32.totalorder %s26, 0
      %p171 = por %p169, %p170
      %p172 = scmp.ne.s32.totalorder %s164, %s166
      %p173 = scmp.eq.s32.totalorder %s31, 1
      %p174 = por %p172, %p173
      %p175 = scmp.ne.s32.totalorder %s166, %s167
      %p176 = scmp.eq.s32.totalorder %s31, 0
      %p177 = por %p175, %p176
      %p178 = scmp.ne.s32.totalorder %s166, %s167
      %p179 = scmp.eq.s32.totalorder %s32, 1
      %p180 = por %p178, %p179
      %p182 = scmp.ne.s32.totalorder %s167, %s181
      %p183 = scmp.eq.s32.totalorder %s32, 0
      %p184 = por %p182, %p183
      %s186 = sadd.s32 %s185, 1
      %p189 = scmp.eq.s32.totalorder %s26, 1
      %p190 = scmp.ne.s32.totalorder %s185, %s187
      %p191 = scmp.eq.s32.totalorder %s26, 0
      %p192 = por %p190, %p191
      %p193 = scmp.ne.s32.totalorder %s185, %s187
      %p194 = scmp.eq.s32.totalorder %s31, 1
      %p195 = por %p193, %p194
      %p196 = scmp.ne.s32.totalorder %s187, %s188
      %p197 = scmp.eq.s32.totalorder %s31, 0
      %p198 = por %p196, %p197
      %p199 = scmp.ne.s32.totalorder %s187, %s188
      %p200 = scmp.eq.s32.totalorder %s32, 1
      %p201 = por %p199, %p200
      %p203 = scmp.ne.s32.totalorder %s188, %s202
      %p204 = scmp.eq.s32.totalorder %s32, 0
      %p205 = por %p203, %p204
      %s207 = sadd.s32 %s206, 1
      %p210 = scmp.eq.s32.totalorder %s26, 1
      %p211 = scmp.ne.s32.totalorder %s206, %s208
      %p212 = scmp.eq.s32.totalorder %s26, 0
      %p213 = por %p211, %p212
      %p214 = scmp.ne.s32.totalorder %s206, %s208
      %p215 = scmp.eq.s32.totalorder %s31, 1
      %p216 = por %p214, %p215
      %p217 = scmp.ne.s32.totalorder %s208, %s209
      %p218 = scmp.eq.s32.totalorder %s31, 0
      %p219 = por %p217, %p218
      %p220 = scmp.ne.s32.totalorder %s208, %s209
      %p221 = scmp.eq.s32.totalorder %s32, 1
      %p222 = por %p220, %p221
      %p224 = scmp.ne.s32.totalorder %s209, %s223
      %p225 = scmp.eq.s32.totalorder %s32, 0
      %p226 = por %p224, %p225
      %s228 = sadd.s32 %s227, 1
      %p231 = scmp.eq.s32.totalorder %s26, 1
      %p232 = scmp.ne.s32.totalorder %s227, %s229
      %p233 = scmp.eq.s32.totalorder %s26, 0
      %p234 = por %p232, %p233
      %p235 = scmp.ne.s32.totalorder %s227, %s229
      %p236 = scmp.eq.s32.totalorder %s31, 1
      %p237 = por %p235, %p236
      %p238 = scmp.ne.s32.totalorder %s229, %s230
      %p239 = scmp.eq.s32.totalorder %s31, 0
      %p240 = por %p238, %p239
      %p241 = scmp.ne.s32.totalorder %s229, %s230
      %p242 = scmp.eq.s32.totalorder %s32, 1
      %p243 = por %p241, %p242
      %p245 = scmp.ne.s32.totalorder %s230, %s244
      %p246 = scmp.eq.s32.totalorder %s32, 0
      %p247 = por %p245, %p246
      %s249 = sadd.s32 %s248, 1
      %p252 = scmp.eq.s32.totalorder %s26, 1
      %p253 = scmp.ne.s32.totalorder %s248, %s250
      %p254 = scmp.eq.s32.totalorder %s26, 0
      %p255 = por %p253, %p254
      %p256 = scmp.ne.s32.totalorder %s248, %s250
      %p257 = scmp.eq.s32.totalorder %s31, 1
      %p258 = por %p256, %p257
      %p259 = scmp.ne.s32.totalorder %s250, %s251
      %p260 = scmp.eq.s32.totalorder %s31, 0
      %p261 = por %p259, %p260
      %p262 = scmp.ne.s32.totalorder %s250, %s251
      %p263 = scmp.eq.s32.totalorder %s32, 1
      %p264 = por %p262, %p263
      %p266 = scmp.ne.s32.totalorder %s251, %s265
      %p267 = scmp.eq.s32.totalorder %s32, 0
      %p268 = por %p266, %p267
      %s270 = sadd.s32 %s269, 1
      %p273 = scmp.eq.s32.totalorder %s26, 1
      %p274 = scmp.ne.s32.totalorder %s269, %s271
      %p275 = scmp.eq.s32.totalorder %s26, 0
      %p276 = por %p274, %p275
      %p277 = scmp.ne.s32.totalorder %s269, %s271
      %p278 = scmp.eq.s32.totalorder %s31, 1
      %p279 = por %p277, %p278
      %p280 = scmp.ne.s32.totalorder %s271, %s272
      %p281 = scmp.eq.s32.totalorder %s31, 0
      %p282 = por %p280, %p281
      %p283 = scmp.ne.s32.totalorder %s271, %s272
      %p284 = scmp.eq.s32.totalorder %s32, 1
      %p285 = por %p283, %p284
      %p287 = scmp.ne.s32.totalorder %s272, %s286
      %p288 = scmp.eq.s32.totalorder %s32, 0
      %p289 = por %p287, %p288
      %s291 = sadd.s32 %s290, 1
      %p294 = scmp.eq.s32.totalorder %s26, 1
      %p295 = scmp.ne.s32.totalorder %s290, %s292
      %p296 = scmp.eq.s32.totalorder %s26, 0
      %p297 = por %p295, %p296
      %p298 = scmp.ne.s32.totalorder %s290, %s292
      %p299 = scmp.eq.s32.totalorder %s31, 1
      %p300 = por %p298, %p299
      %p301 = scmp.ne.s32.totalorder %s292, %s293
      %p302 = scmp.eq.s32.totalorder %s31, 0
      %p303 = por %p301, %p302
      %p304 = scmp.ne.s32.totalorder %s292, %s293
      %p305 = scmp.eq.s32.totalorder %s32, 1
      %p306 = por %p304, %p305
      %p308 = scmp.ne.s32.totalorder %s293, %s307
      %p309 = scmp.eq.s32.totalorder %s32, 0
      %p310 = por %p308, %p309
      %s312 = sadd.s32 %s311, 1
      %p315 = scmp.eq.s32.totalorder %s26, 1
      %p316 = scmp.ne.s32.totalorder %s311, %s313
      %p317 = scmp.eq.s32.totalorder %s26, 0
      %p318 = por %p316, %p317
      %p319 = scmp.ne.s32.totalorder %s311, %s313
      %p320 = scmp.eq.s32.totalorder %s31, 1
      %p321 = por %p319, %p320
      %p322 = scmp.ne.s32.totalorder %s313, %s314
      %p323 = scmp.eq.s32.totalorder %s31, 0
      %p324 = por %p322, %p323
      %p325 = scmp.ne.s32.totalorder %s313, %s314
      %p326 = scmp.eq.s32.totalorder %s32, 1
      %p327 = por %p325, %p326
      %p329 = scmp.ne.s32.totalorder %s314, %s328
      %p330 = scmp.eq.s32.totalorder %s32, 0
      %p331 = por %p329, %p330
      %s332 = ssub.s32 %s26, %s33
      %p333 = scmp.eq.s32.totalorder %s332, 0
      %s335 = sadd.s32 %s334, 1
      %s336 = scalar_select %p333, %s334, %s335
      %p339 = pneg %p333
      %p340 = scmp.eq.s32.totalorder %s26, 1
      %p341 = por %p339, %p340
      %p342 = scmp.ne.s32.totalorder %s334, %s337
      %p343 = scmp.eq.s32.totalorder %s26, 0
      %p344 = por %p342, %p343
      %p345 = scmp.ne.s32.totalorder %s334, %s337
      %p346 = scmp.eq.s32.totalorder %s31, 1
      %p347 = por %p345, %p346
      %p348 = scmp.ne.s32.totalorder %s337, %s338
      %p349 = scmp.eq.s32.totalorder %s31, 0
      %p350 = por %p348, %p349
      %p351 = scmp.ne.s32.totalorder %s337, %s338
      %p352 = scmp.eq.s32.totalorder %s32, 1
      %p353 = por %p351, %p352
      %p355 = scmp.ne.s32.totalorder %s338, %s354
      %p356 = scmp.eq.s32.totalorder %s32, 0
      %p357 = por %p355, %p356
      %s358 = ssub.s32 %s26, %s33
      %p359 = scmp.eq.s32.totalorder %s358, 0
      %s361 = sadd.s32 %s360, 1
      %s362 = scalar_select %p359, %s360, %s361
      %p365 = pneg %p359
      %p366 = scmp.eq.s32.totalorder %s26, 1
      %p367 = por %p365, %p366
      %p368 = scmp.ne.s32.totalorder %s360, %s363
      %p369 = scmp.eq.s32.totalorder %s26, 0
      %p370 = por %p368, %p369
      %p371 = scmp.ne.s32.totalorder %s360, %s363
      %p372 = scmp.eq.s32.totalorder %s31, 1
      %p373 = por %p371, %p372
      %p374 = scmp.ne.s32.totalorder %s363, %s364
      %p375 = scmp.eq.s32.totalorder %s31, 0
      %p376 = por %p374, %p375
      %p377 = scmp.ne.s32.totalorder %s363, %s364
      %p378 = scmp.eq.s32.totalorder %s32, 1
      %p379 = por %p377, %p378
      %p381 = scmp.ne.s32.totalorder %s364, %s380
      %p382 = scmp.eq.s32.totalorder %s32, 0
      %p383 = por %p381, %p382
      %p384 = scmp.le.s32.totalorder 1, %s26
      %p385 = scmp.lt.s32.totalorder %s26, 3
      %p386 = pnand %p384, %p385
      %p387 = pneg %p386
      // Predicated region
      $region9: #{emcgcn_forward.5} parent=5 // pred_check
        _
      $region10: #{emcgcn_forward.5} parent=5 // pred_check_branch
        %389 = sbr.rel (%p386) target = $region12
      $region11: #{emcgcn_forward.5} parent=5 // pred_region
        %s390 = ssub.s32 %s26, 1
        // Predicated region
        $region13: #{emcgcn_forward.5} parent=11 // pred_check
          %p391 = pneg %p177
        $region14: #{emcgcn_forward.5} parent=11 // pred_check_branch
          %393 = sbr.rel (%p391) target = $region16
        $region15: #{emcgcn_forward.5} parent=11 // pred_region
          _
        $region16: #{emcgcn_forward.5} parent=11 // pred_fallthru
          _
        // Predicated region
        $region17: #{emcgcn_forward.5} parent=11 // pred_check
          %p394 = pneg %p198
        $region18: #{emcgcn_forward.5} parent=11 // pred_check_branch
          %396 = sbr.rel (%p394) target = $region20
        $region19: #{emcgcn_forward.5} parent=11 // pred_region
          _
        $region20: #{emcgcn_forward.5} parent=11 // pred_fallthru
          _
        // Predicated region
        $region21: #{emcgcn_forward.5} parent=11 // pred_check
          %p397 = pneg %p219
        $region22: #{emcgcn_forward.5} parent=11 // pred_check_branch
          %399 = sbr.rel (%p397) target = $region24
        $region23: #{emcgcn_forward.5} parent=11 // pred_region
          _
        $region24: #{emcgcn_forward.5} parent=11 // pred_fallthru
          _
        // Predicated region
        $region25: #{emcgcn_forward.5} parent=11 // pred_check
          %p400 = pneg %p240
        $region26: #{emcgcn_forward.5} parent=11 // pred_check_branch
          %402 = sbr.rel (%p400) target = $region28
        $region27: #{emcgcn_forward.5} parent=11 // pred_region
          _
        $region28: #{emcgcn_forward.5} parent=11 // pred_fallthru
          _
        // Predicated region
        $region29: #{emcgcn_forward.5} parent=11 // pred_check
          %p403 = pneg %p261
        $region30: #{emcgcn_forward.5} parent=11 // pred_check_branch
          %405 = sbr.rel (%p403) target = $region32
        $region31: #{emcgcn_forward.5} parent=11 // pred_region
          %s407 = ssub.s32 384, 384
          %408 = vsyncadd [#allocation4], %s407
          %s409 = sshll.u32 %s9, 4
          %s410 = int_to_ptr.vmem [resolvable:$true] %s409
          %415 = dma.vmem_to_smem %s410, 384, [#allocation2], [#allocation4], 128, 128, 8
        $region32: #{emcgcn_forward.5} parent=11 // pred_fallthru
          _
        // Predicated region
        $region33: #{emcgcn_forward.5} parent=11 // pred_check
          %p416 = pneg %p282
        $region34: #{emcgcn_forward.5} parent=11 // pred_check_branch
          %418 = sbr.rel (%p416) target = $region36
        $region35: #{emcgcn_forward.5} parent=11 // pred_region
          _
        $region36: #{emcgcn_forward.5} parent=11 // pred_fallthru
          _
        // Predicated region
        $region37: #{emcgcn_forward.5} parent=11 // pred_check
          %p419 = pneg %p303
        $region38: #{emcgcn_forward.5} parent=11 // pred_check_branch
          %421 = sbr.rel (%p419) target = $region40
        $region39: #{emcgcn_forward.5} parent=11 // pred_region
          _
        $region40: #{emcgcn_forward.5} parent=11 // pred_fallthru
          _
        // Predicated region
        $region41: #{emcgcn_forward.5} parent=11 // pred_check
          %p422 = pneg %p324
        $region42: #{emcgcn_forward.5} parent=11 // pred_check_branch
          %424 = sbr.rel (%p422) target = $region44
        $region43: #{emcgcn_forward.5} parent=11 // pred_region
          %s426 = ssub.s32 16, 16
          %427 = vsyncadd [#allocation6], %s426
          %s429 = sshll.u32 %s12, 4
          %s430 = int_to_ptr.vmem [resolvable:$true] %s429
          %432 = dma.vmem_to_smem %s430, 16, [#allocation5], [#allocation6]
        $region44: #{emcgcn_forward.5} parent=11 // pred_fallthru
          _
      $region12: #{emcgcn_forward.5} parent=5 // pred_fallthru
        _
      %p433 = scmp.lt.s32.totalorder %s26, 2
      // Predicated region
      $region45: #{emcgcn_forward.5} parent=5 // pred_check
        %p434 = pneg %p433
      $region46: #{emcgcn_forward.5} parent=5 // pred_check_branch
        %436 = sbr.rel (%p434) target = $region48
      $region47: #{emcgcn_forward.5} parent=5 // pred_region
        // Predicated region
        $region49: #{emcgcn_forward.5} parent=47 // pred_check
          %p437 = pneg %p46
        $region50: #{emcgcn_forward.5} parent=47 // pred_check_branch
          %439 = sbr.rel (%p437) target = $region52
        $region51: #{emcgcn_forward.5} parent=47 // pred_region
          %p440 = scmp.lt.s32.totalorder %s26, 1
          %s441 = scalar_select %p440, %s26, 1
          %s442 = smul.addr %s441, 8
          %s443 = scalar_lea.vmem %s0, %s442
        $region52: #{emcgcn_forward.5} parent=47 // pred_fallthru
          _
        // Predicated region
        $region53: #{emcgcn_forward.5} parent=47 // pred_check
          %p444 = pneg %p72
        $region54: #{emcgcn_forward.5} parent=47 // pred_check_branch
          %446 = sbr.rel (%p444) target = $region56
        $region55: #{emcgcn_forward.5} parent=47 // pred_region
          %p447 = scmp.lt.s32.totalorder %s26, 1
          %s448 = scalar_select %p447, %s26, 1
          %s449 = smul.addr %s448, 20
          %s450 = smul.addr %s449, 8
          %s451 = scalar_lea.vmem %s1, %s450
        $region56: #{emcgcn_forward.5} parent=47 // pred_fallthru
          _
        // Predicated region
        $region57: #{emcgcn_forward.5} parent=47 // pred_check
          %p452 = pneg %p98
        $region58: #{emcgcn_forward.5} parent=47 // pred_check_branch
          %454 = sbr.rel (%p452) target = $region60
        $region59: #{emcgcn_forward.5} parent=47 // pred_region
          %p455 = scmp.lt.s32.totalorder %s26, 1
          %s456 = scalar_select %p455, %s26, 1
          %s457 = smul.addr %s456, 8
          %s458 = scalar_lea.vmem %s2, %s457
        $region60: #{emcgcn_forward.5} parent=47 // pred_fallthru
          _
        // Predicated region
        $region61: #{emcgcn_forward.5} parent=47 // pred_check
          %p459 = pneg %p124
        $region62: #{emcgcn_forward.5} parent=47 // pred_check_branch
          %461 = sbr.rel (%p459) target = $region64
        $region63: #{emcgcn_forward.5} parent=47 // pred_region
          %p462 = scmp.lt.s32.totalorder %s26, 1
          %s463 = scalar_select %p462, %s26, 1
          %s464 = smul.addr %s463, 8
          %s465 = scalar_lea.vmem %s3, %s464
        $region64: #{emcgcn_forward.5} parent=47 // pred_fallthru
          _
        // Predicated region
        $region65: #{emcgcn_forward.5} parent=47 // pred_check
          %p466 = pneg %p150
        $region66: #{emcgcn_forward.5} parent=47 // pred_check_branch
          %468 = sbr.rel (%p466) target = $region68
        $region67: #{emcgcn_forward.5} parent=47 // pred_region
          %p469 = scmp.lt.s32.totalorder %s26, 1
          %s470 = scalar_select %p469, %s26, 1
          %s471 = smul.addr %s470, 8
          %s472 = scalar_lea.vmem %s4, %s471
        $region68: #{emcgcn_forward.5} parent=47 // pred_fallthru
          _
      $region48: #{emcgcn_forward.5} parent=5 // pred_fallthru
        _
      %p473 = scmp.le.s32.totalorder 1, %s26
      %p474 = scmp.lt.s32.totalorder %s26, 3
      %p475 = pnand %p473, %p474
      %p476 = pneg %p475
      // Predicated region
      $region69: #{emcgcn_forward.5} parent=5 // pred_check
        _
      $region70: #{emcgcn_forward.5} parent=5 // pred_check_branch
        %478 = sbr.rel (%p475) target = $region72
      $region71: #{emcgcn_forward.5} parent=5 // pred_region
        %s479 = ssub.s32 %s26, 1
        // Predicated region
        $region73: #{emcgcn_forward.5} parent=71 // pred_check
          %p480 = pneg %p261
        $region74: #{emcgcn_forward.5} parent=71 // pred_check_branch
          %482 = sbr.rel (%p480) target = $region76
        $region75: #{emcgcn_forward.5} parent=71 // pred_region
          %483 = dma.done [#allocation4], 384
        $region76: #{emcgcn_forward.5} parent=71 // pred_fallthru
          _
        // Predicated region
        $region77: #{emcgcn_forward.5} parent=71 // pred_check
          %p484 = pneg %p324
        $region78: #{emcgcn_forward.5} parent=71 // pred_check_branch
          %486 = sbr.rel (%p484) target = $region80
        $region79: #{emcgcn_forward.5} parent=71 // pred_region
          %487 = dma.done [#allocation6], 16
        $region80: #{emcgcn_forward.5} parent=71 // pred_fallthru
          _
        %488 = sfence
        %p489 = scmp.lt.s32.totalorder %s31, 1
        %s490 = scalar_select %p489, %s31, 1
        %s491 = smul.addr %s490, 8
        %s492 = scalar_lea.vmem %s0, %s491
        %p493 = pneg %p52
        %p494 = pneg %p49
        %p495 = scmp.lt.s32.totalorder %s31, 1
        %s496 = scalar_select %p495, %s31, 1
        %s497 = smul.addr %s496, 20
        %s498 = smul.addr %s497, 8
        %s499 = scalar_lea.vmem %s1, %s498
        %p500 = pneg %p78
        %p501 = pneg %p75
        %p502 = scmp.lt.s32.totalorder %s31, 1
        %s503 = scalar_select %p502, %s31, 1
        %s504 = smul.addr %s503, 8
        %s505 = scalar_lea.vmem %s2, %s504
        %p506 = pneg %p104
        %p507 = pneg %p101
        %p508 = scmp.lt.s32.totalorder %s31, 1
        %s509 = scalar_select %p508, %s31, 1
        %s510 = smul.addr %s509, 8
        %s511 = scalar_lea.vmem %s3, %s510
        %p512 = pneg %p130
        %p513 = pneg %p127
        %p514 = scmp.lt.s32.totalorder %s31, 1
        %s515 = scalar_select %p514, %s31, 1
        %s516 = smul.addr %s515, 8
        %s517 = scalar_lea.vmem %s4, %s516
        %p518 = pneg %p156
        %p519 = pneg %p153
        %p520 = pneg %p177
        %p521 = pneg %p174
        %p522 = pneg %p198
        %p523 = pneg %p195
        %p524 = pneg %p219
        %p525 = pneg %p216
        %p526 = pneg %p240
        %p527 = pneg %p237
        %p528 = pneg %p261
        %p529 = pneg %p258
        %p530 = pneg %p282
        %p531 = pneg %p279
        %p532 = pneg %p303
        %p533 = pneg %p300
        %p534 = pneg %p324
        %p535 = pneg %p321
        %p536 = pneg %p350
        %p537 = pneg %p347
        %s538 = sand.u32 %s337, 1
        %s539 = scalar_lea.sflag [#allocation3], %s538
        %s540 = sand.u32 %s337, 1
        %s541 = smul.addr %s540, 8
        %s542 = scalar_lea.vmem [#allocation7], %s541
        %p543 = pneg %p376
        %p544 = pneg %p373
        %p545 = scmp.lt.s32.totalorder %s31, 1
        %s546 = scalar_select %p545, %s31, 1
        %s547 = smul.addr %s546, 4
        %s548 = smul.addr %s547, 8
        %s549 = scalar_lea.vmem %s14, %s548
        %p550 = scmp.lt.s32.totalorder %s31, 1
        %s551 = scalar_select %p550, %s31, 1
        %s552 = smul.addr %s551, 8
        %s553 = scalar_lea.vmem %s0, %s552
        %p554 = scmp.lt.s32.totalorder %s31, 1
        %s555 = scalar_select %p554, %s31, 1
        %s556 = smul.addr %s555, 20
        %s557 = smul.addr %s556, 8
        %s558 = scalar_lea.vmem %s1, %s557
        %p559 = scmp.lt.s32.totalorder %s31, 1
        %s560 = scalar_select %p559, %s31, 1
        %s561 = smul.addr %s560, 8
        %s562 = scalar_lea.vmem %s2, %s561
        %p563 = scmp.lt.s32.totalorder %s31, 1
        %s564 = scalar_select %p563, %s31, 1
        %s565 = smul.addr %s564, 8
        %s566 = scalar_lea.vmem %s3, %s565
        %p567 = scmp.lt.s32.totalorder %s31, 1
        %s568 = scalar_select %p567, %s31, 1
        %s569 = smul.addr %s568, 8
        %s570 = scalar_lea.vmem %s4, %s569
        %p571 = scmp.lt.s32.totalorder %s31, 1
        %s572 = scalar_select %p571, %s31, 1
        %s573 = smul.addr %s572, 4
        %s574 = smul.addr %s573, 8
        %s575 = scalar_lea.vmem %s14, %s574
        %v576 = vld [vmem:[%s553] sm:$0xff]
        %v577 = vld [vmem:[%s566] sm:$0xff]
        %v578 = vld [vmem:[%s570] sm:$0xff]
        %vm579 = vcmask 64512
        %v581 = vsel %vm579, %v576, 0
        %583 = vmatprep.subr.mxu0 0.0
        %584 = vmatpush1.msra.mxu0 %v577
        %585 = vmatprep.subr.mxu0 0.0
        %586 = vmatpush1.msra.mxu0 0.0
        %587 = vmatprep.subr.mxu0 0.0
        %588 = vmatpush1.msra.mxu0 0.0
        %589 = vmatprep.subr.mxu0 0.0
        %590 = vmatpush1.msra.mxu0 0.0
        %591 = vmatprep.subr.mxu0 0.0
        %592 = vmatpush1.msra.mxu0 0.0
        %593 = vmatprep.subr.mxu0 0.0
        %594 = vmatpush1.msra.mxu0 0.0
        %595 = vmatprep.subr.mxu0 0.0
        %596 = vmatpush1.msra.mxu0 0.0
        %597 = vmatprep.subr.mxu0 0.0
        %598 = vmatpush1.msra.mxu0 0.0
        %599 = vmatprep.subr.mxu0 0.0
        %600 = vmatpush1.msra.mxu0 0.0
        %601 = vmatprep.subr.mxu0 0.0
        %602 = vmatpush1.msra.mxu0 0.0
        %603 = vmatprep.subr.mxu0 0.0
        %604 = vmatpush1.msra.mxu0 0.0
        %605 = vmatprep.subr.mxu0 0.0
        %606 = vmatpush1.msra.mxu0 0.0
        %607 = vmatprep.subr.mxu0 0.0
        %608 = vmatpush1.msra.mxu0 0.0
        %609 = vmatprep.subr.mxu0 0.0
        %610 = vmatpush1.msra.mxu0 0.0
        %611 = vmatprep.subr.mxu0 0.0
        %612 = vmatpush1.msra.mxu0 0.0
        %613 = vmatprep.subr.mxu0 0.0
        %614 = vmatpush1.msra.mxu0 0.0
        %615 = vmatprep.subr.mxu0 0.0
        %616 = vmatpush1.msra.mxu0 0.0
        %617 = vmatprep.subr.mxu0 0.0
        %618 = vmatpush1.msra.mxu0 0.0
        %619 = vmatprep.subr.mxu0 0.0
        %620 = vmatpush1.msra.mxu0 0.0
        %621 = vmatprep.subr.mxu0 0.0
        %622 = vmatpush1.msra.mxu0 0.0
        %623 = vmatprep.subr.mxu0 0.0
        %624 = vmatpush1.msra.mxu0 0.0
        %625 = vmatprep.subr.mxu0 0.0
        %626 = vmatpush1.msra.mxu0 0.0
        %627 = vmatprep.subr.mxu0 0.0
        %628 = vmatpush1.msra.mxu0 0.0
        %629 = vmatprep.subr.mxu0 0.0
        %630 = vmatpush1.msra.mxu0 0.0
        %631 = vmatprep.subr.mxu0 0.0
        %632 = vmatpush1.msra.mxu0 0.0
        %633 = vmatprep.subr.mxu0 0.0
        %634 = vmatpush1.msra.mxu0 0.0
        %635 = vmatprep.subr.mxu0 0.0
        %636 = vmatpush1.msra.mxu0 0.0
        %637 = vmatprep.subr.mxu0 0.0
        %638 = vmatpush1.msra.mxu0 0.0
        %639 = vmatprep.subr.mxu0 0.0
        %640 = vmatpush1.msra.mxu0 0.0
        %641 = vmatprep.subr.mxu0 0.0
        %642 = vmatpush1.msra.mxu0 0.0
        %643 = vmatprep.subr.mxu0 0.0
        %644 = vmatpush1.msra.mxu0 0.0
        %645 = vmatprep.subr.mxu0 0.0
        %646 = vmatpush1.msra.mxu0 0.0
        %647 = vmatprep.mubr.f32.mxu0 0.0
        %648 = vmatmul.mubr.f32.gmra.mrb[0].mxu0 %v581
        %v649 = vpop.f32.mrb[0].mxu0
        %v650 = vadd.f32 0.0, %v649
        %v651 = vpop.f32.mrb[0].mxu0
        %652 = vdwg.mxu0
        %v653 = vmul.f32 %v650, 0.05
        %655 = vset.pattern.permute.xlu0 0
        %656 = vperm.xlu0 %655, %v578
        %v657 = vpop.permute.xlu0 %656
        %v659 = vmul.f32 %v657, %v577
        %v660 = vadd.f32 %v653, %v659
        %v661 = vld [vmem:[%s5] sm:$0xff]
        %v662 = vld [vmem:[%s5 + $0x8] sm:$0xff]
        %v663 = vld [vmem:[%s5 + $0x10] sm:$0xff]
        %v664 = vld [vmem:[%s5 + $0x18] sm:$0xff]
        %v665 = vld [vmem:[%s6] sm:$0x1]
        %v667 = vlaneseq
        %v668 = vshrl.u32 %v667, 7
        %v669 = vsub.s32 0, %v668
        %v670 = vrot.slane %v665, %v669
        %vm672 = vcmask 261120
        %v674 = vsel %vm672, %v660, 0
        %676 = vmatprep.subr.mxu0 0.0
        %677 = vmatpush1.msra.mxu0 %v661
        %678 = vmatprep.subr.mxu0 0.0
        %679 = vmatpush1.msra.mxu0 %v662
        %680 = vmatprep.subr.mxu0 0.0
        %681 = vmatpush1.msra.mxu0 %v663
        %682 = vmatprep.subr.mxu0 0.0
        %683 = vmatpush1.msra.mxu0 %v664
        %684 = vmatprep.subr.mxu0 0.0
        %685 = vmatpush1.msra.mxu0 0.0
        %686 = vmatprep.subr.mxu0 0.0
        %687 = vmatpush1.msra.mxu0 0.0
        %688 = vmatprep.subr.mxu0 0.0
        %689 = vmatpush1.msra.mxu0 0.0
        %690 = vmatprep.subr.mxu0 0.0
        %691 = vmatpush1.msra.mxu0 0.0
        %692 = vmatprep.subr.mxu0 0.0
        %693 = vmatpush1.msra.mxu0 0.0
        %694 = vmatprep.subr.mxu0 0.0
        %695 = vmatpush1.msra.mxu0 0.0
        %696 = vmatprep.subr.mxu0 0.0
        %697 = vmatpush1.msra.mxu0 0.0
        %698 = vmatprep.subr.mxu0 0.0
        %699 = vmatpush1.msra.mxu0 0.0
        %700 = vmatprep.subr.mxu0 0.0
        %701 = vmatpush1.msra.mxu0 0.0
        %702 = vmatprep.subr.mxu0 0.0
        %703 = vmatpush1.msra.mxu0 0.0
        %704 = vmatprep.subr.mxu0 0.0
        %705 = vmatpush1.msra.mxu0 0.0
        %706 = vmatprep.subr.mxu0 0.0
        %707 = vmatpush1.msra.mxu0 0.0
        %708 = vmatprep.subr.mxu0 0.0
        %709 = vmatpush1.msra.mxu0 0.0
        %710 = vmatprep.subr.mxu0 0.0
        %711 = vmatpush1.msra.mxu0 0.0
        %712 = vmatprep.subr.mxu0 0.0
        %713 = vmatpush1.msra.mxu0 0.0
        %714 = vmatprep.subr.mxu0 0.0
        %715 = vmatpush1.msra.mxu0 0.0
        %716 = vmatprep.subr.mxu0 0.0
        %717 = vmatpush1.msra.mxu0 0.0
        %718 = vmatprep.subr.mxu0 0.0
        %719 = vmatpush1.msra.mxu0 0.0
        %720 = vmatprep.subr.mxu0 0.0
        %721 = vmatpush1.msra.mxu0 0.0
        %722 = vmatprep.subr.mxu0 0.0
        %723 = vmatpush1.msra.mxu0 0.0
        %724 = vmatprep.subr.mxu0 0.0
        %725 = vmatpush1.msra.mxu0 0.0
        %726 = vmatprep.subr.mxu0 0.0
        %727 = vmatpush1.msra.mxu0 0.0
        %728 = vmatprep.subr.mxu0 0.0
        %729 = vmatpush1.msra.mxu0 0.0
        %730 = vmatprep.subr.mxu0 0.0
        %731 = vmatpush1.msra.mxu0 0.0
        %732 = vmatprep.subr.mxu0 0.0
        %733 = vmatpush1.msra.mxu0 0.0
        %734 = vmatprep.subr.mxu0 0.0
        %735 = vmatpush1.msra.mxu0 0.0
        %736 = vmatprep.subr.mxu0 0.0
        %737 = vmatpush1.msra.mxu0 0.0
        %738 = vmatprep.subr.mxu0 0.0
        %739 = vmatpush1.msra.mxu0 0.0
        %740 = vmatprep.mubr.f32.mxu0 0.0
        %741 = vmatmul.mubr.f32.gmra.mrb[0].mxu0 %v674
        %v742 = vpop.f32.mrb[0].mxu0
        %v743 = vadd.f32 %v670, %v742
        %v744 = vpop.f32.mrb[0].mxu0
        %745 = vdwg.mxu0
        %v746 = vsel %vm672, %v743, 0.0
        %747 = vadd.xlane.f32.xlu0 %v746
        %v748 = vpop.xlane.xlu0 %747
        %v749 = vrcp.pop 32.0
        %v750 = vmul.f32 %v748, %v749
        %v751 = vsub.f32 %v743, %v750
        %v752 = vmul.f32 %v751, %v751
        %v753 = vsel %vm672, %v752, 0.0
        %754 = vadd.xlane.f32.xlu0 %v753
        %v755 = vpop.xlane.xlu0 %754
        %v756 = vmul.f32 %v755, 0.032258064
        %v757 = vrsqrt.pop %v756
        %v758 = vmul.f32 %v756, %v757
        %vm759 = vcmp.eq.f32.partialorder %v756, inf
        %v760 = vsel %vm759, %v756, %v758
        %vm761 = vcmp.eq.f32.partialorder %v756, 0.0
        %v762 = vand.u32 %v756, 2147483648
        %v763 = vsel %vm761, %v762, %v760
        %v764 = vld [vmem:[%s7] sm:$0x1]
        %v766 = vlaneseq
        %v767 = vshrl.u32 %v766, 7
        %v768 = vsub.s32 0, %v767
        %v769 = vrot.slane %v764, %v768
        %v771 = vmul.f32 %v769, %v751
        %v772 = vadd.f32 %v763, 1e-06
        %v773 = vrcp.pop %v772
        %v774 = vmul.f32 %v771, %v773
        %v775 = vld [vmem:[%s8] sm:$0x1]
        %v777 = vlaneseq
        %v778 = vshrl.u32 %v777, 7
        %v779 = vsub.s32 0, %v778
        %v780 = vrot.slane %v775, %v779
        %v782 = vadd.f32 %v774, %v780
        %v783 = vmax.f32 %v782, 0.0
        %784 = vst.msk [vmem:[%s542] sm:$0xff] %vm672, %v783
        %v785 = vld [vmem:[%s562] sm:$0xff]
        %787 = vrot.lane.b32.xlu0 %v783, 20
        %v788 = vpop.permute.xlu0 %787
        %vm790 = vcmask 162816
        %v791 = vsel %vm790, %v785, %v788
        %v792 = vld [vmem:[%s10] sm:$0xff]
        %v793 = vld [vmem:[%s10 + $0x8] sm:$0xff]
        %v794 = vld [vmem:[%s10 + $0x10] sm:$0xff]
        %v795 = vld [vmem:[%s10 + $0x18] sm:$0xff]
        %v796 = vld [vmem:[%s10 + $0x20] sm:$0xff]
        %v797 = vld [vmem:[%s10 + $0x28] sm:$0xff]
        %v798 = vld [vmem:[%s10 + $0x30] sm:$0xf]
        %vm799 = vcmask 424960
        %v801 = vsel %vm799, %v791, 0
        %vm803 = vcmask 1043456
        %v805 = vsel %vm803, %v798, 0
        %807 = vmatprep.subr.mxu0 0.0
        %808 = vmatpush1.msra.mxu0 %v792
        %809 = vmatprep.subr.mxu0 0.0
        %810 = vmatpush1.msra.mxu0 %v793
        %811 = vmatprep.subr.mxu0 0.0
        %812 = vmatpush1.msra.mxu0 %v794
        %813 = vmatprep.subr.mxu0 0.0
        %814 = vmatpush1.msra.mxu0 %v795
        %815 = vmatprep.subr.mxu0 0.0
        %816 = vmatpush1.msra.mxu0 %v796
        %817 = vmatprep.subr.mxu0 0.0
        %818 = vmatpush1.msra.mxu0 %v797
        %819 = vmatprep.subr.mxu0 0.0
        %820 = vmatpush1.msra.mxu0 %v805
        %821 = vmatprep.subr.mxu0 0.0
        %822 = vmatpush1.msra.mxu0 0.0
        %823 = vmatprep.subr.mxu0 0.0
        %824 = vmatpush1.msra.mxu0 0.0
        %825 = vmatprep.subr.mxu0 0.0
        %826 = vmatpush1.msra.mxu0 0.0
        %827 = vmatprep.subr.mxu0 0.0
        %828 = vmatpush1.msra.mxu0 0.0
        %829 = vmatprep.subr.mxu0 0.0
        %830 = vmatpush1.msra.mxu0 0.0
        %831 = vmatprep.subr.mxu0 0.0
        %832 = vmatpush1.msra.mxu0 0.0
        %833 = vmatprep.subr.mxu0 0.0
        %834 = vmatpush1.msra.mxu0 0.0
        %835 = vmatprep.subr.mxu0 0.0
        %836 = vmatpush1.msra.mxu0 0.0
        %837 = vmatprep.subr.mxu0 0.0
        %838 = vmatpush1.msra.mxu0 0.0
        %839 = vmatprep.subr.mxu0 0.0
        %840 = vmatpush1.msra.mxu0 0.0
        %841 = vmatprep.subr.mxu0 0.0
        %842 = vmatpush1.msra.mxu0 0.0
        %843 = vmatprep.subr.mxu0 0.0
        %844 = vmatpush1.msra.mxu0 0.0
        %845 = vmatprep.subr.mxu0 0.0
        %846 = vmatpush1.msra.mxu0 0.0
        %847 = vmatprep.subr.mxu0 0.0
        %848 = vmatpush1.msra.mxu0 0.0
        %849 = vmatprep.subr.mxu0 0.0
        %850 = vmatpush1.msra.mxu0 0.0
        %851 = vmatprep.subr.mxu0 0.0
        %852 = vmatpush1.msra.mxu0 0.0
        %853 = vmatprep.subr.mxu0 0.0
        %854 = vmatpush1.msra.mxu0 0.0
        %855 = vmatprep.subr.mxu0 0.0
        %856 = vmatpush1.msra.mxu0 0.0
        %857 = vmatprep.subr.mxu0 0.0
        %858 = vmatpush1.msra.mxu0 0.0
        %859 = vmatprep.subr.mxu0 0.0
        %860 = vmatpush1.msra.mxu0 0.0
        %861 = vmatprep.subr.mxu0 0.0
        %862 = vmatpush1.msra.mxu0 0.0
        %863 = vmatprep.subr.mxu0 0.0
        %864 = vmatpush1.msra.mxu0 0.0
        %865 = vmatprep.subr.mxu0 0.0
        %866 = vmatpush1.msra.mxu0 0.0
        %867 = vmatprep.subr.mxu0 0.0
        %868 = vmatpush1.msra.mxu0 0.0
        %869 = vmatprep.subr.mxu0 0.0
        %870 = vmatpush1.msra.mxu0 0.0
        %871 = vmatprep.mubr.f32.mxu0 0.0
        %872 = vmatmul.mubr.f32.gmra.mrb[0].mxu0 %v801
        %v873 = vpop.f32.mrb[0].mxu0
        %v874 = vadd.f32 0.0, %v873
        %v875 = vpop.f32.mrb[0].mxu0
        %876 = vdwg.mxu0
        %v877 = vld [vmem:[%s11] sm:$0xf]
        %v879 = vsel %vm799, %v877, 0
        %881 = vmatprep.subr.mxu0 0.0
        %882 = vmatpush1.xpose.msra.mxu0 %v801
        %883 = vmatprep.subr.mxu0 0.0
        %884 = vmatpush1.xpose.msra.mxu0 0.0
        %885 = vmatprep.subr.mxu0 0.0
        %886 = vmatpush1.xpose.msra.mxu0 0.0
        %887 = vmatprep.subr.mxu0 0.0
        %888 = vmatpush1.xpose.msra.mxu0 0.0
        %889 = vmatprep.subr.mxu0 0.0
        %890 = vmatpush1.xpose.msra.mxu0 0.0
        %891 = vmatprep.subr.mxu0 0.0
        %892 = vmatpush1.xpose.msra.mxu0 0.0
        %893 = vmatprep.subr.mxu0 0.0
        %894 = vmatpush1.xpose.msra.mxu0 0.0
        %895 = vmatprep.subr.mxu0 0.0
        %896 = vmatpush1.xpose.msra.mxu0 0.0
        %897 = vmatprep.subr.mxu0 0.0
        %898 = vmatpush1.xpose.msra.mxu0 0.0
        %899 = vmatprep.subr.mxu0 0.0
        %900 = vmatpush1.xpose.msra.mxu0 0.0
        %901 = vmatprep.subr.mxu0 0.0
        %902 = vmatpush1.xpose.msra.mxu0 0.0
        %903 = vmatprep.subr.mxu0 0.0
        %904 = vmatpush1.xpose.msra.mxu0 0.0
        %905 = vmatprep.subr.mxu0 0.0
        %906 = vmatpush1.xpose.msra.mxu0 0.0
        %907 = vmatprep.subr.mxu0 0.0
        %908 = vmatpush1.xpose.msra.mxu0 0.0
        %909 = vmatprep.subr.mxu0 0.0
        %910 = vmatpush1.xpose.msra.mxu0 0.0
        %911 = vmatprep.subr.mxu0 0.0
        %912 = vmatpush1.xpose.msra.mxu0 0.0
        %913 = vmatprep.subr.mxu0 0.0
        %914 = vmatpush1.xpose.msra.mxu0 0.0
        %915 = vmatprep.subr.mxu0 0.0
        %916 = vmatpush1.xpose.msra.mxu0 0.0
        %917 = vmatprep.subr.mxu0 0.0
        %918 = vmatpush1.xpose.msra.mxu0 0.0
        %919 = vmatprep.subr.mxu0 0.0
        %920 = vmatpush1.xpose.msra.mxu0 0.0
        %921 = vmatprep.subr.mxu0 0.0
        %922 = vmatpush1.xpose.msra.mxu0 0.0
        %923 = vmatprep.subr.mxu0 0.0
        %924 = vmatpush1.xpose.msra.mxu0 0.0
        %925 = vmatprep.subr.mxu0 0.0
        %926 = vmatpush1.xpose.msra.mxu0 0.0
        %927 = vmatprep.subr.mxu0 0.0
        %928 = vmatpush1.xpose.msra.mxu0 0.0
        %929 = vmatprep.subr.mxu0 0.0
        %930 = vmatpush1.xpose.msra.mxu0 0.0
        %931 = vmatprep.subr.mxu0 0.0
        %932 = vmatpush1.xpose.msra.mxu0 0.0
        %933 = vmatprep.subr.mxu0 0.0
        %934 = vmatpush1.xpose.msra.mxu0 0.0
        %935 = vmatprep.subr.mxu0 0.0
        %936 = vmatpush1.xpose.msra.mxu0 0.0
        %937 = vmatprep.subr.mxu0 0.0
        %938 = vmatpush1.xpose.msra.mxu0 0.0
        %939 = vmatprep.subr.mxu0 0.0
        %940 = vmatpush1.xpose.msra.mxu0 0.0
        %941 = vmatprep.subr.mxu0 0.0
        %942 = vmatpush1.xpose.msra.mxu0 0.0
        %943 = vmatprep.subr.mxu0 0.0
        %944 = vmatpush1.xpose.msra.mxu0 0.0
        %945 = vmatprep.mubr.f32.mxu0 0.0
        %946 = vmatmul.mubr.f32.gmra.mrb[0].mxu0 %v879
        %v947 = vpop.f32.mrb[0].mxu0
        %v948 = vadd.f32 0.0, %v947
        %v949 = vpop.f32.mrb[0].mxu0
        %950 = vdwg.mxu0
        %s951 = sld [smem:[#allocation2]]
        %v952 = vld [vmem:[%s558] sm:$0xff]
        %v953 = vstv %s951
        %v954 = vmul.f32 %v953, %v952
        %s955 = sld [smem:[#allocation2 + $0x80]]
        %s956 = scalar_lea.vmem %s558, 8
        %v957 = vld [vmem:[%s956] sm:$0xff]
        %v958 = vstv %s955
        %v959 = vmul.f32 %v958, %v957
        %v960 = vadd.f32 %v954, %v959
        %s961 = sld [smem:[#allocation2 + $0x100]]
        %s962 = scalar_lea.vmem %s558, 16
        %v963 = vld [vmem:[%s962] sm:$0xff]
        %v964 = vstv %s961
        %v965 = vmul.f32 %v964, %v963
        %v966 = vadd.f32 %v960, %v965
        %s967 = sld [smem:[#allocation2 + $0x180]]
        %s968 = scalar_lea.vmem %s558, 24
        %v969 = vld [vmem:[%s968] sm:$0xff]
        %v970 = vstv %s967
        %v971 = vmul.f32 %v970, %v969
        %v972 = vadd.f32 %v966, %v971
        %s973 = sld [smem:[#allocation2 + $0x200]]
        %s974 = scalar_lea.vmem %s558, 32
        %v975 = vld [vmem:[%s974] sm:$0xff]
        %v976 = vstv %s973
        %v977 = vmul.f32 %v976, %v975
        %v978 = vadd.f32 %v972, %v977
        %s979 = sld [smem:[#allocation2 + $0x280]]
        %s980 = scalar_lea.vmem %s558, 40
        %v981 = vld [vmem:[%s980] sm:$0xff]
        %v982 = vstv %s979
        %v983 = vmul.f32 %v982, %v981
        %v984 = vadd.f32 %v978, %v983
        %s985 = sld [smem:[#allocation2 + $0x300]]
        %s986 = scalar_lea.vmem %s558, 48
        %v987 = vld [vmem:[%s986] sm:$0xff]
        %v988 = vstv %s985
        %v989 = vmul.f32 %v988, %v987
        %v990 = vadd.f32 %v984, %v989
        %s991 = sld [smem:[#allocation2 + $0x380]]
        %s992 = scalar_lea.vmem %s558, 56
        %v993 = vld [vmem:[%s992] sm:$0xff]
        %v994 = vstv %s991
        %v995 = vmul.f32 %v994, %v993
        %v996 = vadd.f32 %v990, %v995
        %s997 = sld [smem:[#allocation2 + $0x400]]
        %s998 = scalar_lea.vmem %s558, 64
        %v999 = vld [vmem:[%s998] sm:$0xff]
        %v1000 = vstv %s997
        %v1001 = vmul.f32 %v1000, %v999
        %v1002 = vadd.f32 %v996, %v1001
        %s1003 = sld [smem:[#allocation2 + $0x480]]
        %s1004 = scalar_lea.vmem %s558, 72
        %v1005 = vld [vmem:[%s1004] sm:$0xff]
        %v1006 = vstv %s1003
        %v1007 = vmul.f32 %v1006, %v1005
        %v1008 = vadd.f32 %v1002, %v1007
        %s1009 = sld [smem:[#allocation2 + $0x500]]
        %s1010 = scalar_lea.vmem %s558, 80
        %v1011 = vld [vmem:[%s1010] sm:$0xff]
        %v1012 = vstv %s1009
        %v1013 = vmul.f32 %v1012, %v1011
        %v1014 = vadd.f32 %v1008, %v1013
        %s1015 = sld [smem:[#allocation2 + $0x580]]
        %s1016 = scalar_lea.vmem %s558, 88
        %v1017 = vld [vmem:[%s1016] sm:$0xff]
        %v1018 = vstv %s1015
        %v1019 = vmul.f32 %v1018, %v1017
        %v1020 = vadd.f32 %v1014, %v1019
        %s1021 = sld [smem:[#allocation2 + $0x600]]
        %s1022 = scalar_lea.vmem %s558, 96
        %v1023 = vld [vmem:[%s1022] sm:$0xff]
        %v1024 = vstv %s1021
        %v1025 = vmul.f32 %v1024, %v1023
        %v1026 = vadd.f32 %v1020, %v1025
        %s1027 = sld [smem:[#allocation2 + $0x680]]
        %s1028 = scalar_lea.vmem %s558, 104
        %v1029 = vld [vmem:[%s1028] sm:$0xff]
        %v1030 = vstv %s1027
        %v1031 = vmul.f32 %v1030, %v1029
        %v1032 = vadd.f32 %v1026, %v1031
        %s1033 = sld [smem:[#allocation2 + $0x700]]
        %s1034 = scalar_lea.vmem %s558, 112
        %v1035 = vld [vmem:[%s1034] sm:$0xff]
        %v1036 = vstv %s1033
        %v1037 = vmul.f32 %v1036, %v1035
        %v1038 = vadd.f32 %v1032, %v1037
        %s1039 = sld [smem:[#allocation2 + $0x780]]
        %s1040 = scalar_lea.vmem %s558, 120
        %v1041 = vld [vmem:[%s1040] sm:$0xff]
        %v1042 = vstv %s1039
        %v1043 = vmul.f32 %v1042, %v1041
        %v1044 = vadd.f32 %v1038, %v1043
        %s1045 = sld [smem:[#allocation2 + $0x800]]
        %s1046 = scalar_lea.vmem %s558, 128
        %v1047 = vld [vmem:[%s1046] sm:$0xff]
        %v1048 = vstv %s1045
        %v1049 = vmul.f32 %v1048, %v1047
        %v1050 = vadd.f32 %v1044, %v1049
        %s1051 = sld [smem:[#allocation2 + $0x880]]
        %s1052 = scalar_lea.vmem %s558, 136
        %v1053 = vld [vmem:[%s1052] sm:$0xff]
        %v1054 = vstv %s1051
        %v1055 = vmul.f32 %v1054, %v1053
        %v1056 = vadd.f32 %v1050, %v1055
        %s1057 = sld [smem:[#allocation2 + $0x900]]
        %s1058 = scalar_lea.vmem %s558, 144
        %v1059 = vld [vmem:[%s1058] sm:$0xff]
        %v1060 = vstv %s1057
        %v1061 = vmul.f32 %v1060, %v1059
        %v1062 = vadd.f32 %v1056, %v1061
        %s1063 = sld [smem:[#allocation2 + $0x980]]
        %s1064 = scalar_lea.vmem %s558, 152
        %v1065 = vld [vmem:[%s1064] sm:$0xff]
        %v1066 = vstv %s1063
        %v1067 = vmul.f32 %v1066, %v1065
        %v1068 = vadd.f32 %v1062, %v1067
        %v1069 = vlaneseq
        %v1070 = vshrl.u32 %v1069, 7
        %v1071 = vsub.s32 0, %v1070
        %v1072 = vrot.slane %v948, %v1071
        %v1073 = vadd.f32 %v1068, %v1072
        %1075 = vset.pattern.permute.xlu0 0
        %1076 = vperm.xlu0 %1075, %v874
        %v1077 = vpop.permute.xlu0 %1076
        %v1079 = vadd.f32 %v1073, %v1077
        %s1080 = sld [smem:[#allocation5]]
        %v1081 = vstv %s1080
        %v1082 = vadd.f32 %v1079, %v1081
        %1083 = vst.msk [vmem:[%s575] sm:$0xff] %vm579, %v1082
        %s1084 = sld [smem:[#allocation2 + $0x1]]
        %v1085 = vld [vmem:[%s558] sm:$0xff]
        %v1086 = vstv %s1084
        %v1087 = vmul.f32 %v1086, %v1085
        %s1088 = sld [smem:[#allocation2 + $0x81]]
        %v1089 = vld [vmem:[%s956] sm:$0xff]
        %v1090 = vstv %s1088
        %v1091 = vmul.f32 %v1090, %v1089
        %v1092 = vadd.f32 %v1087, %v1091
        %s1093 = sld [smem:[#allocation2 + $0x101]]
        %v1094 = vld [vmem:[%s962] sm:$0xff]
        %v1095 = vstv %s1093
        %v1096 = vmul.f32 %v1095, %v1094
        %v1097 = vadd.f32 %v1092, %v1096
        %s1098 = sld [smem:[#allocation2 + $0x181]]
        %v1099 = vld [vmem:[%s968] sm:$0xff]
        %v1100 = vstv %s1098
        %v1101 = vmul.f32 %v1100, %v1099
        %v1102 = vadd.f32 %v1097, %v1101
        %s1103 = sld [smem:[#allocation2 + $0x201]]
        %v1104 = vld [vmem:[%s974] sm:$0xff]
        %v1105 = vstv %s1103
        %v1106 = vmul.f32 %v1105, %v1104
        %v1107 = vadd.f32 %v1102, %v1106
        %s1108 = sld [smem:[#allocation2 + $0x281]]
        %v1109 = vld [vmem:[%s980] sm:$0xff]
        %v1110 = vstv %s1108
        %v1111 = vmul.f32 %v1110, %v1109
        %v1112 = vadd.f32 %v1107, %v1111
        %s1113 = sld [smem:[#allocation2 + $0x301]]
        %v1114 = vld [vmem:[%s986] sm:$0xff]
        %v1115 = vstv %s1113
        %v1116 = vmul.f32 %v1115, %v1114
        %v1117 = vadd.f32 %v1112, %v1116
        %s1118 = sld [smem:[#allocation2 + $0x381]]
        %v1119 = vld [vmem:[%s992] sm:$0xff]
        %v1120 = vstv %s1118
        %v1121 = vmul.f32 %v1120, %v1119
        %v1122 = vadd.f32 %v1117, %v1121
        %s1123 = sld [smem:[#allocation2 + $0x401]]
        %v1124 = vld [vmem:[%s998] sm:$0xff]
        %v1125 = vstv %s1123
        %v1126 = vmul.f32 %v1125, %v1124
        %v1127 = vadd.f32 %v1122, %v1126
        %s1128 = sld [smem:[#allocation2 + $0x481]]
        %v1129 = vld [vmem:[%s1004] sm:$0xff]
        %v1130 = vstv %s1128
        %v1131 = vmul.f32 %v1130, %v1129
        %v1132 = vadd.f32 %v1127, %v1131
        %s1133 = sld [smem:[#allocation2 + $0x501]]
        %v1134 = vld [vmem:[%s1010] sm:$0xff]
        %v1135 = vstv %s1133
        %v1136 = vmul.f32 %v1135, %v1134
        %v1137 = vadd.f32 %v1132, %v1136
        %s1138 = sld [smem:[#allocation2 + $0x581]]
        %v1139 = vld [vmem:[%s1016] sm:$0xff]
        %v1140 = vstv %s1138
        %v1141 = vmul.f32 %v1140, %v1139
        %v1142 = vadd.f32 %v1137, %v1141
        %s1143 = sld [smem:[#allocation2 + $0x601]]
        %v1144 = vld [vmem:[%s1022] sm:$0xff]
        %v1145 = vstv %s1143
        %v1146 = vmul.f32 %v1145, %v1144
        %v1147 = vadd.f32 %v1142, %v1146
        %s1148 = sld [smem:[#allocation2 + $0x681]]
        %v1149 = vld [vmem:[%s1028] sm:$0xff]
        %v1150 = vstv %s1148
        %v1151 = vmul.f32 %v1150, %v1149
        %v1152 = vadd.f32 %v1147, %v1151
        %s1153 = sld [smem:[#allocation2 + $0x701]]
        %v1154 = vld [vmem:[%s1034] sm:$0xff]
        %v1155 = vstv %s1153
        %v1156 = vmul.f32 %v1155, %v1154
        %v1157 = vadd.f32 %v1152, %v1156
        %s1158 = sld [smem:[#allocation2 + $0x781]]
        %v1159 = vld [vmem:[%s1040] sm:$0xff]
        %v1160 = vstv %s1158
        %v1161 = vmul.f32 %v1160, %v1159
        %v1162 = vadd.f32 %v1157, %v1161
        %s1163 = sld [smem:[#allocation2 + $0x801]]
        %v1164 = vld [vmem:[%s1046] sm:$0xff]
        %v1165 = vstv %s1163
        %v1166 = vmul.f32 %v1165, %v1164
        %v1167 = vadd.f32 %v1162, %v1166
        %s1168 = sld [smem:[#allocation2 + $0x881]]
        %v1169 = vld [vmem:[%s1052] sm:$0xff]
        %v1170 = vstv %s1168
        %v1171 = vmul.f32 %v1170, %v1169
        %v1172 = vadd.f32 %v1167, %v1171
        %s1173 = sld [smem:[#allocation2 + $0x901]]
        %v1174 = vld [vmem:[%s1058] sm:$0xff]
        %v1175 = vstv %s1173
        %v1176 = vmul.f32 %v1175, %v1174
        %v1177 = vadd.f32 %v1172, %v1176
        %s1178 = sld [smem:[#allocation2 + $0x981]]
        %v1179 = vld [vmem:[%s1064] sm:$0xff]
        %v1180 = vstv %s1178
        %v1181 = vmul.f32 %v1180, %v1179
        %v1182 = vadd.f32 %v1177, %v1181
        %v1183 = vlaneseq
        %v1184 = vshrl.u32 %v1183, 7
        %v1185 = vsub.s32 1, %v1184
        %v1186 = vrot.slane %v948, %v1185
        %v1187 = vadd.f32 %v1182, %v1186
        %1188 = vset.pattern.permute.xlu0 1
        %1189 = vperm.xlu0 %1188, %v874
        %v1190 = vpop.permute.xlu0 %1189
        %v1192 = vadd.f32 %v1187, %v1190
        %s1193 = sld [smem:[#allocation5 + $0x1]]
        %v1194 = vstv %s1193
        %v1195 = vadd.f32 %v1192, %v1194
        %s1196 = scalar_lea.vmem %s575, 8
        %1197 = vst.msk [vmem:[%s1196] sm:$0xff] %vm579, %v1195
        %s1198 = sld [smem:[#allocation2 + $0x2]]
        %v1199 = vld [vmem:[%s558] sm:$0xff]
        %v1200 = vstv %s1198
        %v1201 = vmul.f32 %v1200, %v1199
        %s1202 = sld [smem:[#allocation2 + $0x82]]
        %v1203 = vld [vmem:[%s956] sm:$0xff]
        %v1204 = vstv %s1202
        %v1205 = vmul.f32 %v1204, %v1203
        %v1206 = vadd.f32 %v1201, %v1205
        %s1207 = sld [smem:[#allocation2 + $0x102]]
        %v1208 = vld [vmem:[%s962] sm:$0xff]
        %v1209 = vstv %s1207
        %v1210 = vmul.f32 %v1209, %v1208
        %v1211 = vadd.f32 %v1206, %v1210
        %s1212 = sld [smem:[#allocation2 + $0x182]]
        %v1213 = vld [vmem:[%s968] sm:$0xff]
        %v1214 = vstv %s1212
        %v1215 = vmul.f32 %v1214, %v1213
        %v1216 = vadd.f32 %v1211, %v1215
        %s1217 = sld [smem:[#allocation2 + $0x202]]
        %v1218 = vld [vmem:[%s974] sm:$0xff]
        %v1219 = vstv %s1217
        %v1220 = vmul.f32 %v1219, %v1218
        %v1221 = vadd.f32 %v1216, %v1220
        %s1222 = sld [smem:[#allocation2 + $0x282]]
        %v1223 = vld [vmem:[%s980] sm:$0xff]
        %v1224 = vstv %s1222
        %v1225 = vmul.f32 %v1224, %v1223
        %v1226 = vadd.f32 %v1221, %v1225
        %s1227 = sld [smem:[#allocation2 + $0x302]]
        %v1228 = vld [vmem:[%s986] sm:$0xff]
        %v1229 = vstv %s1227
        %v1230 = vmul.f32 %v1229, %v1228
        %v1231 = vadd.f32 %v1226, %v1230
        %s1232 = sld [smem:[#allocation2 + $0x382]]
        %v1233 = vld [vmem:[%s992] sm:$0xff]
        %v1234 = vstv %s1232
        %v1235 = vmul.f32 %v1234, %v1233
        %v1236 = vadd.f32 %v1231, %v1235
        %s1237 = sld [smem:[#allocation2 + $0x402]]
        %v1238 = vld [vmem:[%s998] sm:$0xff]
        %v1239 = vstv %s1237
        %v1240 = vmul.f32 %v1239, %v1238
        %v1241 = vadd.f32 %v1236, %v1240
        %s1242 = sld [smem:[#allocation2 + $0x482]]
        %v1243 = vld [vmem:[%s1004] sm:$0xff]
        %v1244 = vstv %s1242
        %v1245 = vmul.f32 %v1244, %v1243
        %v1246 = vadd.f32 %v1241, %v1245
        %s1247 = sld [smem:[#allocation2 + $0x502]]
        %v1248 = vld [vmem:[%s1010] sm:$0xff]
        %v1249 = vstv %s1247
        %v1250 = vmul.f32 %v1249, %v1248
        %v1251 = vadd.f32 %v1246, %v1250
        %s1252 = sld [smem:[#allocation2 + $0x582]]
        %v1253 = vld [vmem:[%s1016] sm:$0xff]
        %v1254 = vstv %s1252
        %v1255 = vmul.f32 %v1254, %v1253
        %v1256 = vadd.f32 %v1251, %v1255
        %s1257 = sld [smem:[#allocation2 + $0x602]]
        %v1258 = vld [vmem:[%s1022] sm:$0xff]
        %v1259 = vstv %s1257
        %v1260 = vmul.f32 %v1259, %v1258
        %v1261 = vadd.f32 %v1256, %v1260
        %s1262 = sld [smem:[#allocation2 + $0x682]]
        %v1263 = vld [vmem:[%s1028] sm:$0xff]
        %v1264 = vstv %s1262
        %v1265 = vmul.f32 %v1264, %v1263
        %v1266 = vadd.f32 %v1261, %v1265
        %s1267 = sld [smem:[#allocation2 + $0x702]]
        %v1268 = vld [vmem:[%s1034] sm:$0xff]
        %v1269 = vstv %s1267
        %v1270 = vmul.f32 %v1269, %v1268
        %v1271 = vadd.f32 %v1266, %v1270
        %s1272 = sld [smem:[#allocation2 + $0x782]]
        %v1273 = vld [vmem:[%s1040] sm:$0xff]
        %v1274 = vstv %s1272
        %v1275 = vmul.f32 %v1274, %v1273
        %v1276 = vadd.f32 %v1271, %v1275
        %s1277 = sld [smem:[#allocation2 + $0x802]]
        %v1278 = vld [vmem:[%s1046] sm:$0xff]
        %v1279 = vstv %s1277
        %v1280 = vmul.f32 %v1279, %v1278
        %v1281 = vadd.f32 %v1276, %v1280
        %s1282 = sld [smem:[#allocation2 + $0x882]]
        %v1283 = vld [vmem:[%s1052] sm:$0xff]
        %v1284 = vstv %s1282
        %v1285 = vmul.f32 %v1284, %v1283
        %v1286 = vadd.f32 %v1281, %v1285
        %s1287 = sld [smem:[#allocation2 + $0x902]]
        %v1288 = vld [vmem:[%s1058] sm:$0xff]
        %v1289 = vstv %s1287
        %v1290 = vmul.f32 %v1289, %v1288
        %v1291 = vadd.f32 %v1286, %v1290
        %s1292 = sld [smem:[#allocation2 + $0x982]]
        %v1293 = vld [vmem:[%s1064] sm:$0xff]
        %v1294 = vstv %s1292
        %v1295 = vmul.f32 %v1294, %v1293
        %v1296 = vadd.f32 %v1291, %v1295
        %v1297 = vlaneseq
        %v1298 = vshrl.u32 %v1297, 7
        %v1299 = vsub.s32 2, %v1298
        %v1300 = vrot.slane %v948, %v1299
        %v1301 = vadd.f32 %v1296, %v1300
        %1302 = vset.pattern.permute.xlu0 2
        %1303 = vperm.xlu0 %1302, %v874
        %v1304 = vpop.permute.xlu0 %1303
        %v1306 = vadd.f32 %v1301, %v1304
        %s1307 = sld [smem:[#allocation5 + $0x2]]
        %v1308 = vstv %s1307
        %v1309 = vadd.f32 %v1306, %v1308
        %s1310 = scalar_lea.vmem %s575, 16
        %1311 = vst.msk [vmem:[%s1310] sm:$0xff] %vm579, %v1309
        %s1312 = sld [smem:[#allocation2 + $0x3]]
        %v1313 = vld [vmem:[%s558] sm:$0xff]
        %v1314 = vstv %s1312
        %v1315 = vmul.f32 %v1314, %v1313
        %s1316 = sld [smem:[#allocation2 + $0x83]]
        %v1317 = vld [vmem:[%s956] sm:$0xff]
        %v1318 = vstv %s1316
        %v1319 = vmul.f32 %v1318, %v1317
        %v1320 = vadd.f32 %v1315, %v1319
        %s1321 = sld [smem:[#allocation2 + $0x103]]
        %v1322 = vld [vmem:[%s962] sm:$0xff]
        %v1323 = vstv %s1321
        %v1324 = vmul.f32 %v1323, %v1322
        %v1325 = vadd.f32 %v1320, %v1324
        %s1326 = sld [smem:[#allocation2 + $0x183]]
        %v1327 = vld [vmem:[%s968] sm:$0xff]
        %v1328 = vstv %s1326
        %v1329 = vmul.f32 %v1328, %v1327
        %v1330 = vadd.f32 %v1325, %v1329
        %s1331 = sld [smem:[#allocation2 + $0x203]]
        %v1332 = vld [vmem:[%s974] sm:$0xff]
        %v1333 = vstv %s1331
        %v1334 = vmul.f32 %v1333, %v1332
        %v1335 = vadd.f32 %v1330, %v1334
        %s1336 = sld [smem:[#allocation2 + $0x283]]
        %v1337 = vld [vmem:[%s980] sm:$0xff]
        %v1338 = vstv %s1336
        %v1339 = vmul.f32 %v1338, %v1337
        %v1340 = vadd.f32 %v1335, %v1339
        %s1341 = sld [smem:[#allocation2 + $0x303]]
        %v1342 = vld [vmem:[%s986] sm:$0xff]
        %v1343 = vstv %s1341
        %v1344 = vmul.f32 %v1343, %v1342
        %v1345 = vadd.f32 %v1340, %v1344
        %s1346 = sld [smem:[#allocation2 + $0x383]]
        %v1347 = vld [vmem:[%s992] sm:$0xff]
        %v1348 = vstv %s1346
        %v1349 = vmul.f32 %v1348, %v1347
        %v1350 = vadd.f32 %v1345, %v1349
        %s1351 = sld [smem:[#allocation2 + $0x403]]
        %v1352 = vld [vmem:[%s998] sm:$0xff]
        %v1353 = vstv %s1351
        %v1354 = vmul.f32 %v1353, %v1352
        %v1355 = vadd.f32 %v1350, %v1354
        %s1356 = sld [smem:[#allocation2 + $0x483]]
        %v1357 = vld [vmem:[%s1004] sm:$0xff]
        %v1358 = vstv %s1356
        %v1359 = vmul.f32 %v1358, %v1357
        %v1360 = vadd.f32 %v1355, %v1359
        %s1361 = sld [smem:[#allocation2 + $0x503]]
        %v1362 = vld [vmem:[%s1010] sm:$0xff]
        %v1363 = vstv %s1361
        %v1364 = vmul.f32 %v1363, %v1362
        %v1365 = vadd.f32 %v1360, %v1364
        %s1366 = sld [smem:[#allocation2 + $0x583]]
        %v1367 = vld [vmem:[%s1016] sm:$0xff]
        %v1368 = vstv %s1366
        %v1369 = vmul.f32 %v1368, %v1367
        %v1370 = vadd.f32 %v1365, %v1369
        %s1371 = sld [smem:[#allocation2 + $0x603]]
        %v1372 = vld [vmem:[%s1022] sm:$0xff]
        %v1373 = vstv %s1371
        %v1374 = vmul.f32 %v1373, %v1372
        %v1375 = vadd.f32 %v1370, %v1374
        %s1376 = sld [smem:[#allocation2 + $0x683]]
        %v1377 = vld [vmem:[%s1028] sm:$0xff]
        %v1378 = vstv %s1376
        %v1379 = vmul.f32 %v1378, %v1377
        %v1380 = vadd.f32 %v1375, %v1379
        %s1381 = sld [smem:[#allocation2 + $0x703]]
        %v1382 = vld [vmem:[%s1034] sm:$0xff]
        %v1383 = vstv %s1381
        %v1384 = vmul.f32 %v1383, %v1382
        %v1385 = vadd.f32 %v1380, %v1384
        %s1386 = sld [smem:[#allocation2 + $0x783]]
        %v1387 = vld [vmem:[%s1040] sm:$0xff]
        %v1388 = vstv %s1386
        %v1389 = vmul.f32 %v1388, %v1387
        %v1390 = vadd.f32 %v1385, %v1389
        %s1391 = sld [smem:[#allocation2 + $0x803]]
        %v1392 = vld [vmem:[%s1046] sm:$0xff]
        %v1393 = vstv %s1391
        %v1394 = vmul.f32 %v1393, %v1392
        %v1395 = vadd.f32 %v1390, %v1394
        %s1396 = sld [smem:[#allocation2 + $0x883]]
        %v1397 = vld [vmem:[%s1052] sm:$0xff]
        %v1398 = vstv %s1396
        %v1399 = vmul.f32 %v1398, %v1397
        %v1400 = vadd.f32 %v1395, %v1399
        %s1401 = sld [smem:[#allocation2 + $0x903]]
        %v1402 = vld [vmem:[%s1058] sm:$0xff]
        %v1403 = vstv %s1401
        %v1404 = vmul.f32 %v1403, %v1402
        %v1405 = vadd.f32 %v1400, %v1404
        %s1406 = sld [smem:[#allocation2 + $0x983]]
        %v1407 = vld [vmem:[%s1064] sm:$0xff]
        %v1408 = vstv %s1406
        %v1409 = vmul.f32 %v1408, %v1407
        %v1410 = vadd.f32 %v1405, %v1409
        %v1411 = vlaneseq
        %v1412 = vshrl.u32 %v1411, 7
        %v1413 = vsub.s32 3, %v1412
        %v1414 = vrot.slane %v948, %v1413
        %v1415 = vadd.f32 %v1410, %v1414
        %1416 = vset.pattern.permute.xlu0 3
        %1417 = vperm.xlu0 %1416, %v874
        %v1418 = vpop.permute.xlu0 %1417
        %v1420 = vadd.f32 %v1415, %v1418
        %s1421 = sld [smem:[#allocation5 + $0x3]]
        %v1422 = vstv %s1421
        %v1423 = vadd.f32 %v1420, %v1422
        %s1424 = scalar_lea.vmem %s575, 24
        %1425 = vst.msk [vmem:[%s1424] sm:$0xff] %vm579, %v1423
        %s1426 = sand.u32 %s337, 1
        %s1427 = scalar_lea.sflag [#allocation3], %s1426
        %s1428 = sand.u32 %s337, 1
        %s1429 = smul.addr %s1428, 8
        %s1430 = scalar_lea.vmem [#allocation7], %s1429
        %p1431 = scmp.lt.s32.totalorder %s31, 1
        %s1432 = scalar_select %p1431, %s31, 1
        %s1433 = smul.addr %s1432, 4
        %s1434 = smul.addr %s1433, 8
        %s1435 = scalar_lea.vmem %s14, %s1434
        // Predicated region
        $region81: #{emcgcn_forward.5} parent=71 // pred_check
          %p1436 = pneg %p347
        $region82: #{emcgcn_forward.5} parent=71 // pred_check_branch
          %1438 = sbr.rel (%p1436) target = $region84
        $region83: #{emcgcn_forward.5} parent=71 // pred_region
          %s1440 = ssub.s32 128, 128
          %1441 = vsyncadd %s1427, %s1440
          %s1442 = smul.addr %s31, 128
          %s1443 = scalar_lea.hbm %s13, %s1442
          %s1445 = sshll.u32 %s1430, 4
          %s1446 = int_to_ptr.vmem [resolvable:$true] %s1445
          %1448 = dma.vmem_to_hbm [thread:$0]  %s1446, 128, %s1443, %s1427
        $region84: #{emcgcn_forward.5} parent=71 // pred_fallthru
          _
        // Predicated region
        $region85: #{emcgcn_forward.5} parent=71 // pred_check
          %p1449 = pneg %p373
        $region86: #{emcgcn_forward.5} parent=71 // pred_check_branch
          %1451 = sbr.rel (%p1449) target = $region88
        $region87: #{emcgcn_forward.5} parent=71 // pred_region
          _
        $region88: #{emcgcn_forward.5} parent=71 // pred_fallthru
          _
      $region72: #{emcgcn_forward.5} parent=5 // pred_fallthru
        _
      %p1452 = scmp.le.s32.totalorder 2, %s26
      // Predicated region
      $region89: #{emcgcn_forward.5} parent=5 // pred_check
        %p1453 = pneg %p1452
      $region90: #{emcgcn_forward.5} parent=5 // pred_check_branch
        %1455 = sbr.rel (%p1453) target = $region92
      $region91: #{emcgcn_forward.5} parent=5 // pred_region
        %s1456 = ssub.s32 %s26, 2
        // Predicated region
        $region93: #{emcgcn_forward.5} parent=91 // pred_check
          %p1457 = pneg %p353
        $region94: #{emcgcn_forward.5} parent=91 // pred_check_branch
          %1459 = sbr.rel (%p1457) target = $region96
        $region95: #{emcgcn_forward.5} parent=91 // pred_region
          %s1460 = sand.u32 %s338, 1
          %s1461 = scalar_lea.sflag [#allocation3], %s1460
          %s1462 = sand.u32 %s338, 1
          %s1463 = smul.addr %s1462, 8
          %s1464 = scalar_lea.vmem [#allocation7], %s1463
          %1465 = dma.done %s1461, 128
        $region96: #{emcgcn_forward.5} parent=91 // pred_fallthru
          _
        // Predicated region
        $region97: #{emcgcn_forward.5} parent=91 // pred_check
          %p1466 = pneg %p379
        $region98: #{emcgcn_forward.5} parent=91 // pred_check_branch
          %1468 = sbr.rel (%p1466) target = $region100
        $region99: #{emcgcn_forward.5} parent=91 // pred_region
          %p1469 = scmp.lt.s32.totalorder %s32, 1
          %s1470 = scalar_select %p1469, %s32, 1
          %s1471 = smul.addr %s1470, 4
          %s1472 = smul.addr %s1471, 8
          %s1473 = scalar_lea.vmem %s14, %s1472
        $region100: #{emcgcn_forward.5} parent=91 // pred_fallthru
          _
      $region92: #{emcgcn_forward.5} parent=5 // pred_fallthru
        _
    $region6: #{emcgcn_forward.5} parent=1 // loop_footer
      %s30 = sadd.s32 1, %s26
    $region7: #{emcgcn_forward.5} parent=1 // loop_footer_branch
      %25 = sbr.rel target = $region3
    $region8: #{emcgcn_forward.5} parent=1 // loop_exit
      _
    %1474 = vsyncpa [#allocation3], 1
    %s1475 = scalar_lea.sflag [#allocation3], 1
    %1476 = vsyncpa %s1475, 1
    %1477 = vsyncpa [#allocation4], 1
    %s1478 = scalar_lea.sflag [#allocation4], 1
    %1479 = vsyncpa %s1478, 1
    %1480 = vsyncpa [#allocation6], 1

</llo_original>
